<compile_context>
chip_gen: v6e
topology: v6e:2x2x1
jax: 0.10.0
libtpu: 0.0.40
codegen_flags: <defaults>
</compile_context>

<pallas_src>
import jax
import jax.numpy as jnp
from jax.experimental import pallas as pl
from jax.experimental.pallas import tpu as pltpu

# Constants mirroring the PyTorch module (MNIST normalization constants).
CHANNELS = 1
CLASSES = 10
DATA_MEAN = 0.1307
DATA_STD = 0.3081
DATA_SUBZERO = (0.0 - DATA_MEAN) / DATA_STD

_PAD_CLS = 128  # lane-dense class padding for the output store


def _round_up(v, m):
    return (v + m - 1) // m * m


def _shift_up_rows(x, k):
    """result[i] = x[i + k] (rows wrap; wrapped rows are never consumed)."""
    return jnp.concatenate([x[k:], x[:k]], axis=0)


def _shift_down_rows(x, k):
    """result[i] = x[i - k] (rows wrap; wrapped rows come from the zero group)."""
    return jnp.concatenate([x[-k:], x[:-k]], axis=0)


# --------------------------- Fused Pallas kernel -----------------------------

def _fused_forward_kernel(x_ref, w1_ref, b1_ref, w2_ref, b2_ref, w3_ref, b3_ref,
                          o_ref):
    """Whole Conv3Model forward for B images, entirely VMEM-resident.

    x_ref : (28, B, 90) bf16  conv1 Toeplitz lhs, row (y, b), lane = dy*30 + xcol
    w1_ref: (90, 896)   bf16  conv1 Toeplitz, lane = ix*224 + pw*32 + c  (w = 4*pw+ix)
    b1_ref: (1, 896)    f32
    w2_ref: (768, 448)  bf16  conv2 Toeplitz, row = kh*256 + pw*32 + ci (rows 224:256
                              of each kh block are zero), lane = w*64 + co
    b2_ref: (1, 448)    f32
    w3_ref: (7, 448, 128) bf16 linear weights regrouped per row h, classes padded
    b3_ref: (1, 128)    f32
    o_ref : (B, 128)    f32   padded logits
    """
    B = o_ref.shape[0]

    # ---- Conv2d(1, 32, 3): single wide-K Toeplitz matmul (MXU) ----
    lhs1 = x_ref[...].reshape(28 * B, 90)                         # rows y*B + b
    a1 = jnp.dot(lhs1, w1_ref[...], preferred_element_type=jnp.float32)
    a1 = jnp.maximum(a1 + b1_ref[...], 0.0)                       # (28B, 896)

    # ---- MaxPool2d(4) fused in the epilogue ----
    # width pool: max over ix = the 4 contiguous 224-lane blocks -> lane = pw*32 + c
    wp = jnp.maximum(jnp.maximum(a1[:, 0:224], a1[:, 224:448]),
                     jnp.maximum(a1[:, 448:672], a1[:, 672:896]))  # (28B, 224)
    # height pool: pairwise maxes of B-row-shifted copies, then pick rows y = 4*ph
    t1 = jnp.maximum(wp, _shift_up_rows(wp, B))                    # max rows y, y+1
    t2 = jnp.maximum(t1, _shift_up_rows(t1, 2 * B))                # max rows y..y+3
    zg = jnp.zeros((B, 224), jnp.float32)
    # p1 rows = ph*B + b; extra zero group 7 provides conv2's height padding.
    p1 = jnp.concatenate(
        [t2[4 * ph * B:(4 * ph + 1) * B, :] for ph in range(7)] + [zg], axis=0)

    # ---- Conv2d(32, 64, 3, padding=1): one (8B, 768)@(768, 448) matmul ----
    up = _shift_down_rows(p1, B)    # row (h,b) <- p1[h-1,b]; h=0 <- zero group 7
    dn = _shift_up_rows(p1, B)      # row (h,b) <- p1[h+1,b]; h=6 <- zero group 7
    z32 = jnp.zeros((8 * B, 32), jnp.float32)
    lhs2 = jnp.concatenate([up, z32, p1, z32, dn, z32],
                           axis=1).astype(jnp.bfloat16)            # (8B, 768)
    a2 = jnp.dot(lhs2, w2_ref[...], preferred_element_type=jnp.float32)
    a2 = jnp.maximum(a2 + b2_ref[...], 0.0)                        # (8B, 448)

    # ---- Flatten (c,h,w order folded into w3 prep) + Linear(3136 -> 10) ----
    a2b = a2.astype(jnp.bfloat16)                                  # cast once
    acc = jnp.zeros((B, _PAD_CLS), jnp.float32)
    for h in range(7):                                             # M = B per dot
        acc = acc + jnp.dot(a2b[h * B:(h + 1) * B, :], w3_ref[h],
                            preferred_element_type=jnp.float32)
    o_ref[...] = acc + b3_ref[...]


# --------------------------- Parameter preparation ---------------------------

def prepare_params(params):
    """One-time conversion of PyTorch-layout weights into the Toeplitz /
    lane-permuted bf16 operands consumed by the fused kernel."""
    w1, b1 = params["w1"], params["b1"]     # (32, 1, 3, 3), (32,)
    w2, b2 = params["w2"], params["b2"]     # (64, 32, 3, 3), (64,)
    w3, b3 = params["w3"], params["b3"]     # (10, 3136), (10,)

    # Conv1 Toeplitz over kw: W1[dy*30 + x, lane] = w1[c, 0, dy, x-w] for 0<=x-w<=2.
    w1k = jnp.transpose(w1[:, 0], (1, 2, 0))                      # (kh, kw, c)
    xi = jnp.arange(30)[:, None]
    wi = jnp.arange(28)[None, :]
    d = xi - wi
    sel = (d >= 0) & (d <= 2)
    t1 = jnp.where(sel[None, :, :, None],
                   w1k[:, jnp.clip(d, 0, 2), :], 0.0)             # (3, 30, 28, 32)
    # permute output columns w=4*pw+ix -> lane order (ix, pw, c) for the pool
    t1 = t1.reshape(3, 30, 7, 4, 32)                              # (kh, x, pw, ix, c)
    t1 = jnp.transpose(t1, (0, 1, 3, 2, 4)).reshape(90, 896)      # row = dy*30 + x
    w1_toe = t1.astype(jnp.bfloat16)
    b1_tile = jnp.tile(b1, 28).reshape(1, 896).astype(jnp.float32)

    # Conv2 Toeplitz over kw/cin with padding=1 folded in; kh blocks padded to 256 rows.
    w2k = jnp.transpose(w2, (2, 3, 1, 0))                         # (kh, kw, ci, co)
    xi = jnp.arange(7)[:, None]
    wi = jnp.arange(7)[None, :]
    d = xi - wi + 1                                               # kw index
    sel = (d >= 0) & (d <= 2)
    t2 = jnp.where(sel[None, :, :, None, None],
                   w2k[:, jnp.clip(d, 0, 2), :, :], 0.0)          # (kh, x, w, ci, co)
    t2 = jnp.transpose(t2, (0, 1, 3, 2, 4)).reshape(3, 224, 448)  # rows x*32+ci, cols w*64+co
    t2 = jnp.pad(t2, ((0, 0), (0, 32), (0, 0))).reshape(768, 448)  # lane-aligned kh blocks
    w2_toe = t2.astype(jnp.bfloat16)
    b2_tile = jnp.tile(b2, 7).reshape(1, 448).astype(jnp.float32)

    # Linear: regroup w3 from PyTorch (c*49 + h*7 + w) flatten order into the
    # kernel's (h, w*64 + c) activation layout; pad classes 10 -> 128.
    w3r = w3.reshape(CLASSES, 64, 7, 7)                           # (cls, c, h, w)
    w3r = jnp.transpose(w3r, (2, 3, 1, 0)).reshape(7, 448, CLASSES)
    w3r = jnp.pad(w3r, ((0, 0), (0, 0), (0, _PAD_CLS - CLASSES))).astype(jnp.bfloat16)
    b3p = jnp.pad(b3, (0, _PAD_CLS - CLASSES)).reshape(1, _PAD_CLS).astype(jnp.float32)

    return dict(w1=w1_toe, b1=b1_tile, w2=w2_toe, b2=b2_tile, w3=w3r, b3=b3p)


# --------------------------- Forward pass ------------------------------------

def conv3_forward(x_nchw, prep, block_b=32):
    """Conv3Model.forward.  x_nchw: (N, 1, 28, 28) f32 -> (N, 10)."""
    N = x_nchw.shape[0]
    x = x_nchw[:, 0, :, :]
    # nn.ConstantPad2d(1, DATA_SUBZERO) + 3x lane stacking for the conv1 Toeplitz lhs.
    xp = jnp.pad(x, ((0, 0), (1, 1), (1, 1)), constant_values=DATA_SUBZERO)
    xs = jnp.concatenate([xp[:, 0:28, :], xp[:, 1:29, :], xp[:, 2:30, :]],
                         axis=2)                                   # (N, 28, 90)

    # Per-step image block B (multiple of 8); pad the batch to a whole number of blocks.
    B = max(8, min(int(block_b) // 8 * 8, _round_up(N, 8)))
    Np = _round_up(N, B)
    if Np != N:
        xs = jnp.pad(xs, ((0, Np - N), (0, 0), (0, 0)))
    xs = jnp.transpose(xs, (1, 0, 2)).astype(jnp.bfloat16)         # (28, Np, 90)

    out = pl.pallas_call(
        _fused_forward_kernel,
        out_shape=jax.ShapeDtypeStruct((Np, _PAD_CLS), jnp.float32),
        grid_spec=pltpu.PrefetchScalarGridSpec(
            num_scalar_prefetch=0,
            grid=(Np // B,),
            in_specs=[
                pl.BlockSpec((28, B, 90), lambda n: (0, n, 0)),        # image block
                pl.BlockSpec((90, 896), lambda n: (0, 0)),             # conv1 Toeplitz
                pl.BlockSpec((1, 896), lambda n: (0, 0)),              # b1 tile
                pl.BlockSpec((768, 448), lambda n: (0, 0)),            # conv2 Toeplitz
                pl.BlockSpec((1, 448), lambda n: (0, 0)),              # b2 tile
                pl.BlockSpec((7, 448, _PAD_CLS), lambda n: (0, 0, 0)),  # linear
                pl.BlockSpec((1, _PAD_CLS), lambda n: (0, 0)),         # b3 padded
            ],
            out_specs=pl.BlockSpec((B, _PAD_CLS), lambda n: (n, 0)),
        ),
        compiler_params=pltpu.CompilerParams(
            dimension_semantics=("parallel",),
            vmem_limit_bytes=32 * 1024 * 1024),
    )(xs, prep["w1"], prep["b1"], prep["w2"], prep["b2"], prep["w3"], prep["b3"])

    return out[:N, :CLASSES]


# --------------------------- Pure-JAX reference (for self-check) -------------

def _reference_forward(x_nchw, params):
    w1, b1 = params["w1"], params["b1"]
    w2, b2 = params["w2"], params["b2"]
    w3, b3 = params["w3"], params["b3"]
    N = x_nchw.shape[0]
    x = x_nchw[:, 0, :, :]
    xp = jnp.pad(x, ((0, 0), (1, 1), (1, 1)), constant_values=DATA_SUBZERO)
    pat1 = jnp.stack([xp[:, dy:dy + 28, dx:dx + 28]
                      for dy in range(3) for dx in range(3)], axis=-1)
    w1m = jnp.transpose(w1, (2, 3, 1, 0)).reshape(9, 32)
    h1 = jnp.maximum(pat1.reshape(N * 784, 9) @ w1m + b1, 0.0).reshape(N, 28, 28, 32)
    p1 = h1.reshape(N, 7, 4, 7, 4, 32).max(axis=(2, 4))
    p1p = jnp.pad(p1, ((0, 0), (1, 1), (1, 1), (0, 0)))
    pat2 = jnp.stack([p1p[:, dy:dy + 7, dx:dx + 7, :]
                      for dy in range(3) for dx in range(3)], axis=3)
    w2m = jnp.transpose(w2, (2, 3, 1, 0)).reshape(288, 64)
    h2 = jnp.maximum(pat2.reshape(N * 49, 288) @ w2m + b2, 0.0).reshape(N, 7, 7, 64)
    h2 = jnp.transpose(h2, (0, 3, 1, 2)).reshape(N, 64 * 7 * 7)
    return h2 @ w3.T + b3


# --------------------------- Driver ------------------------------------------

if __name__ == "__main__":
    key = jax.random.PRNGKey(0)
    kx, k1, k2, k3, k4, k5, k6 = jax.random.split(key, 7)

    # Deterministic synthetic parameters (PyTorch-layout shapes).
    params = dict(
        w1=jax.random.normal(k1, (32, CHANNELS, 3, 3), jnp.float32) * 0.1,
        b1=jax.random.normal(k2, (32,), jnp.float32) * 0.1,
        w2=jax.random.normal(k3, (64, 32, 3, 3), jnp.float32) * 0.05,
        b2=jax.random.normal(k4, (64,), jnp.float32) * 0.05,
        w3=jax.random.normal(k5, (CLASSES, 64 * 7 * 7), jnp.float32) * 0.02,
        b3=jax.random.normal(k6, (CLASSES,), jnp.float32) * 0.02,
    )
    prep = prepare_params(params)            # one-time weight preparation
    fwd = jax.jit(conv3_forward, static_argnames=("block_b",))

    # Input spatial size is forced to 28x28 by the Linear(64*7*7, 10) layer.
    # Case 1: tiny batch, single block (tail padded inside the wrapper).
    N = 2
    x = jax.random.normal(kx, (N, CHANNELS, 28, 28), dtype=jnp.float32)
    logits = jax.block_until_ready(fwd(x, prep))
    assert logits.shape == (N, CLASSES), logits.shape
    assert bool(jnp.all(jnp.isfinite(logits)))
    ref = _reference_forward(x, params)
    assert bool(jnp.allclose(logits, ref, rtol=5e-2, atol=5e-2)), (
        float(jnp.max(jnp.abs(logits - ref))))

    # Case 2: multi-block grid with a ragged tail (12 images, B=8 -> grid=2).
    N2 = 12
    x2 = jax.random.normal(kx, (N2, CHANNELS, 28, 28), dtype=jnp.float32)
    logits2 = jax.block_until_ready(fwd(x2, prep, block_b=8))
    assert logits2.shape == (N2, CLASSES), logits2.shape
    ref2 = _reference_forward(x2, params)
    assert bool(jnp.allclose(logits2, ref2, rtol=5e-2, atol=5e-2)), (
        float(jnp.max(jnp.abs(logits2 - ref2))))

    print("KERNEL_OK")
</pallas_src>

<mosaic_0001>
module attributes {stable_mosaic.version = 11 : i64} {
  func.func @_fused_forward_kernel(%arg0: i32, %arg1: memref<28x8x90xbf16, #tpu.memory_space<vmem>>, %arg2: memref<90x896xbf16, #tpu.memory_space<vmem>>, %arg3: memref<1x896xf32, #tpu.memory_space<vmem>>, %arg4: memref<768x448xbf16, #tpu.memory_space<vmem>>, %arg5: memref<1x448xf32, #tpu.memory_space<vmem>>, %arg6: memref<7x448x128xbf16, #tpu.memory_space<vmem>>, %arg7: memref<1x128xf32, #tpu.memory_space<vmem>>, %arg8: memref<8x128xf32, #tpu.memory_space<vmem>>) attributes {dimension_semantics = [#tpu.dimension_semantics<parallel>], iteration_bounds = array<i64: 1>, scalar_prefetch = 0 : i64, scratch_operands = 0 : i64, tpu.core_type = #tpu.core_type<tc>, window_params = [{transform_indices = @transform_0, window_bounds = array<i64: 28, 8, 90>}, {pipeline_mode = #tpu.pipeline_mode<synchronous>, transform_indices = @transform_1, window_bounds = array<i64: 90, 896>}, {pipeline_mode = #tpu.pipeline_mode<synchronous>, transform_indices = @transform_2, window_bounds = array<i64: 1, 896>}, {pipeline_mode = #tpu.pipeline_mode<synchronous>, transform_indices = @transform_3, window_bounds = array<i64: 768, 448>}, {pipeline_mode = #tpu.pipeline_mode<synchronous>, transform_indices = @transform_4, window_bounds = array<i64: 1, 448>}, {pipeline_mode = #tpu.pipeline_mode<synchronous>, transform_indices = @transform_5, window_bounds = array<i64: 7, 448, 128>}, {pipeline_mode = #tpu.pipeline_mode<synchronous>, transform_indices = @transform_6, window_bounds = array<i64: 1, 128>}, {transform_indices = @transform_7, window_bounds = array<i64: 8, 128>}]} {
    %c0 = arith.constant 0 : index
    %c0_0 = arith.constant 0 : index
    %c0_1 = arith.constant 0 : index
    %0 = vector.load %arg1[%c0, %c0_0, %c0_1] : memref<28x8x90xbf16, #tpu.memory_space<vmem>>, vector<28x8x90xbf16>
    %1 = vector.shape_cast %0 : vector<28x8x90xbf16> to vector<224x90xbf16>
    %c0_2 = arith.constant 0 : index
    %c0_3 = arith.constant 0 : index
    %2 = vector.load %arg2[%c0_2, %c0_3] : memref<90x896xbf16, #tpu.memory_space<vmem>>, vector<90x896xbf16>
    %cst = arith.constant dense<0.000000e+00> : vector<224x896xf32>
    %3 = tpu.matmul %1, %2, %cst {dimension_numbers = #tpu.dot_dimension_numbers<[1], [0], [0], [1], [0, 0, 1, 1], [], []>} : vector<224x90xbf16>, vector<90x896xbf16>, vector<224x896xf32> -> vector<224x896xf32>
    %c0_4 = arith.constant 0 : index
    %c0_5 = arith.constant 0 : index
    %4 = vector.load %arg3[%c0_4, %c0_5] : memref<1x896xf32, #tpu.memory_space<vmem>>, vector<1x896xf32>
    %5 = vector.broadcast %4 : vector<1x896xf32> to vector<224x896xf32>
    %6 = arith.addf %3, %5 : vector<224x896xf32>
    %cst_6 = arith.constant 0.000000e+00 : f32
    %7 = vector.broadcast %cst_6 : f32 to vector<224x896xf32>
    %8 = arith.maximumf %6, %7 : vector<224x896xf32>
    %9 = vector.extract_strided_slice %8 {offsets = [0, 0], sizes = [224, 224], strides = [1, 1]} : vector<224x896xf32> to vector<224x224xf32>
    %10 = vector.extract_strided_slice %8 {offsets = [0, 224], sizes = [224, 224], strides = [1, 1]} : vector<224x896xf32> to vector<224x224xf32>
    %11 = arith.maximumf %9, %10 : vector<224x224xf32>
    %12 = vector.extract_strided_slice %8 {offsets = [0, 448], sizes = [224, 224], strides = [1, 1]} : vector<224x896xf32> to vector<224x224xf32>
    %13 = vector.extract_strided_slice %8 {offsets = [0, 672], sizes = [224, 224], strides = [1, 1]} : vector<224x896xf32> to vector<224x224xf32>
    %14 = arith.maximumf %12, %13 : vector<224x224xf32>
    %15 = arith.maximumf %11, %14 : vector<224x224xf32>
    %16 = vector.extract_strided_slice %15 {offsets = [8, 0], sizes = [216, 224], strides = [1, 1]} : vector<224x224xf32> to vector<216x224xf32>
    %17 = vector.extract_strided_slice %15 {offsets = [0, 0], sizes = [8, 224], strides = [1, 1]} : vector<224x224xf32> to vector<8x224xf32>
    %18 = tpu.concatenate %16, %17 in 0 : vector<216x224xf32>, vector<8x224xf32> -> vector<224x224xf32>
    %19 = arith.maximumf %15, %18 : vector<224x224xf32>
    %20 = vector.extract_strided_slice %19 {offsets = [16, 0], sizes = [208, 224], strides = [1, 1]} : vector<224x224xf32> to vector<208x224xf32>
    %21 = vector.extract_strided_slice %19 {offsets = [0, 0], sizes = [16, 224], strides = [1, 1]} : vector<224x224xf32> to vector<16x224xf32>
    %22 = tpu.concatenate %20, %21 in 0 : vector<208x224xf32>, vector<16x224xf32> -> vector<224x224xf32>
    %23 = arith.maximumf %19, %22 : vector<224x224xf32>
    %cst_7 = arith.constant 0.000000e+00 : f32
    %24 = vector.broadcast %cst_7 : f32 to vector<8x224xf32>
    %25 = vector.extract_strided_slice %23 {offsets = [0, 0], sizes = [8, 224], strides = [1, 1]} : vector<224x224xf32> to vector<8x224xf32>
    %26 = vector.extract_strided_slice %23 {offsets = [32, 0], sizes = [8, 224], strides = [1, 1]} : vector<224x224xf32> to vector<8x224xf32>
    %27 = vector.extract_strided_slice %23 {offsets = [64, 0], sizes = [8, 224], strides = [1, 1]} : vector<224x224xf32> to vector<8x224xf32>
    %28 = vector.extract_strided_slice %23 {offsets = [96, 0], sizes = [8, 224], strides = [1, 1]} : vector<224x224xf32> to vector<8x224xf32>
    %29 = vector.extract_strided_slice %23 {offsets = [128, 0], sizes = [8, 224], strides = [1, 1]} : vector<224x224xf32> to vector<8x224xf32>
    %30 = vector.extract_strided_slice %23 {offsets = [160, 0], sizes = [8, 224], strides = [1, 1]} : vector<224x224xf32> to vector<8x224xf32>
    %31 = vector.extract_strided_slice %23 {offsets = [192, 0], sizes = [8, 224], strides = [1, 1]} : vector<224x224xf32> to vector<8x224xf32>
    %32 = tpu.concatenate %25, %26, %27, %28, %29, %30, %31, %24 in 0 : vector<8x224xf32>, vector<8x224xf32>, vector<8x224xf32>, vector<8x224xf32>, vector<8x224xf32>, vector<8x224xf32>, vector<8x224xf32>, vector<8x224xf32> -> vector<64x224xf32>
    %33 = vector.extract_strided_slice %32 {offsets = [56, 0], sizes = [8, 224], strides = [1, 1]} : vector<64x224xf32> to vector<8x224xf32>
    %34 = vector.extract_strided_slice %32 {offsets = [0, 0], sizes = [56, 224], strides = [1, 1]} : vector<64x224xf32> to vector<56x224xf32>
    %35 = tpu.concatenate %33, %34 in 0 : vector<8x224xf32>, vector<56x224xf32> -> vector<64x224xf32>
    %36 = vector.extract_strided_slice %32 {offsets = [8, 0], sizes = [56, 224], strides = [1, 1]} : vector<64x224xf32> to vector<56x224xf32>
    %37 = vector.extract_strided_slice %32 {offsets = [0, 0], sizes = [8, 224], strides = [1, 1]} : vector<64x224xf32> to vector<8x224xf32>
    %38 = tpu.concatenate %36, %37 in 0 : vector<56x224xf32>, vector<8x224xf32> -> vector<64x224xf32>
    %cst_8 = arith.constant 0.000000e+00 : f32
    %39 = vector.broadcast %cst_8 : f32 to vector<64x32xf32>
    %40 = tpu.concatenate %35, %39, %32, %39, %38, %39 in 1 : vector<64x224xf32>, vector<64x32xf32>, vector<64x224xf32>, vector<64x32xf32>, vector<64x224xf32>, vector<64x32xf32> -> vector<64x768xf32>
    %41 = arith.truncf %40 : vector<64x768xf32> to vector<64x768xbf16>
    %c0_9 = arith.constant 0 : index
    %c0_10 = arith.constant 0 : index
    %42 = vector.load %arg4[%c0_9, %c0_10] : memref<768x448xbf16, #tpu.memory_space<vmem>>, vector<768x448xbf16>
    %cst_11 = arith.constant dense<0.000000e+00> : vector<64x448xf32>
    %43 = tpu.matmul %41, %42, %cst_11 {dimension_numbers = #tpu.dot_dimension_numbers<[1], [0], [0], [1], [0, 0, 1, 1], [], []>} : vector<64x768xbf16>, vector<768x448xbf16>, vector<64x448xf32> -> vector<64x448xf32>
    %c0_12 = arith.constant 0 : index
    %c0_13 = arith.constant 0 : index
    %44 = vector.load %arg5[%c0_12, %c0_13] : memref<1x448xf32, #tpu.memory_space<vmem>>, vector<1x448xf32>
    %45 = vector.broadcast %44 : vector<1x448xf32> to vector<64x448xf32>
    %46 = arith.addf %43, %45 : vector<64x448xf32>
    %cst_14 = arith.constant 0.000000e+00 : f32
    %47 = vector.broadcast %cst_14 : f32 to vector<64x448xf32>
    %48 = arith.maximumf %46, %47 : vector<64x448xf32>
    %49 = arith.truncf %48 : vector<64x448xf32> to vector<64x448xbf16>
    %cst_15 = arith.constant 0.000000e+00 : f32
    %50 = vector.broadcast %cst_15 : f32 to vector<8x128xf32>
    %51 = vector.extract_strided_slice %49 {offsets = [0, 0], sizes = [8, 448], strides = [1, 1]} : vector<64x448xbf16> to vector<8x448xbf16>
    %c0_16 = arith.constant 0 : index
    %c0_17 = arith.constant 0 : index
    %c0_18 = arith.constant 0 : index
    %52 = vector.load %arg6[%c0_16, %c0_17, %c0_18] : memref<7x448x128xbf16, #tpu.memory_space<vmem>>, vector<1x448x128xbf16>
    %53 = vector.shape_cast %52 : vector<1x448x128xbf16> to vector<448x128xbf16>
    %cst_19 = arith.constant dense<0.000000e+00> : vector<8x128xf32>
    %54 = tpu.matmul %51, %53, %cst_19 {dimension_numbers = #tpu.dot_dimension_numbers<[1], [0], [0], [1], [0, 0, 1, 1], [], []>} : vector<8x448xbf16>, vector<448x128xbf16>, vector<8x128xf32> -> vector<8x128xf32>
    %55 = arith.addf %50, %54 : vector<8x128xf32>
    %56 = vector.extract_strided_slice %49 {offsets = [8, 0], sizes = [8, 448], strides = [1, 1]} : vector<64x448xbf16> to vector<8x448xbf16>
    %c1 = arith.constant 1 : index
    %c0_20 = arith.constant 0 : index
    %c0_21 = arith.constant 0 : index
    %57 = vector.load %arg6[%c1, %c0_20, %c0_21] : memref<7x448x128xbf16, #tpu.memory_space<vmem>>, vector<1x448x128xbf16>
    %58 = vector.shape_cast %57 : vector<1x448x128xbf16> to vector<448x128xbf16>
    %cst_22 = arith.constant dense<0.000000e+00> : vector<8x128xf32>
    %59 = tpu.matmul %56, %58, %cst_22 {dimension_numbers = #tpu.dot_dimension_numbers<[1], [0], [0], [1], [0, 0, 1, 1], [], []>} : vector<8x448xbf16>, vector<448x128xbf16>, vector<8x128xf32> -> vector<8x128xf32>
    %60 = arith.addf %55, %59 : vector<8x128xf32>
    %61 = vector.extract_strided_slice %49 {offsets = [16, 0], sizes = [8, 448], strides = [1, 1]} : vector<64x448xbf16> to vector<8x448xbf16>
    %c2 = arith.constant 2 : index
    %c0_23 = arith.constant 0 : index
    %c0_24 = arith.constant 0 : index
    %62 = vector.load %arg6[%c2, %c0_23, %c0_24] : memref<7x448x128xbf16, #tpu.memory_space<vmem>>, vector<1x448x128xbf16>
    %63 = vector.shape_cast %62 : vector<1x448x128xbf16> to vector<448x128xbf16>
    %cst_25 = arith.constant dense<0.000000e+00> : vector<8x128xf32>
    %64 = tpu.matmul %61, %63, %cst_25 {dimension_numbers = #tpu.dot_dimension_numbers<[1], [0], [0], [1], [0, 0, 1, 1], [], []>} : vector<8x448xbf16>, vector<448x128xbf16>, vector<8x128xf32> -> vector<8x128xf32>
    %65 = arith.addf %60, %64 : vector<8x128xf32>
    %66 = vector.extract_strided_slice %49 {offsets = [24, 0], sizes = [8, 448], strides = [1, 1]} : vector<64x448xbf16> to vector<8x448xbf16>
    %c3 = arith.constant 3 : index
    %c0_26 = arith.constant 0 : index
    %c0_27 = arith.constant 0 : index
    %67 = vector.load %arg6[%c3, %c0_26, %c0_27] : memref<7x448x128xbf16, #tpu.memory_space<vmem>>, vector<1x448x128xbf16>
    %68 = vector.shape_cast %67 : vector<1x448x128xbf16> to vector<448x128xbf16>
    %cst_28 = arith.constant dense<0.000000e+00> : vector<8x128xf32>
    %69 = tpu.matmul %66, %68, %cst_28 {dimension_numbers = #tpu.dot_dimension_numbers<[1], [0], [0], [1], [0, 0, 1, 1], [], []>} : vector<8x448xbf16>, vector<448x128xbf16>, vector<8x128xf32> -> vector<8x128xf32>
    %70 = arith.addf %65, %69 : vector<8x128xf32>
    %71 = vector.extract_strided_slice %49 {offsets = [32, 0], sizes = [8, 448], strides = [1, 1]} : vector<64x448xbf16> to vector<8x448xbf16>
    %c4 = arith.constant 4 : index
    %c0_29 = arith.constant 0 : index
    %c0_30 = arith.constant 0 : index
    %72 = vector.load %arg6[%c4, %c0_29, %c0_30] : memref<7x448x128xbf16, #tpu.memory_space<vmem>>, vector<1x448x128xbf16>
    %73 = vector.shape_cast %72 : vector<1x448x128xbf16> to vector<448x128xbf16>
    %cst_31 = arith.constant dense<0.000000e+00> : vector<8x128xf32>
    %74 = tpu.matmul %71, %73, %cst_31 {dimension_numbers = #tpu.dot_dimension_numbers<[1], [0], [0], [1], [0, 0, 1, 1], [], []>} : vector<8x448xbf16>, vector<448x128xbf16>, vector<8x128xf32> -> vector<8x128xf32>
    %75 = arith.addf %70, %74 : vector<8x128xf32>
    %76 = vector.extract_strided_slice %49 {offsets = [40, 0], sizes = [8, 448], strides = [1, 1]} : vector<64x448xbf16> to vector<8x448xbf16>
    %c5 = arith.constant 5 : index
    %c0_32 = arith.constant 0 : index
    %c0_33 = arith.constant 0 : index
    %77 = vector.load %arg6[%c5, %c0_32, %c0_33] : memref<7x448x128xbf16, #tpu.memory_space<vmem>>, vector<1x448x128xbf16>
    %78 = vector.shape_cast %77 : vector<1x448x128xbf16> to vector<448x128xbf16>
    %cst_34 = arith.constant dense<0.000000e+00> : vector<8x128xf32>
    %79 = tpu.matmul %76, %78, %cst_34 {dimension_numbers = #tpu.dot_dimension_numbers<[1], [0], [0], [1], [0, 0, 1, 1], [], []>} : vector<8x448xbf16>, vector<448x128xbf16>, vector<8x128xf32> -> vector<8x128xf32>
    %80 = arith.addf %75, %79 : vector<8x128xf32>
    %81 = vector.extract_strided_slice %49 {offsets = [48, 0], sizes = [8, 448], strides = [1, 1]} : vector<64x448xbf16> to vector<8x448xbf16>
    %c6 = arith.constant 6 : index
    %c0_35 = arith.constant 0 : index
    %c0_36 = arith.constant 0 : index
    %82 = vector.load %arg6[%c6, %c0_35, %c0_36] : memref<7x448x128xbf16, #tpu.memory_space<vmem>>, vector<1x448x128xbf16>
    %83 = vector.shape_cast %82 : vector<1x448x128xbf16> to vector<448x128xbf16>
    %cst_37 = arith.constant dense<0.000000e+00> : vector<8x128xf32>
    %84 = tpu.matmul %81, %83, %cst_37 {dimension_numbers = #tpu.dot_dimension_numbers<[1], [0], [0], [1], [0, 0, 1, 1], [], []>} : vector<8x448xbf16>, vector<448x128xbf16>, vector<8x128xf32> -> vector<8x128xf32>
    %85 = arith.addf %80, %84 : vector<8x128xf32>
    %c0_38 = arith.constant 0 : index
    %c0_39 = arith.constant 0 : index
    %86 = vector.load %arg7[%c0_38, %c0_39] : memref<1x128xf32, #tpu.memory_space<vmem>>, vector<1x128xf32>
    %87 = vector.broadcast %86 : vector<1x128xf32> to vector<8x128xf32>
    %88 = arith.addf %85, %87 : vector<8x128xf32>
    %c0_40 = arith.constant 0 : index
    %c0_41 = arith.constant 0 : index
    %89 = vector.load %arg8[%c0_40, %c0_41] : memref<8x128xf32, #tpu.memory_space<vmem>>, vector<8x128xf32>
    tpu.vector_store %arg8[%c0_40, %c0_41], %88 {strides = array<i32>} : memref<8x128xf32, #tpu.memory_space<vmem>>, vector<8x128xf32>,
    return
  }
  func.func @transform_0(%arg0: i32) -> (i32, i32, i32) {
    %c0_i32 = arith.constant 0 : i32
    %c0_i32_0 = arith.constant 0 : i32
    %c0_i32_1 = arith.constant 0 : i32
    return %c0_i32, %arg0, %c0_i32_0 : i32, i32, i32
  }
  func.func @transform_1(%arg0: i32) -> (i32, i32) {
    %c0_i32 = arith.constant 0 : i32
    %c0_i32_0 = arith.constant 0 : i32
    %c0_i32_1 = arith.constant 0 : i32
    return %c0_i32, %c0_i32_0 : i32, i32
  }
  func.func @transform_2(%arg0: i32) -> (i32, i32) {
    %c0_i32 = arith.constant 0 : i32
    %c0_i32_0 = arith.constant 0 : i32
    %c0_i32_1 = arith.constant 0 : i32
    return %c0_i32, %c0_i32_0 : i32, i32
  }
  func.func @transform_3(%arg0: i32) -> (i32, i32) {
    %c0_i32 = arith.constant 0 : i32
    %c0_i32_0 = arith.constant 0 : i32
    %c0_i32_1 = arith.constant 0 : i32
    return %c0_i32, %c0_i32_0 : i32, i32
  }
  func.func @transform_4(%arg0: i32) -> (i32, i32) {
    %c0_i32 = arith.constant 0 : i32
    %c0_i32_0 = arith.constant 0 : i32
    %c0_i32_1 = arith.constant 0 : i32
    return %c0_i32, %c0_i32_0 : i32, i32
  }
  func.func @transform_5(%arg0: i32) -> (i32, i32, i32) {
    %c0_i32 = arith.constant 0 : i32
    %c0_i32_0 = arith.constant 0 : i32
    %c0_i32_1 = arith.constant 0 : i32
    %c0_i32_2 = arith.constant 0 : i32
    return %c0_i32, %c0_i32_0, %c0_i32_1 : i32, i32, i32
  }
  func.func @transform_6(%arg0: i32) -> (i32, i32) {
    %c0_i32 = arith.constant 0 : i32
    %c0_i32_0 = arith.constant 0 : i32
    %c0_i32_1 = arith.constant 0 : i32
    return %c0_i32, %c0_i32_0 : i32, i32
  }
  func.func @transform_7(%arg0: i32) -> (i32, i32) {
    %c0_i32 = arith.constant 0 : i32
    %c0_i32_0 = arith.constant 0 : i32
    return %arg0, %c0_i32 : i32, i32
  }
}

</mosaic_0001>

<llo_original>
// kernel: conv3_forward.1
$region0: #{conv3_forward.1}
  #allocation0 [shape = 'u32[]', space=smem, size = 0x4, offset = 0x4, fixed_abs, tag = 'smem constant byte address 0x4 - core index']
  #allocation1 [shape = 'u32[144,128]{1,0:T(1,128)}', space=vmem, size = 0x12000, scoped, tag = 'internal scratch']
  %s0 = inlined_call_operand.vmem [shape: bf16[28,8,90], index: 0, kind: input, shape index: {}]
  %s1 = inlined_call_operand.vmem [shape: bf16[90,896], index: 1, kind: input, shape index: {}]
  %s2 = inlined_call_operand.vmem [shape: f32[1,896], index: 2, kind: input, shape index: {}]
  %s3 = inlined_call_operand.vmem [shape: bf16[768,448], index: 3, kind: input, shape index: {}]
  %s4 = inlined_call_operand.vmem [shape: f32[1,448], index: 4, kind: input, shape index: {}]
  %s5 = inlined_call_operand.vmem [shape: bf16[7,448,128], index: 5, kind: input, shape index: {}]
  %s6 = inlined_call_operand.vmem [shape: f32[1,128], index: 6, kind: input, shape index: {}]
  %s7 = inlined_call_operand.vmem [shape: f32[8,128], index: 7, kind: output, shape index: {}]
  %s8 = sld [smem:[#allocation0]]
  $region38: #{conv3_forward.1} parent=0
    _
  %s10 = ssub.s32 1, %s8
  %s11 = scalar_select 0, %s10, %s8
  // Predicated region
  $region2: #{conv3_forward.1} parent=0 // pred_check
    _
  $region3: #{conv3_forward.1} parent=0 // pred_check_branch
    %13 = sbr.rel (0) target = $region5
  $region4: #{conv3_forward.1} parent=0 // pred_region
    _
  $region5: #{conv3_forward.1} parent=0 // pred_fallthru
    _
  // Predicated region
  $region6: #{conv3_forward.1} parent=0 // pred_check
    _
  $region7: #{conv3_forward.1} parent=0 // pred_check_branch
    %15 = sbr.rel (0) target = $region9
  $region8: #{conv3_forward.1} parent=0 // pred_region
    _
  $region9: #{conv3_forward.1} parent=0 // pred_fallthru
    _
  // Predicated region
  $region10: #{conv3_forward.1} parent=0 // pred_check
    _
  $region11: #{conv3_forward.1} parent=0 // pred_check_branch
    %17 = sbr.rel (0) target = $region13
  $region12: #{conv3_forward.1} parent=0 // pred_region
    _
  $region13: #{conv3_forward.1} parent=0 // pred_fallthru
    _
  // Predicated region
  $region14: #{conv3_forward.1} parent=0 // pred_check
    _
  $region15: #{conv3_forward.1} parent=0 // pred_check_branch
    %19 = sbr.rel (0) target = $region17
  $region16: #{conv3_forward.1} parent=0 // pred_region
    _
  $region17: #{conv3_forward.1} parent=0 // pred_fallthru
    _
  // Predicated region
  $region18: #{conv3_forward.1} parent=0 // pred_check
    _
  $region19: #{conv3_forward.1} parent=0 // pred_check_branch
    %21 = sbr.rel (0) target = $region21
  $region20: #{conv3_forward.1} parent=0 // pred_region
    _
  $region21: #{conv3_forward.1} parent=0 // pred_fallthru
    _
  // Predicated region
  $region22: #{conv3_forward.1} parent=0 // pred_check
    _
  $region23: #{conv3_forward.1} parent=0 // pred_check_branch
    %23 = sbr.rel (0) target = $region25
  $region24: #{conv3_forward.1} parent=0 // pred_region
    _
  $region25: #{conv3_forward.1} parent=0 // pred_fallthru
    _
  // Predicated region
  $region26: #{conv3_forward.1} parent=0 // pred_check
    _
  $region27: #{conv3_forward.1} parent=0 // pred_check_branch
    %25 = sbr.rel (0) target = $region29
  $region28: #{conv3_forward.1} parent=0 // pred_region
    _
  $region29: #{conv3_forward.1} parent=0 // pred_fallthru
    _
  %v27 = vld [vmem:[%s0] sm:$0xf]
  %v28 = vld [vmem:[%s0 + $0x4] sm:$0xf]
  %v29 = vld [vmem:[%s0 + $0x8] sm:$0xf]
  %v30 = vld [vmem:[%s0 + $0xc] sm:$0xf]
  %v31 = vld [vmem:[%s0 + $0x10] sm:$0xf]
  %v32 = vld [vmem:[%s0 + $0x14] sm:$0xf]
  %v33 = vld [vmem:[%s0 + $0x18] sm:$0xf]
  %v34 = vld [vmem:[%s0 + $0x1c] sm:$0xf]
  %v35 = vld [vmem:[%s0 + $0x20] sm:$0xf]
  %v36 = vld [vmem:[%s0 + $0x24] sm:$0xf]
  %v37 = vld [vmem:[%s0 + $0x28] sm:$0xf]
  %v38 = vld [vmem:[%s0 + $0x2c] sm:$0xf]
  %v39 = vld [vmem:[%s0 + $0x30] sm:$0xf]
  %v40 = vld [vmem:[%s0 + $0x34] sm:$0xf]
  %v41 = vld [vmem:[%s0 + $0x38] sm:$0xf]
  %v42 = vld [vmem:[%s0 + $0x3c] sm:$0xf]
  %v43 = vld [vmem:[%s0 + $0x40] sm:$0xf]
  %v44 = vld [vmem:[%s0 + $0x44] sm:$0xf]
  %v45 = vld [vmem:[%s0 + $0x48] sm:$0xf]
  %v46 = vld [vmem:[%s0 + $0x4c] sm:$0xf]
  %v47 = vld [vmem:[%s0 + $0x50] sm:$0xf]
  %v48 = vld [vmem:[%s0 + $0x54] sm:$0xf]
  %v49 = vld [vmem:[%s0 + $0x58] sm:$0xf]
  %v50 = vld [vmem:[%s0 + $0x5c] sm:$0xf]
  %v51 = vld [vmem:[%s0 + $0x60] sm:$0xf]
  %v52 = vld [vmem:[%s0 + $0x64] sm:$0xf]
  %v53 = vld [vmem:[%s0 + $0x68] sm:$0xf]
  %v54 = vld [vmem:[%s0 + $0x6c] sm:$0xf]
  %v55 = vld [vmem:[%s1] sm:$0xff]
  %v56 = vld [vmem:[%s1 + $0x8] sm:$0xff]
  %v57 = vld [vmem:[%s1 + $0x10] sm:$0xff]
  %v58 = vld [vmem:[%s1 + $0x18] sm:$0xf]
  %v59 = vld [vmem:[%s1 + $0x1c] sm:$0xff]
  %v60 = vld [vmem:[%s1 + $0x24] sm:$0xff]
  %v61 = vld [vmem:[%s1 + $0x2c] sm:$0xff]
  %v62 = vld [vmem:[%s1 + $0x34] sm:$0xf]
  %v63 = vld [vmem:[%s1 + $0x38] sm:$0xff]
  %v64 = vld [vmem:[%s1 + $0x40] sm:$0xff]
  %v65 = vld [vmem:[%s1 + $0x48] sm:$0xff]
  %v66 = vld [vmem:[%s1 + $0x50] sm:$0xf]
  %v67 = vld [vmem:[%s1 + $0x54] sm:$0xff]
  %v68 = vld [vmem:[%s1 + $0x5c] sm:$0xff]
  %v69 = vld [vmem:[%s1 + $0x64] sm:$0xff]
  %v70 = vld [vmem:[%s1 + $0x6c] sm:$0xf]
  %v71 = vld [vmem:[%s1 + $0x70] sm:$0xff]
  %v72 = vld [vmem:[%s1 + $0x78] sm:$0xff]
  %v73 = vld [vmem:[%s1 + $0x80] sm:$0xff]
  %v74 = vld [vmem:[%s1 + $0x88] sm:$0xf]
  %v75 = vld [vmem:[%s1 + $0x8c] sm:$0xff]
  %v76 = vld [vmem:[%s1 + $0x94] sm:$0xff]
  %v77 = vld [vmem:[%s1 + $0x9c] sm:$0xff]
  %v78 = vld [vmem:[%s1 + $0xa4] sm:$0xf]
  %v79 = vld [vmem:[%s1 + $0xa8] sm:$0xff]
  %v80 = vld [vmem:[%s1 + $0xb0] sm:$0xff]
  %v81 = vld [vmem:[%s1 + $0xb8] sm:$0xff]
  %v82 = vld [vmem:[%s1 + $0xc0] sm:$0xf]
  %v83 = vld [vmem:[%s1 + $0xc4] sm:$0xff]
  %v84 = vld [vmem:[%s1 + $0xcc] sm:$0xff]
  %v85 = vld [vmem:[%s1 + $0xd4] sm:$0xff]
  %v86 = vld [vmem:[%s1 + $0xdc] sm:$0xf]
  %v87 = vld [vmem:[%s1 + $0xe0] sm:$0xff]
  %v88 = vld [vmem:[%s1 + $0xe8] sm:$0xff]
  %v89 = vld [vmem:[%s1 + $0xf0] sm:$0xff]
  %v90 = vld [vmem:[%s1 + $0xf8] sm:$0xf]
  %v91 = vld [vmem:[%s1 + $0xfc] sm:$0xff]
  %v92 = vld [vmem:[%s1 + $0x104] sm:$0xff]
  %v93 = vld [vmem:[%s1 + $0x10c] sm:$0xff]
  %v94 = vld [vmem:[%s1 + $0x114] sm:$0xf]
  %v95 = vld [vmem:[%s1 + $0x118] sm:$0xff]
  %v96 = vld [vmem:[%s1 + $0x120] sm:$0xff]
  %v97 = vld [vmem:[%s1 + $0x128] sm:$0xff]
  %v98 = vld [vmem:[%s1 + $0x130] sm:$0xf]
  %v99 = vld [vmem:[%s1 + $0x134] sm:$0x11]
  %v100 = vld [vmem:[%s1 + $0x13c] sm:$0x11]
  %v101 = vld [vmem:[%s1 + $0x144] sm:$0x11]
  %v102 = vld [vmem:[%s1 + $0x14c] sm:$0x1]
  %v103 = vld [vmem:[%s2] sm:$0xff]
  %v105 = vlaneseq
  %v106 = vshrl.u32 %v105, 7
  %v107 = vsub.s32 0, %v106
  %v108 = vrot.slane %v103, %v107
  %v109 = vlaneseq
  %v110 = vshrl.u32 %v109, 7
  %v111 = vsub.s32 1, %v110
  %v112 = vrot.slane %v103, %v111
  %v113 = vlaneseq
  %v114 = vshrl.u32 %v113, 7
  %v115 = vsub.s32 2, %v114
  %v116 = vrot.slane %v103, %v115
  %v117 = vlaneseq
  %v118 = vshrl.u32 %v117, 7
  %v119 = vsub.s32 3, %v118
  %v120 = vrot.slane %v103, %v119
  %v121 = vlaneseq
  %v122 = vshrl.u32 %v121, 7
  %v123 = vsub.s32 4, %v122
  %v124 = vrot.slane %v103, %v123
  %v125 = vlaneseq
  %v126 = vshrl.u32 %v125, 7
  %v127 = vsub.s32 5, %v126
  %v128 = vrot.slane %v103, %v127
  %v129 = vlaneseq
  %v130 = vshrl.u32 %v129, 7
  %v131 = vsub.s32 6, %v130
  %v132 = vrot.slane %v103, %v131
  %v168 = vunpack.c.l.b16 %v27
  %v169 = vunpack.c.l.b16 %v28
  %v170 = vunpack.c.l.b16 %v29
  %v171 = vunpack.c.l.b16 %v30
  %v172 = vunpack.c.l.b16 %v31
  %v173 = vunpack.c.l.b16 %v32
  %v174 = vunpack.c.l.b16 %v33
  %v175 = vunpack.c.l.b16 %v34
  %v176 = vunpack.c.l.b16 %v35
  %v177 = vunpack.c.l.b16 %v36
  %v178 = vunpack.c.l.b16 %v37
  %v179 = vunpack.c.l.b16 %v38
  %v180 = vunpack.c.l.b16 %v39
  %v181 = vunpack.c.l.b16 %v40
  %v182 = vunpack.c.l.b16 %v41
  %v183 = vunpack.c.l.b16 %v42
  %v184 = vunpack.c.l.b16 %v43
  %v185 = vunpack.c.l.b16 %v44
  %v186 = vunpack.c.l.b16 %v45
  %v187 = vunpack.c.l.b16 %v46
  %v188 = vunpack.c.l.b16 %v47
  %v189 = vunpack.c.l.b16 %v48
  %v190 = vunpack.c.l.b16 %v49
  %v191 = vunpack.c.l.b16 %v50
  %v192 = vunpack.c.l.b16 %v51
  %v193 = vunpack.c.l.b16 %v52
  %v194 = vunpack.c.l.b16 %v53
  %v195 = vunpack.c.l.b16 %v54
  %v196 = vpack.c.b16 %v169, %v168
  %v197 = vpack.c.b16 %v171, %v170
  %v198 = vpack.c.b16 %v173, %v172
  %v199 = vpack.c.b16 %v175, %v174
  %v200 = vpack.c.b16 %v177, %v176
  %v201 = vpack.c.b16 %v179, %v178
  %v202 = vpack.c.b16 %v181, %v180
  %v203 = vpack.c.b16 %v183, %v182
  %v204 = vpack.c.b16 %v185, %v184
  %v205 = vpack.c.b16 %v187, %v186
  %v206 = vpack.c.b16 %v189, %v188
  %v207 = vpack.c.b16 %v191, %v190
  %v208 = vpack.c.b16 %v193, %v192
  %v209 = vpack.c.b16 %v195, %v194
  %v258 = vunpack.c.l.b16 %v55
  %v259 = vunpack.c.h.b16 %v55
  %v260 = vunpack.c.l.b16 %v56
  %v261 = vunpack.c.h.b16 %v56
  %v262 = vunpack.c.l.b16 %v57
  %v263 = vunpack.c.h.b16 %v57
  %v264 = vunpack.c.l.b16 %v58
  %v265 = vunpack.c.l.b16 %v59
  %v266 = vunpack.c.h.b16 %v59
  %v267 = vunpack.c.l.b16 %v60
  %v268 = vunpack.c.h.b16 %v60
  %v269 = vunpack.c.l.b16 %v61
  %v270 = vunpack.c.h.b16 %v61
  %v271 = vunpack.c.l.b16 %v62
  %v272 = vunpack.c.l.b16 %v63
  %v273 = vunpack.c.h.b16 %v63
  %v274 = vunpack.c.l.b16 %v64
  %v275 = vunpack.c.h.b16 %v64
  %v276 = vunpack.c.l.b16 %v65
  %v277 = vunpack.c.h.b16 %v65
  %v278 = vunpack.c.l.b16 %v66
  %v279 = vunpack.c.l.b16 %v67
  %v280 = vunpack.c.h.b16 %v67
  %v281 = vunpack.c.l.b16 %v68
  %v282 = vunpack.c.h.b16 %v68
  %v283 = vunpack.c.l.b16 %v69
  %v284 = vunpack.c.h.b16 %v69
  %v285 = vunpack.c.l.b16 %v70
  %v286 = vunpack.c.l.b16 %v71
  %v287 = vunpack.c.h.b16 %v71
  %v288 = vunpack.c.l.b16 %v72
  %v289 = vunpack.c.h.b16 %v72
  %v290 = vunpack.c.l.b16 %v73
  %v291 = vunpack.c.h.b16 %v73
  %v292 = vunpack.c.l.b16 %v74
  %v293 = vunpack.c.l.b16 %v75
  %v294 = vunpack.c.h.b16 %v75
  %v295 = vunpack.c.l.b16 %v76
  %v296 = vunpack.c.h.b16 %v76
  %v297 = vunpack.c.l.b16 %v77
  %v298 = vunpack.c.h.b16 %v77
  %v299 = vunpack.c.l.b16 %v78
  %v300 = vunpack.c.l.b16 %v79
  %v301 = vunpack.c.h.b16 %v79
  %v302 = vunpack.c.l.b16 %v80
  %v303 = vunpack.c.h.b16 %v80
  %v304 = vunpack.c.l.b16 %v81
  %v305 = vunpack.c.h.b16 %v81
  %v306 = vunpack.c.l.b16 %v82
  %v307 = vunpack.c.l.b16 %v83
  %v308 = vunpack.c.h.b16 %v83
  %v309 = vunpack.c.l.b16 %v84
  %v310 = vunpack.c.h.b16 %v84
  %v311 = vunpack.c.l.b16 %v85
  %v312 = vunpack.c.h.b16 %v85
  %v313 = vunpack.c.l.b16 %v86
  %v314 = vunpack.c.l.b16 %v87
  %v315 = vunpack.c.h.b16 %v87
  %v316 = vunpack.c.l.b16 %v88
  %v317 = vunpack.c.h.b16 %v88
  %v318 = vunpack.c.l.b16 %v89
  %v319 = vunpack.c.h.b16 %v89
  %v320 = vunpack.c.l.b16 %v90
  %v321 = vunpack.c.l.b16 %v91
  %v322 = vunpack.c.h.b16 %v91
  %v323 = vunpack.c.l.b16 %v92
  %v324 = vunpack.c.h.b16 %v92
  %v325 = vunpack.c.l.b16 %v93
  %v326 = vunpack.c.h.b16 %v93
  %v327 = vunpack.c.l.b16 %v94
  %v328 = vunpack.c.l.b16 %v95
  %v329 = vunpack.c.h.b16 %v95
  %v330 = vunpack.c.l.b16 %v96
  %v331 = vunpack.c.h.b16 %v96
  %v332 = vunpack.c.l.b16 %v97
  %v333 = vunpack.c.h.b16 %v97
  %v334 = vunpack.c.l.b16 %v98
  %v335 = vunpack.c.l.b16 %v99
  %v336 = vunpack.c.h.b16 %v99
  %v337 = vunpack.c.l.b16 %v100
  %v338 = vunpack.c.h.b16 %v100
  %v339 = vunpack.c.l.b16 %v101
  %v340 = vunpack.c.h.b16 %v101
  %v341 = vunpack.c.l.b16 %v102
  %v342 = vpack.c.b16 %v265, %v258
  %v343 = vpack.c.b16 %v266, %v259
  %v344 = vpack.c.b16 %v267, %v260
  %v345 = vpack.c.b16 %v268, %v261
  %v346 = vpack.c.b16 %v269, %v262
  %v347 = vpack.c.b16 %v270, %v263
  %v348 = vpack.c.b16 %v271, %v264
  %v349 = vpack.c.b16 %v279, %v272
  %v350 = vpack.c.b16 %v280, %v273
  %v351 = vpack.c.b16 %v281, %v274
  %v352 = vpack.c.b16 %v282, %v275
  %v353 = vpack.c.b16 %v283, %v276
  %v354 = vpack.c.b16 %v284, %v277
  %v355 = vpack.c.b16 %v285, %v278
  %v356 = vpack.c.b16 %v293, %v286
  %v357 = vpack.c.b16 %v294, %v287
  %v358 = vpack.c.b16 %v295, %v288
  %v359 = vpack.c.b16 %v296, %v289
  %v360 = vpack.c.b16 %v297, %v290
  %v361 = vpack.c.b16 %v298, %v291
  %v362 = vpack.c.b16 %v299, %v292
  %v363 = vpack.c.b16 %v307, %v300
  %v364 = vpack.c.b16 %v308, %v301
  %v365 = vpack.c.b16 %v309, %v302
  %v366 = vpack.c.b16 %v310, %v303
  %v367 = vpack.c.b16 %v311, %v304
  %v368 = vpack.c.b16 %v312, %v305
  %v369 = vpack.c.b16 %v313, %v306
  %v370 = vpack.c.b16 %v321, %v314
  %v371 = vpack.c.b16 %v322, %v315
  %v372 = vpack.c.b16 %v323, %v316
  %v373 = vpack.c.b16 %v324, %v317
  %v374 = vpack.c.b16 %v325, %v318
  %v375 = vpack.c.b16 %v326, %v319
  %v376 = vpack.c.b16 %v327, %v320
  %v377 = vpack.c.b16 %v335, %v328
  %v378 = vpack.c.b16 %v336, %v329
  %v379 = vpack.c.b16 %v337, %v330
  %v380 = vpack.c.b16 %v338, %v331
  %v381 = vpack.c.b16 %v339, %v332
  %v382 = vpack.c.b16 %v340, %v333
  %v383 = vpack.c.b16 %v341, %v334
  %vm419 = vcmask 736256
  %v421 = vsel %vm419, %v196, 0
  %v424 = vsel %vm419, %v197, 0
  %v427 = vsel %vm419, %v198, 0
  %v430 = vsel %vm419, %v199, 0
  %v433 = vsel %vm419, %v200, 0
  %v436 = vsel %vm419, %v201, 0
  %v439 = vsel %vm419, %v202, 0
  %v442 = vsel %vm419, %v203, 0
  %v445 = vsel %vm419, %v204, 0
  %v448 = vsel %vm419, %v205, 0
  %v451 = vsel %vm419, %v206, 0
  %v454 = vsel %vm419, %v207, 0
  %v457 = vsel %vm419, %v208, 0
  %v460 = vsel %vm419, %v209, 0
  %vm462 = vcmask 1044480
  %v464 = vsel %vm462, %v377, 0
  %v467 = vsel %vm462, %v378, 0
  %v470 = vsel %vm462, %v379, 0
  %v473 = vsel %vm462, %v380, 0
  %v476 = vsel %vm462, %v381, 0
  %v479 = vsel %vm462, %v382, 0
  %v482 = vsel %vm462, %v383, 0
  %484 = vmatprep.subr.bf16.mxu0 0
  %485 = vmatpush1.bf16.msra.mxu0 0
  %486 = vmatprep.subr.bf16.mxu0 0
  %487 = vmatpush1.bf16.msra.mxu0 0
  %488 = vmatprep.subr.bf16.mxu0 %v467
  %489 = vmatpush1.bf16.msra.mxu0 %v464
  %490 = vmatprep.subr.bf16.mxu0 %v371
  %491 = vmatpush1.bf16.msra.mxu0 %v370
  %492 = vmatprep.subr.bf16.mxu0 %v364
  %493 = vmatpush1.bf16.msra.mxu0 %v363
  %494 = vmatprep.subr.bf16.mxu0 %v357
  %495 = vmatpush1.bf16.msra.mxu0 %v356
  %496 = vmatprep.subr.bf16.mxu0 %v350
  %497 = vmatpush1.bf16.msra.mxu0 %v349
  %498 = vmatprep.subr.bf16.mxu0 %v343
  %499 = vmatpush1.bf16.msra.mxu0 %v342
  %500 = vmatprep.subr.bf16.mxu0 0
  %501 = vmatpush2.bf16.msra.mxu0 0
  %502 = vmatprep.subr.bf16.mxu0 0
  %503 = vmatpush2.bf16.msra.mxu0 0
  %504 = vmatprep.subr.bf16.mxu0 0
  %505 = vmatpush2.bf16.msra.mxu0 0
  %506 = vmatprep.subr.bf16.mxu0 0
  %507 = vmatpush2.bf16.msra.mxu0 0
  %508 = vmatprep.subr.bf16.mxu0 0
  %509 = vmatpush2.bf16.msra.mxu0 0
  %510 = vmatprep.subr.bf16.mxu0 0
  %511 = vmatpush2.bf16.msra.mxu0 0
  %512 = vmatprep.subr.bf16.mxu0 0
  %513 = vmatpush2.bf16.msra.mxu0 0
  %514 = vmatprep.subr.bf16.mxu0 0
  %515 = vmatpush2.bf16.msra.mxu0 0
  %516 = vmatprep.mubr.bf16.mxu0 0
  %517 = vmatmul.mubr.bf16.gmra.mxu0 %v421
  %v518 = vpop.f32.mrf.mxu0
  %v519 = vadd.f32 %v108, %v518
  %v520 = vpop.f32.mrf.mxu0
  %v521 = vadd.f32 %v112, %v520
  %v522 = vpop.f32.mrf.mxu0
  %v523 = vadd.f32 %v108, %v522
  %v524 = vpop.f32.mrf.mxu0
  %v525 = vadd.f32 %v112, %v524
  %526 = vmatprep.mubr.bf16.mxu0 0
  %527 = vmatmul.mubr.bf16.gmra.mxu0 %v424
  %v528 = vpop.f32.mrf.mxu0
  %v529 = vadd.f32 %v108, %v528
  %v530 = vpop.f32.mrf.mxu0
  %v531 = vadd.f32 %v112, %v530
  %v532 = vpop.f32.mrf.mxu0
  %v533 = vadd.f32 %v108, %v532
  %v534 = vpop.f32.mrf.mxu0
  %v535 = vadd.f32 %v112, %v534
  %536 = vmatprep.mubr.bf16.mxu0 0
  %537 = vmatmul.mubr.bf16.gmra.mxu0 %v427
  %v538 = vpop.f32.mrf.mxu0
  %v539 = vadd.f32 %v108, %v538
  %v540 = vpop.f32.mrf.mxu0
  %v541 = vadd.f32 %v112, %v540
  %v542 = vpop.f32.mrf.mxu0
  %v543 = vadd.f32 %v108, %v542
  %v544 = vpop.f32.mrf.mxu0
  %v545 = vadd.f32 %v112, %v544
  %546 = vmatprep.mubr.bf16.mxu0 0
  %547 = vmatmul.mubr.bf16.gmra.mxu0 %v430
  %v548 = vpop.f32.mrf.mxu0
  %v549 = vadd.f32 %v108, %v548
  %v550 = vpop.f32.mrf.mxu0
  %v551 = vadd.f32 %v112, %v550
  %v552 = vpop.f32.mrf.mxu0
  %v553 = vadd.f32 %v108, %v552
  %v554 = vpop.f32.mrf.mxu0
  %v555 = vadd.f32 %v112, %v554
  %556 = vmatprep.mubr.bf16.mxu0 0
  %557 = vmatmul.mubr.bf16.gmra.mxu0 %v433
  %v558 = vpop.f32.mrf.mxu0
  %v559 = vadd.f32 %v108, %v558
  %v560 = vpop.f32.mrf.mxu0
  %v561 = vadd.f32 %v112, %v560
  %v562 = vpop.f32.mrf.mxu0
  %v563 = vadd.f32 %v108, %v562
  %v564 = vpop.f32.mrf.mxu0
  %v565 = vadd.f32 %v112, %v564
  %566 = vmatprep.mubr.bf16.mxu0 0
  %567 = vmatmul.mubr.bf16.gmra.mxu0 %v436
  %v568 = vpop.f32.mrf.mxu0
  %v569 = vadd.f32 %v108, %v568
  %v570 = vpop.f32.mrf.mxu0
  %v571 = vadd.f32 %v112, %v570
  %v572 = vpop.f32.mrf.mxu0
  %v573 = vadd.f32 %v108, %v572
  %v574 = vpop.f32.mrf.mxu0
  %v575 = vadd.f32 %v112, %v574
  %576 = vmatprep.mubr.bf16.mxu0 0
  %577 = vmatmul.mubr.bf16.gmra.mxu0 %v439
  %v578 = vpop.f32.mrf.mxu0
  %v579 = vadd.f32 %v108, %v578
  %v580 = vpop.f32.mrf.mxu0
  %v581 = vadd.f32 %v112, %v580
  %v582 = vpop.f32.mrf.mxu0
  %v583 = vadd.f32 %v108, %v582
  %v584 = vpop.f32.mrf.mxu0
  %v585 = vadd.f32 %v112, %v584
  %586 = vmatprep.mubr.bf16.mxu0 0
  %587 = vmatmul.mubr.bf16.gmra.mxu0 %v442
  %v588 = vpop.f32.mrf.mxu0
  %v589 = vadd.f32 %v108, %v588
  %v590 = vpop.f32.mrf.mxu0
  %v591 = vadd.f32 %v112, %v590
  %v592 = vpop.f32.mrf.mxu0
  %v593 = vadd.f32 %v108, %v592
  %v594 = vpop.f32.mrf.mxu0
  %v595 = vadd.f32 %v112, %v594
  %596 = vmatprep.mubr.bf16.mxu0 0
  %597 = vmatmul.mubr.bf16.gmra.mxu0 %v445
  %v598 = vpop.f32.mrf.mxu0
  %v599 = vadd.f32 %v108, %v598
  %v600 = vpop.f32.mrf.mxu0
  %v601 = vadd.f32 %v112, %v600
  %v602 = vpop.f32.mrf.mxu0
  %v603 = vadd.f32 %v108, %v602
  %v604 = vpop.f32.mrf.mxu0
  %v605 = vadd.f32 %v112, %v604
  %606 = vmatprep.mubr.bf16.mxu0 0
  %607 = vmatmul.mubr.bf16.gmra.mxu0 %v448
  %v608 = vpop.f32.mrf.mxu0
  %v609 = vadd.f32 %v108, %v608
  %v610 = vpop.f32.mrf.mxu0
  %v611 = vadd.f32 %v112, %v610
  %v612 = vpop.f32.mrf.mxu0
  %v613 = vadd.f32 %v108, %v612
  %v614 = vpop.f32.mrf.mxu0
  %v615 = vadd.f32 %v112, %v614
  %616 = vmatprep.mubr.bf16.mxu0 0
  %617 = vmatmul.mubr.bf16.gmra.mxu0 %v451
  %v618 = vpop.f32.mrf.mxu0
  %v619 = vadd.f32 %v108, %v618
  %v620 = vpop.f32.mrf.mxu0
  %v621 = vadd.f32 %v112, %v620
  %v622 = vpop.f32.mrf.mxu0
  %v623 = vadd.f32 %v108, %v622
  %v624 = vpop.f32.mrf.mxu0
  %v625 = vadd.f32 %v112, %v624
  %626 = vmatprep.mubr.bf16.mxu0 0
  %627 = vmatmul.mubr.bf16.gmra.mxu0 %v454
  %v628 = vpop.f32.mrf.mxu0
  %v629 = vadd.f32 %v108, %v628
  %v630 = vpop.f32.mrf.mxu0
  %v631 = vadd.f32 %v112, %v630
  %v632 = vpop.f32.mrf.mxu0
  %v633 = vadd.f32 %v108, %v632
  %v634 = vpop.f32.mrf.mxu0
  %v635 = vadd.f32 %v112, %v634
  %636 = vmatprep.mubr.bf16.mxu0 0
  %637 = vmatmul.mubr.bf16.gmra.mxu0 %v457
  %v638 = vpop.f32.mrf.mxu0
  %v639 = vadd.f32 %v108, %v638
  %v640 = vpop.f32.mrf.mxu0
  %v641 = vadd.f32 %v112, %v640
  %v642 = vpop.f32.mrf.mxu0
  %v643 = vadd.f32 %v108, %v642
  %v644 = vpop.f32.mrf.mxu0
  %v645 = vadd.f32 %v112, %v644
  %646 = vmatprep.mubr.bf16.mxu0 0
  %647 = vmatmul.mubr.bf16.gmra.mxu0 %v460
  %v648 = vpop.f32.mrf.mxu0
  %v649 = vadd.f32 %v108, %v648
  %v650 = vpop.f32.mrf.mxu0
  %v651 = vadd.f32 %v112, %v650
  %v652 = vpop.f32.mrf.mxu0
  %v653 = vadd.f32 %v108, %v652
  %v654 = vpop.f32.mrf.mxu0
  %v655 = vadd.f32 %v112, %v654
  %656 = vdwg.mxu0
  %657 = vmatprep.subr.bf16.mxu0 0
  %658 = vmatpush1.bf16.msra.mxu0 0
  %659 = vmatprep.subr.bf16.mxu0 0
  %660 = vmatpush1.bf16.msra.mxu0 0
  %661 = vmatprep.subr.bf16.mxu0 %v473
  %662 = vmatpush1.bf16.msra.mxu0 %v470
  %663 = vmatprep.subr.bf16.mxu0 %v373
  %664 = vmatpush1.bf16.msra.mxu0 %v372
  %665 = vmatprep.subr.bf16.mxu0 %v366
  %666 = vmatpush1.bf16.msra.mxu0 %v365
  %667 = vmatprep.subr.bf16.mxu0 %v359
  %668 = vmatpush1.bf16.msra.mxu0 %v358
  %669 = vmatprep.subr.bf16.mxu0 %v352
  %670 = vmatpush1.bf16.msra.mxu0 %v351
  %671 = vmatprep.subr.bf16.mxu0 %v345
  %672 = vmatpush1.bf16.msra.mxu0 %v344
  %673 = vmatprep.subr.bf16.mxu0 0
  %674 = vmatpush2.bf16.msra.mxu0 0
  %675 = vmatprep.subr.bf16.mxu0 0
  %676 = vmatpush2.bf16.msra.mxu0 0
  %677 = vmatprep.subr.bf16.mxu0 0
  %678 = vmatpush2.bf16.msra.mxu0 0
  %679 = vmatprep.subr.bf16.mxu0 0
  %680 = vmatpush2.bf16.msra.mxu0 0
  %681 = vmatprep.subr.bf16.mxu0 0
  %682 = vmatpush2.bf16.msra.mxu0 0
  %683 = vmatprep.subr.bf16.mxu0 0
  %684 = vmatpush2.bf16.msra.mxu0 0
  %685 = vmatprep.subr.bf16.mxu0 0
  %686 = vmatpush2.bf16.msra.mxu0 0
  %687 = vmatprep.subr.bf16.mxu0 0
  %688 = vmatpush2.bf16.msra.mxu0 0
  %689 = vmatprep.mubr.bf16.mxu0 0
  %690 = vmatmul.mubr.bf16.gmra.mxu0 %v421
  %v691 = vpop.f32.mrf.mxu0
  %v692 = vadd.f32 %v116, %v691
  %v693 = vpop.f32.mrf.mxu0
  %v694 = vadd.f32 %v120, %v693
  %v695 = vpop.f32.mrf.mxu0
  %v696 = vadd.f32 %v116, %v695
  %v697 = vpop.f32.mrf.mxu0
  %v698 = vadd.f32 %v120, %v697
  %699 = vmatprep.mubr.bf16.mxu0 0
  %700 = vmatmul.mubr.bf16.gmra.mxu0 %v424
  %v701 = vpop.f32.mrf.mxu0
  %v702 = vadd.f32 %v116, %v701
  %v703 = vpop.f32.mrf.mxu0
  %v704 = vadd.f32 %v120, %v703
  %v705 = vpop.f32.mrf.mxu0
  %v706 = vadd.f32 %v116, %v705
  %v707 = vpop.f32.mrf.mxu0
  %v708 = vadd.f32 %v120, %v707
  %709 = vmatprep.mubr.bf16.mxu0 0
  %710 = vmatmul.mubr.bf16.gmra.mxu0 %v427
  %v711 = vpop.f32.mrf.mxu0
  %v712 = vadd.f32 %v116, %v711
  %v713 = vpop.f32.mrf.mxu0
  %v714 = vadd.f32 %v120, %v713
  %v715 = vpop.f32.mrf.mxu0
  %v716 = vadd.f32 %v116, %v715
  %v717 = vpop.f32.mrf.mxu0
  %v718 = vadd.f32 %v120, %v717
  %719 = vmatprep.mubr.bf16.mxu0 0
  %720 = vmatmul.mubr.bf16.gmra.mxu0 %v430
  %v721 = vpop.f32.mrf.mxu0
  %v722 = vadd.f32 %v116, %v721
  %v723 = vpop.f32.mrf.mxu0
  %v724 = vadd.f32 %v120, %v723
  %v725 = vpop.f32.mrf.mxu0
  %v726 = vadd.f32 %v116, %v725
  %v727 = vpop.f32.mrf.mxu0
  %v728 = vadd.f32 %v120, %v727
  %729 = vmatprep.mubr.bf16.mxu0 0
  %730 = vmatmul.mubr.bf16.gmra.mxu0 %v433
  %v731 = vpop.f32.mrf.mxu0
  %v732 = vadd.f32 %v116, %v731
  %v733 = vpop.f32.mrf.mxu0
  %v734 = vadd.f32 %v120, %v733
  %v735 = vpop.f32.mrf.mxu0
  %v736 = vadd.f32 %v116, %v735
  %v737 = vpop.f32.mrf.mxu0
  %v738 = vadd.f32 %v120, %v737
  %739 = vmatprep.mubr.bf16.mxu0 0
  %740 = vmatmul.mubr.bf16.gmra.mxu0 %v436
  %v741 = vpop.f32.mrf.mxu0
  %v742 = vadd.f32 %v116, %v741
  %v743 = vpop.f32.mrf.mxu0
  %v744 = vadd.f32 %v120, %v743
  %v745 = vpop.f32.mrf.mxu0
  %v746 = vadd.f32 %v116, %v745
  %v747 = vpop.f32.mrf.mxu0
  %v748 = vadd.f32 %v120, %v747
  %749 = vmatprep.mubr.bf16.mxu0 0
  %750 = vmatmul.mubr.bf16.gmra.mxu0 %v439
  %v751 = vpop.f32.mrf.mxu0
  %v752 = vadd.f32 %v116, %v751
  %v753 = vpop.f32.mrf.mxu0
  %v754 = vadd.f32 %v120, %v753
  %v755 = vpop.f32.mrf.mxu0
  %v756 = vadd.f32 %v116, %v755
  %v757 = vpop.f32.mrf.mxu0
  %v758 = vadd.f32 %v120, %v757
  %759 = vmatprep.mubr.bf16.mxu0 0
  %760 = vmatmul.mubr.bf16.gmra.mxu0 %v442
  %v761 = vpop.f32.mrf.mxu0
  %v762 = vadd.f32 %v116, %v761
  %v763 = vpop.f32.mrf.mxu0
  %v764 = vadd.f32 %v120, %v763
  %v765 = vpop.f32.mrf.mxu0
  %v766 = vadd.f32 %v116, %v765
  %v767 = vpop.f32.mrf.mxu0
  %v768 = vadd.f32 %v120, %v767
  %769 = vmatprep.mubr.bf16.mxu0 0
  %770 = vmatmul.mubr.bf16.gmra.mxu0 %v445
  %v771 = vpop.f32.mrf.mxu0
  %v772 = vadd.f32 %v116, %v771
  %v773 = vpop.f32.mrf.mxu0
  %v774 = vadd.f32 %v120, %v773
  %v775 = vpop.f32.mrf.mxu0
  %v776 = vadd.f32 %v116, %v775
  %v777 = vpop.f32.mrf.mxu0
  %v778 = vadd.f32 %v120, %v777
  %779 = vmatprep.mubr.bf16.mxu0 0
  %780 = vmatmul.mubr.bf16.gmra.mxu0 %v448
  %v781 = vpop.f32.mrf.mxu0
  %v782 = vadd.f32 %v116, %v781
  %v783 = vpop.f32.mrf.mxu0
  %v784 = vadd.f32 %v120, %v783
  %v785 = vpop.f32.mrf.mxu0
  %v786 = vadd.f32 %v116, %v785
  %v787 = vpop.f32.mrf.mxu0
  %v788 = vadd.f32 %v120, %v787
  %789 = vmatprep.mubr.bf16.mxu0 0
  %790 = vmatmul.mubr.bf16.gmra.mxu0 %v451
  %v791 = vpop.f32.mrf.mxu0
  %v792 = vadd.f32 %v116, %v791
  %v793 = vpop.f32.mrf.mxu0
  %v794 = vadd.f32 %v120, %v793
  %v795 = vpop.f32.mrf.mxu0
  %v796 = vadd.f32 %v116, %v795
  %v797 = vpop.f32.mrf.mxu0
  %v798 = vadd.f32 %v120, %v797
  %799 = vmatprep.mubr.bf16.mxu0 0
  %800 = vmatmul.mubr.bf16.gmra.mxu0 %v454
  %v801 = vpop.f32.mrf.mxu0
  %v802 = vadd.f32 %v116, %v801
  %v803 = vpop.f32.mrf.mxu0
  %v804 = vadd.f32 %v120, %v803
  %v805 = vpop.f32.mrf.mxu0
  %v806 = vadd.f32 %v116, %v805
  %v807 = vpop.f32.mrf.mxu0
  %v808 = vadd.f32 %v120, %v807
  %809 = vmatprep.mubr.bf16.mxu0 0
  %810 = vmatmul.mubr.bf16.gmra.mxu0 %v457
  %v811 = vpop.f32.mrf.mxu0
  %v812 = vadd.f32 %v116, %v811
  %v813 = vpop.f32.mrf.mxu0
  %v814 = vadd.f32 %v120, %v813
  %v815 = vpop.f32.mrf.mxu0
  %v816 = vadd.f32 %v116, %v815
  %v817 = vpop.f32.mrf.mxu0
  %v818 = vadd.f32 %v120, %v817
  %819 = vmatprep.mubr.bf16.mxu0 0
  %820 = vmatmul.mubr.bf16.gmra.mxu0 %v460
  %v821 = vpop.f32.mrf.mxu0
  %v822 = vadd.f32 %v116, %v821
  %v823 = vpop.f32.mrf.mxu0
  %v824 = vadd.f32 %v120, %v823
  %v825 = vpop.f32.mrf.mxu0
  %v826 = vadd.f32 %v116, %v825
  %v827 = vpop.f32.mrf.mxu0
  %v828 = vadd.f32 %v120, %v827
  %829 = vdwg.mxu0
  %830 = vmatprep.subr.bf16.mxu0 0
  %831 = vmatpush1.bf16.msra.mxu0 0
  %832 = vmatprep.subr.bf16.mxu0 0
  %833 = vmatpush1.bf16.msra.mxu0 0
  %834 = vmatprep.subr.bf16.mxu0 %v479
  %835 = vmatpush1.bf16.msra.mxu0 %v476
  %836 = vmatprep.subr.bf16.mxu0 %v375
  %837 = vmatpush1.bf16.msra.mxu0 %v374
  %838 = vmatprep.subr.bf16.mxu0 %v368
  %839 = vmatpush1.bf16.msra.mxu0 %v367
  %840 = vmatprep.subr.bf16.mxu0 %v361
  %841 = vmatpush1.bf16.msra.mxu0 %v360
  %842 = vmatprep.subr.bf16.mxu0 %v354
  %843 = vmatpush1.bf16.msra.mxu0 %v353
  %844 = vmatprep.subr.bf16.mxu0 %v347
  %845 = vmatpush1.bf16.msra.mxu0 %v346
  %846 = vmatprep.subr.bf16.mxu0 0
  %847 = vmatpush2.bf16.msra.mxu0 0
  %848 = vmatprep.subr.bf16.mxu0 0
  %849 = vmatpush2.bf16.msra.mxu0 0
  %850 = vmatprep.subr.bf16.mxu0 0
  %851 = vmatpush2.bf16.msra.mxu0 0
  %852 = vmatprep.subr.bf16.mxu0 0
  %853 = vmatpush2.bf16.msra.mxu0 0
  %854 = vmatprep.subr.bf16.mxu0 0
  %855 = vmatpush2.bf16.msra.mxu0 0
  %856 = vmatprep.subr.bf16.mxu0 0
  %857 = vmatpush2.bf16.msra.mxu0 0
  %858 = vmatprep.subr.bf16.mxu0 0
  %859 = vmatpush2.bf16.msra.mxu0 0
  %860 = vmatprep.subr.bf16.mxu0 0
  %861 = vmatpush2.bf16.msra.mxu0 0
  %862 = vmatprep.mubr.bf16.mxu0 0
  %863 = vmatmul.mubr.bf16.gmra.mxu0 %v421
  %v864 = vpop.f32.mrf.mxu0
  %v865 = vadd.f32 %v124, %v864
  %v866 = vpop.f32.mrf.mxu0
  %v867 = vadd.f32 %v128, %v866
  %v868 = vpop.f32.mrf.mxu0
  %v869 = vadd.f32 %v124, %v868
  %v870 = vpop.f32.mrf.mxu0
  %v871 = vadd.f32 %v128, %v870
  %872 = vmatprep.mubr.bf16.mxu0 0
  %873 = vmatmul.mubr.bf16.gmra.mxu0 %v424
  %v874 = vpop.f32.mrf.mxu0
  %v875 = vadd.f32 %v124, %v874
  %v876 = vpop.f32.mrf.mxu0
  %v877 = vadd.f32 %v128, %v876
  %v878 = vpop.f32.mrf.mxu0
  %v879 = vadd.f32 %v124, %v878
  %v880 = vpop.f32.mrf.mxu0
  %v881 = vadd.f32 %v128, %v880
  %882 = vmatprep.mubr.bf16.mxu0 0
  %883 = vmatmul.mubr.bf16.gmra.mxu0 %v427
  %v884 = vpop.f32.mrf.mxu0
  %v885 = vadd.f32 %v124, %v884
  %v886 = vpop.f32.mrf.mxu0
  %v887 = vadd.f32 %v128, %v886
  %v888 = vpop.f32.mrf.mxu0
  %v889 = vadd.f32 %v124, %v888
  %v890 = vpop.f32.mrf.mxu0
  %v891 = vadd.f32 %v128, %v890
  %892 = vmatprep.mubr.bf16.mxu0 0
  %893 = vmatmul.mubr.bf16.gmra.mxu0 %v430
  %v894 = vpop.f32.mrf.mxu0
  %v895 = vadd.f32 %v124, %v894
  %v896 = vpop.f32.mrf.mxu0
  %v897 = vadd.f32 %v128, %v896
  %v898 = vpop.f32.mrf.mxu0
  %v899 = vadd.f32 %v124, %v898
  %v900 = vpop.f32.mrf.mxu0
  %v901 = vadd.f32 %v128, %v900
  %902 = vmatprep.mubr.bf16.mxu0 0
  %903 = vmatmul.mubr.bf16.gmra.mxu0 %v433
  %v904 = vpop.f32.mrf.mxu0
  %v905 = vadd.f32 %v124, %v904
  %v906 = vpop.f32.mrf.mxu0
  %v907 = vadd.f32 %v128, %v906
  %v908 = vpop.f32.mrf.mxu0
  %v909 = vadd.f32 %v124, %v908
  %v910 = vpop.f32.mrf.mxu0
  %v911 = vadd.f32 %v128, %v910
  %912 = vmatprep.mubr.bf16.mxu0 0
  %913 = vmatmul.mubr.bf16.gmra.mxu0 %v436
  %v914 = vpop.f32.mrf.mxu0
  %v915 = vadd.f32 %v124, %v914
  %v916 = vpop.f32.mrf.mxu0
  %v917 = vadd.f32 %v128, %v916
  %v918 = vpop.f32.mrf.mxu0
  %v919 = vadd.f32 %v124, %v918
  %v920 = vpop.f32.mrf.mxu0
  %v921 = vadd.f32 %v128, %v920
  %922 = vmatprep.mubr.bf16.mxu0 0
  %923 = vmatmul.mubr.bf16.gmra.mxu0 %v439
  %v924 = vpop.f32.mrf.mxu0
  %v925 = vadd.f32 %v124, %v924
  %v926 = vpop.f32.mrf.mxu0
  %v927 = vadd.f32 %v128, %v926
  %v928 = vpop.f32.mrf.mxu0
  %v929 = vadd.f32 %v124, %v928
  %v930 = vpop.f32.mrf.mxu0
  %v931 = vadd.f32 %v128, %v930
  %932 = vmatprep.mubr.bf16.mxu0 0
  %933 = vmatmul.mubr.bf16.gmra.mxu0 %v442
  %v934 = vpop.f32.mrf.mxu0
  %v935 = vadd.f32 %v124, %v934
  %v936 = vpop.f32.mrf.mxu0
  %v937 = vadd.f32 %v128, %v936
  %v938 = vpop.f32.mrf.mxu0
  %v939 = vadd.f32 %v124, %v938
  %v940 = vpop.f32.mrf.mxu0
  %v941 = vadd.f32 %v128, %v940
  %942 = vmatprep.mubr.bf16.mxu0 0
  %943 = vmatmul.mubr.bf16.gmra.mxu0 %v445
  %v944 = vpop.f32.mrf.mxu0
  %v945 = vadd.f32 %v124, %v944
  %v946 = vpop.f32.mrf.mxu0
  %v947 = vadd.f32 %v128, %v946
  %v948 = vpop.f32.mrf.mxu0
  %v949 = vadd.f32 %v124, %v948
  %v950 = vpop.f32.mrf.mxu0
  %v951 = vadd.f32 %v128, %v950
  %952 = vmatprep.mubr.bf16.mxu0 0
  %953 = vmatmul.mubr.bf16.gmra.mxu0 %v448
  %v954 = vpop.f32.mrf.mxu0
  %v955 = vadd.f32 %v124, %v954
  %v956 = vpop.f32.mrf.mxu0
  %v957 = vadd.f32 %v128, %v956
  %v958 = vpop.f32.mrf.mxu0
  %v959 = vadd.f32 %v124, %v958
  %v960 = vpop.f32.mrf.mxu0
  %v961 = vadd.f32 %v128, %v960
  %962 = vmatprep.mubr.bf16.mxu0 0
  %963 = vmatmul.mubr.bf16.gmra.mxu0 %v451
  %v964 = vpop.f32.mrf.mxu0
  %v965 = vadd.f32 %v124, %v964
  %v966 = vpop.f32.mrf.mxu0
  %v967 = vadd.f32 %v128, %v966
  %v968 = vpop.f32.mrf.mxu0
  %v969 = vadd.f32 %v124, %v968
  %v970 = vpop.f32.mrf.mxu0
  %v971 = vadd.f32 %v128, %v970
  %972 = vmatprep.mubr.bf16.mxu0 0
  %973 = vmatmul.mubr.bf16.gmra.mxu0 %v454
  %v974 = vpop.f32.mrf.mxu0
  %v975 = vadd.f32 %v124, %v974
  %v976 = vpop.f32.mrf.mxu0
  %v977 = vadd.f32 %v128, %v976
  %v978 = vpop.f32.mrf.mxu0
  %v979 = vadd.f32 %v124, %v978
  %v980 = vpop.f32.mrf.mxu0
  %v981 = vadd.f32 %v128, %v980
  %982 = vmatprep.mubr.bf16.mxu0 0
  %983 = vmatmul.mubr.bf16.gmra.mxu0 %v457
  %v984 = vpop.f32.mrf.mxu0
  %v985 = vadd.f32 %v124, %v984
  %v986 = vpop.f32.mrf.mxu0
  %v987 = vadd.f32 %v128, %v986
  %v988 = vpop.f32.mrf.mxu0
  %v989 = vadd.f32 %v124, %v988
  %v990 = vpop.f32.mrf.mxu0
  %v991 = vadd.f32 %v128, %v990
  %992 = vmatprep.mubr.bf16.mxu0 0
  %993 = vmatmul.mubr.bf16.gmra.mxu0 %v460
  %v994 = vpop.f32.mrf.mxu0
  %v995 = vadd.f32 %v124, %v994
  %v996 = vpop.f32.mrf.mxu0
  %v997 = vadd.f32 %v128, %v996
  %v998 = vpop.f32.mrf.mxu0
  %v999 = vadd.f32 %v124, %v998
  %v1000 = vpop.f32.mrf.mxu0
  %v1001 = vadd.f32 %v128, %v1000
  %1002 = vdwg.mxu0
  %1003 = vmatprep.subr.bf16.mxu0 0
  %1004 = vmatpush1.bf16.msra.mxu0 0
  %1005 = vmatprep.subr.bf16.mxu0 0
  %1006 = vmatpush1.bf16.msra.mxu0 0
  %1007 = vmatprep.subr.bf16.mxu0 0
  %1008 = vmatpush1.bf16.msra.mxu0 %v482
  %1009 = vmatprep.subr.bf16.mxu0 0
  %1010 = vmatpush1.bf16.msra.mxu0 %v376
  %1011 = vmatprep.subr.bf16.mxu0 0
  %1012 = vmatpush1.bf16.msra.mxu0 %v369
  %1013 = vmatprep.subr.bf16.mxu0 0
  %1014 = vmatpush1.bf16.msra.mxu0 %v362
  %1015 = vmatprep.subr.bf16.mxu0 0
  %1016 = vmatpush1.bf16.msra.mxu0 %v355
  %1017 = vmatprep.subr.bf16.mxu0 0
  %1018 = vmatpush1.bf16.msra.mxu0 %v348
  %1019 = vmatprep.subr.bf16.mxu0 0
  %1020 = vmatpush2.bf16.msra.mxu0 0
  %1021 = vmatprep.subr.bf16.mxu0 0
  %1022 = vmatpush2.bf16.msra.mxu0 0
  %1023 = vmatprep.subr.bf16.mxu0 0
  %1024 = vmatpush2.bf16.msra.mxu0 0
  %1025 = vmatprep.subr.bf16.mxu0 0
  %1026 = vmatpush2.bf16.msra.mxu0 0
  %1027 = vmatprep.subr.bf16.mxu0 0
  %1028 = vmatpush2.bf16.msra.mxu0 0
  %1029 = vmatprep.subr.bf16.mxu0 0
  %1030 = vmatpush2.bf16.msra.mxu0 0
  %1031 = vmatprep.subr.bf16.mxu0 0
  %1032 = vmatpush2.bf16.msra.mxu0 0
  %1033 = vmatprep.subr.bf16.mxu0 0
  %1034 = vmatpush2.bf16.msra.mxu0 0
  %1035 = vmatprep.mubr.bf16.mxu0 0
  %1036 = vmatmul.mubr.bf16.gmra.mxu0 %v421
  %v1037 = vpop.f32.mrf.mxu0
  %v1038 = vadd.f32 %v132, %v1037
  %v1039 = vpop.f32.mrf.mxu0
  %v1040 = vpop.f32.mrf.mxu0
  %v1041 = vadd.f32 %v132, %v1040
  %v1042 = vpop.f32.mrf.mxu0
  %1043 = vmatprep.mubr.bf16.mxu0 0
  %1044 = vmatmul.mubr.bf16.gmra.mxu0 %v424
  %v1045 = vpop.f32.mrf.mxu0
  %v1046 = vadd.f32 %v132, %v1045
  %v1047 = vpop.f32.mrf.mxu0
  %v1048 = vpop.f32.mrf.mxu0
  %v1049 = vadd.f32 %v132, %v1048
  %v1050 = vpop.f32.mrf.mxu0
  %1051 = vmatprep.mubr.bf16.mxu0 0
  %1052 = vmatmul.mubr.bf16.gmra.mxu0 %v427
  %v1053 = vpop.f32.mrf.mxu0
  %v1054 = vadd.f32 %v132, %v1053
  %v1055 = vpop.f32.mrf.mxu0
  %v1056 = vpop.f32.mrf.mxu0
  %v1057 = vadd.f32 %v132, %v1056
  %v1058 = vpop.f32.mrf.mxu0
  %1059 = vmatprep.mubr.bf16.mxu0 0
  %1060 = vmatmul.mubr.bf16.gmra.mxu0 %v430
  %v1061 = vpop.f32.mrf.mxu0
  %v1062 = vadd.f32 %v132, %v1061
  %v1063 = vpop.f32.mrf.mxu0
  %v1064 = vpop.f32.mrf.mxu0
  %v1065 = vadd.f32 %v132, %v1064
  %v1066 = vpop.f32.mrf.mxu0
  %1067 = vmatprep.mubr.bf16.mxu0 0
  %1068 = vmatmul.mubr.bf16.gmra.mxu0 %v433
  %v1069 = vpop.f32.mrf.mxu0
  %v1070 = vadd.f32 %v132, %v1069
  %v1071 = vpop.f32.mrf.mxu0
  %v1072 = vpop.f32.mrf.mxu0
  %v1073 = vadd.f32 %v132, %v1072
  %v1074 = vpop.f32.mrf.mxu0
  %1075 = vmatprep.mubr.bf16.mxu0 0
  %1076 = vmatmul.mubr.bf16.gmra.mxu0 %v436
  %v1077 = vpop.f32.mrf.mxu0
  %v1078 = vadd.f32 %v132, %v1077
  %v1079 = vpop.f32.mrf.mxu0
  %v1080 = vpop.f32.mrf.mxu0
  %v1081 = vadd.f32 %v132, %v1080
  %v1082 = vpop.f32.mrf.mxu0
  %1083 = vmatprep.mubr.bf16.mxu0 0
  %1084 = vmatmul.mubr.bf16.gmra.mxu0 %v439
  %v1085 = vpop.f32.mrf.mxu0
  %v1086 = vadd.f32 %v132, %v1085
  %v1087 = vpop.f32.mrf.mxu0
  %v1088 = vpop.f32.mrf.mxu0
  %v1089 = vadd.f32 %v132, %v1088
  %v1090 = vpop.f32.mrf.mxu0
  %1091 = vmatprep.mubr.bf16.mxu0 0
  %1092 = vmatmul.mubr.bf16.gmra.mxu0 %v442
  %v1093 = vpop.f32.mrf.mxu0
  %v1094 = vadd.f32 %v132, %v1093
  %v1095 = vpop.f32.mrf.mxu0
  %v1096 = vpop.f32.mrf.mxu0
  %v1097 = vadd.f32 %v132, %v1096
  %v1098 = vpop.f32.mrf.mxu0
  %1099 = vmatprep.mubr.bf16.mxu0 0
  %1100 = vmatmul.mubr.bf16.gmra.mxu0 %v445
  %v1101 = vpop.f32.mrf.mxu0
  %v1102 = vadd.f32 %v132, %v1101
  %v1103 = vpop.f32.mrf.mxu0
  %v1104 = vpop.f32.mrf.mxu0
  %v1105 = vadd.f32 %v132, %v1104
  %v1106 = vpop.f32.mrf.mxu0
  %1107 = vmatprep.mubr.bf16.mxu0 0
  %1108 = vmatmul.mubr.bf16.gmra.mxu0 %v448
  %v1109 = vpop.f32.mrf.mxu0
  %v1110 = vadd.f32 %v132, %v1109
  %v1111 = vpop.f32.mrf.mxu0
  %v1112 = vpop.f32.mrf.mxu0
  %v1113 = vadd.f32 %v132, %v1112
  %v1114 = vpop.f32.mrf.mxu0
  %1115 = vmatprep.mubr.bf16.mxu0 0
  %1116 = vmatmul.mubr.bf16.gmra.mxu0 %v451
  %v1117 = vpop.f32.mrf.mxu0
  %v1118 = vadd.f32 %v132, %v1117
  %v1119 = vpop.f32.mrf.mxu0
  %v1120 = vpop.f32.mrf.mxu0
  %v1121 = vadd.f32 %v132, %v1120
  %v1122 = vpop.f32.mrf.mxu0
  %1123 = vmatprep.mubr.bf16.mxu0 0
  %1124 = vmatmul.mubr.bf16.gmra.mxu0 %v454
  %v1125 = vpop.f32.mrf.mxu0
  %v1126 = vadd.f32 %v132, %v1125
  %v1127 = vpop.f32.mrf.mxu0
  %v1128 = vpop.f32.mrf.mxu0
  %v1129 = vadd.f32 %v132, %v1128
  %v1130 = vpop.f32.mrf.mxu0
  %1131 = vmatprep.mubr.bf16.mxu0 0
  %1132 = vmatmul.mubr.bf16.gmra.mxu0 %v457
  %v1133 = vpop.f32.mrf.mxu0
  %v1134 = vadd.f32 %v132, %v1133
  %v1135 = vpop.f32.mrf.mxu0
  %v1136 = vpop.f32.mrf.mxu0
  %v1137 = vadd.f32 %v132, %v1136
  %v1138 = vpop.f32.mrf.mxu0
  %1139 = vmatprep.mubr.bf16.mxu0 0
  %1140 = vmatmul.mubr.bf16.gmra.mxu0 %v460
  %v1141 = vpop.f32.mrf.mxu0
  %v1142 = vadd.f32 %v132, %v1141
  %v1143 = vpop.f32.mrf.mxu0
  %v1144 = vpop.f32.mrf.mxu0
  %v1145 = vadd.f32 %v132, %v1144
  %v1146 = vpop.f32.mrf.mxu0
  %1147 = vdwg.mxu0
  %v1148 = vmax.f32 %v519, 0.0
  %v1149 = vmax.f32 %v521, 0.0
  %v1150 = vmax.f32 %v692, 0.0
  %v1151 = vmax.f32 %v694, 0.0
  %v1152 = vmax.f32 %v865, 0.0
  %v1153 = vmax.f32 %v867, 0.0
  %v1154 = vmax.f32 %v1038, 0.0
  %v1155 = vmax.f32 %v523, 0.0
  %v1156 = vmax.f32 %v525, 0.0
  %v1157 = vmax.f32 %v696, 0.0
  %v1158 = vmax.f32 %v698, 0.0
  %v1159 = vmax.f32 %v869, 0.0
  %v1160 = vmax.f32 %v871, 0.0
  %v1161 = vmax.f32 %v1041, 0.0
  %v1162 = vmax.f32 %v529, 0.0
  %v1163 = vmax.f32 %v531, 0.0
  %v1164 = vmax.f32 %v702, 0.0
  %v1165 = vmax.f32 %v704, 0.0
  %v1166 = vmax.f32 %v875, 0.0
  %v1167 = vmax.f32 %v877, 0.0
  %v1168 = vmax.f32 %v1046, 0.0
  %v1169 = vmax.f32 %v533, 0.0
  %v1170 = vmax.f32 %v535, 0.0
  %v1171 = vmax.f32 %v706, 0.0
  %v1172 = vmax.f32 %v708, 0.0
  %v1173 = vmax.f32 %v879, 0.0
  %v1174 = vmax.f32 %v881, 0.0
  %v1175 = vmax.f32 %v1049, 0.0
  %v1176 = vmax.f32 %v539, 0.0
  %v1177 = vmax.f32 %v541, 0.0
  %v1178 = vmax.f32 %v712, 0.0
  %v1179 = vmax.f32 %v714, 0.0
  %v1180 = vmax.f32 %v885, 0.0
  %v1181 = vmax.f32 %v887, 0.0
  %v1182 = vmax.f32 %v1054, 0.0
  %v1183 = vmax.f32 %v543, 0.0
  %v1184 = vmax.f32 %v545, 0.0
  %v1185 = vmax.f32 %v716, 0.0
  %v1186 = vmax.f32 %v718, 0.0
  %v1187 = vmax.f32 %v889, 0.0
  %v1188 = vmax.f32 %v891, 0.0
  %v1189 = vmax.f32 %v1057, 0.0
  %v1190 = vmax.f32 %v549, 0.0
  %v1191 = vmax.f32 %v551, 0.0
  %v1192 = vmax.f32 %v722, 0.0
  %v1193 = vmax.f32 %v724, 0.0
  %v1194 = vmax.f32 %v895, 0.0
  %v1195 = vmax.f32 %v897, 0.0
  %v1196 = vmax.f32 %v1062, 0.0
  %v1197 = vmax.f32 %v553, 0.0
  %v1198 = vmax.f32 %v555, 0.0
  %v1199 = vmax.f32 %v726, 0.0
  %v1200 = vmax.f32 %v728, 0.0
  %v1201 = vmax.f32 %v899, 0.0
  %v1202 = vmax.f32 %v901, 0.0
  %v1203 = vmax.f32 %v1065, 0.0
  %v1204 = vmax.f32 %v559, 0.0
  %v1205 = vmax.f32 %v561, 0.0
  %v1206 = vmax.f32 %v732, 0.0
  %v1207 = vmax.f32 %v734, 0.0
  %v1208 = vmax.f32 %v905, 0.0
  %v1209 = vmax.f32 %v907, 0.0
  %v1210 = vmax.f32 %v1070, 0.0
  %v1211 = vmax.f32 %v563, 0.0
  %v1212 = vmax.f32 %v565, 0.0
  %v1213 = vmax.f32 %v736, 0.0
  %v1214 = vmax.f32 %v738, 0.0
  %v1215 = vmax.f32 %v909, 0.0
  %v1216 = vmax.f32 %v911, 0.0
  %v1217 = vmax.f32 %v1073, 0.0
  %v1218 = vmax.f32 %v569, 0.0
  %v1219 = vmax.f32 %v571, 0.0
  %v1220 = vmax.f32 %v742, 0.0
  %v1221 = vmax.f32 %v744, 0.0
  %v1222 = vmax.f32 %v915, 0.0
  %v1223 = vmax.f32 %v917, 0.0
  %v1224 = vmax.f32 %v1078, 0.0
  %v1225 = vmax.f32 %v573, 0.0
  %v1226 = vmax.f32 %v575, 0.0
  %v1227 = vmax.f32 %v746, 0.0
  %v1228 = vmax.f32 %v748, 0.0
  %v1229 = vmax.f32 %v919, 0.0
  %v1230 = vmax.f32 %v921, 0.0
  %v1231 = vmax.f32 %v1081, 0.0
  %v1232 = vmax.f32 %v579, 0.0
  %v1233 = vmax.f32 %v581, 0.0
  %v1234 = vmax.f32 %v752, 0.0
  %v1235 = vmax.f32 %v754, 0.0
  %v1236 = vmax.f32 %v925, 0.0
  %v1237 = vmax.f32 %v927, 0.0
  %v1238 = vmax.f32 %v1086, 0.0
  %v1239 = vmax.f32 %v583, 0.0
  %v1240 = vmax.f32 %v585, 0.0
  %v1241 = vmax.f32 %v756, 0.0
  %v1242 = vmax.f32 %v758, 0.0
  %v1243 = vmax.f32 %v929, 0.0
  %v1244 = vmax.f32 %v931, 0.0
  %v1245 = vmax.f32 %v1089, 0.0
  %v1246 = vmax.f32 %v589, 0.0
  %v1247 = vmax.f32 %v591, 0.0
  %v1248 = vmax.f32 %v762, 0.0
  %v1249 = vmax.f32 %v764, 0.0
  %v1250 = vmax.f32 %v935, 0.0
  %v1251 = vmax.f32 %v937, 0.0
  %v1252 = vmax.f32 %v1094, 0.0
  %v1253 = vmax.f32 %v593, 0.0
  %v1254 = vmax.f32 %v595, 0.0
  %v1255 = vmax.f32 %v766, 0.0
  %v1256 = vmax.f32 %v768, 0.0
  %v1257 = vmax.f32 %v939, 0.0
  %v1258 = vmax.f32 %v941, 0.0
  %v1259 = vmax.f32 %v1097, 0.0
  %v1260 = vmax.f32 %v599, 0.0
  %v1261 = vmax.f32 %v601, 0.0
  %v1262 = vmax.f32 %v772, 0.0
  %v1263 = vmax.f32 %v774, 0.0
  %v1264 = vmax.f32 %v945, 0.0
  %v1265 = vmax.f32 %v947, 0.0
  %v1266 = vmax.f32 %v1102, 0.0
  %v1267 = vmax.f32 %v603, 0.0
  %v1268 = vmax.f32 %v605, 0.0
  %v1269 = vmax.f32 %v776, 0.0
  %v1270 = vmax.f32 %v778, 0.0
  %v1271 = vmax.f32 %v949, 0.0
  %v1272 = vmax.f32 %v951, 0.0
  %v1273 = vmax.f32 %v1105, 0.0
  %v1274 = vmax.f32 %v609, 0.0
  %v1275 = vmax.f32 %v611, 0.0
  %v1276 = vmax.f32 %v782, 0.0
  %v1277 = vmax.f32 %v784, 0.0
  %v1278 = vmax.f32 %v955, 0.0
  %v1279 = vmax.f32 %v957, 0.0
  %v1280 = vmax.f32 %v1110, 0.0
  %v1281 = vmax.f32 %v613, 0.0
  %v1282 = vmax.f32 %v615, 0.0
  %v1283 = vmax.f32 %v786, 0.0
  %v1284 = vmax.f32 %v788, 0.0
  %v1285 = vmax.f32 %v959, 0.0
  %v1286 = vmax.f32 %v961, 0.0
  %v1287 = vmax.f32 %v1113, 0.0
  %v1288 = vmax.f32 %v619, 0.0
  %v1289 = vmax.f32 %v621, 0.0
  %v1290 = vmax.f32 %v792, 0.0
  %v1291 = vmax.f32 %v794, 0.0
  %v1292 = vmax.f32 %v965, 0.0
  %v1293 = vmax.f32 %v967, 0.0
  %v1294 = vmax.f32 %v1118, 0.0
  %v1295 = vmax.f32 %v623, 0.0
  %v1296 = vmax.f32 %v625, 0.0
  %v1297 = vmax.f32 %v796, 0.0
  %v1298 = vmax.f32 %v798, 0.0
  %v1299 = vmax.f32 %v969, 0.0
  %v1300 = vmax.f32 %v971, 0.0
  %v1301 = vmax.f32 %v1121, 0.0
  %v1302 = vmax.f32 %v629, 0.0
  %v1303 = vmax.f32 %v631, 0.0
  %v1304 = vmax.f32 %v802, 0.0
  %v1305 = vmax.f32 %v804, 0.0
  %v1306 = vmax.f32 %v975, 0.0
  %v1307 = vmax.f32 %v977, 0.0
  %v1308 = vmax.f32 %v1126, 0.0
  %v1309 = vmax.f32 %v633, 0.0
  %v1310 = vmax.f32 %v635, 0.0
  %v1311 = vmax.f32 %v806, 0.0
  %v1312 = vmax.f32 %v808, 0.0
  %v1313 = vmax.f32 %v979, 0.0
  %v1314 = vmax.f32 %v981, 0.0
  %v1315 = vmax.f32 %v1129, 0.0
  %v1316 = vmax.f32 %v639, 0.0
  %v1317 = vmax.f32 %v641, 0.0
  %v1318 = vmax.f32 %v812, 0.0
  %v1319 = vmax.f32 %v814, 0.0
  %v1320 = vmax.f32 %v985, 0.0
  %v1321 = vmax.f32 %v987, 0.0
  %v1322 = vmax.f32 %v1134, 0.0
  %v1323 = vmax.f32 %v643, 0.0
  %v1324 = vmax.f32 %v645, 0.0
  %v1325 = vmax.f32 %v816, 0.0
  %v1326 = vmax.f32 %v818, 0.0
  %v1327 = vmax.f32 %v989, 0.0
  %v1328 = vmax.f32 %v991, 0.0
  %v1329 = vmax.f32 %v1137, 0.0
  %v1330 = vmax.f32 %v649, 0.0
  %v1331 = vmax.f32 %v651, 0.0
  %v1332 = vmax.f32 %v822, 0.0
  %v1333 = vmax.f32 %v824, 0.0
  %v1334 = vmax.f32 %v995, 0.0
  %v1335 = vmax.f32 %v997, 0.0
  %v1336 = vmax.f32 %v1142, 0.0
  %v1337 = vmax.f32 %v653, 0.0
  %v1338 = vmax.f32 %v655, 0.0
  %v1339 = vmax.f32 %v826, 0.0
  %v1340 = vmax.f32 %v828, 0.0
  %v1341 = vmax.f32 %v999, 0.0
  %v1342 = vmax.f32 %v1001, 0.0
  %v1343 = vmax.f32 %v1145, 0.0
  %1428 = vrot.lane.b32.xlu0 %v1149, 32
  %v1429 = vpop.permute.xlu0 %1428
  %1430 = vrot.lane.b32.xlu0 %v1150, 32
  %v1431 = vpop.permute.xlu0 %1430
  %1432 = vrot.lane.b32.xlu0 %v1151, 32
  %v1433 = vpop.permute.xlu0 %1432
  %1434 = vrot.lane.b32.xlu0 %v1156, 32
  %v1435 = vpop.permute.xlu0 %1434
  %1436 = vrot.lane.b32.xlu0 %v1157, 32
  %v1437 = vpop.permute.xlu0 %1436
  %1438 = vrot.lane.b32.xlu0 %v1158, 32
  %v1439 = vpop.permute.xlu0 %1438
  %1440 = vrot.lane.b32.xlu0 %v1163, 32
  %v1441 = vpop.permute.xlu0 %1440
  %1442 = vrot.lane.b32.xlu0 %v1164, 32
  %v1443 = vpop.permute.xlu0 %1442
  %1444 = vrot.lane.b32.xlu0 %v1165, 32
  %v1445 = vpop.permute.xlu0 %1444
  %1446 = vrot.lane.b32.xlu0 %v1170, 32
  %v1447 = vpop.permute.xlu0 %1446
  %1448 = vrot.lane.b32.xlu0 %v1171, 32
  %v1449 = vpop.permute.xlu0 %1448
  %1450 = vrot.lane.b32.xlu0 %v1172, 32
  %v1451 = vpop.permute.xlu0 %1450
  %1452 = vrot.lane.b32.xlu0 %v1177, 32
  %v1453 = vpop.permute.xlu0 %1452
  %1454 = vrot.lane.b32.xlu0 %v1178, 32
  %v1455 = vpop.permute.xlu0 %1454
  %1456 = vrot.lane.b32.xlu0 %v1179, 32
  %v1457 = vpop.permute.xlu0 %1456
  %1458 = vrot.lane.b32.xlu0 %v1184, 32
  %v1459 = vpop.permute.xlu0 %1458
  %1460 = vrot.lane.b32.xlu0 %v1185, 32
  %v1461 = vpop.permute.xlu0 %1460
  %1462 = vrot.lane.b32.xlu0 %v1186, 32
  %v1463 = vpop.permute.xlu0 %1462
  %1464 = vrot.lane.b32.xlu0 %v1191, 32
  %v1465 = vpop.permute.xlu0 %1464
  %1466 = vrot.lane.b32.xlu0 %v1192, 32
  %v1467 = vpop.permute.xlu0 %1466
  %1468 = vrot.lane.b32.xlu0 %v1193, 32
  %v1469 = vpop.permute.xlu0 %1468
  %1470 = vrot.lane.b32.xlu0 %v1198, 32
  %v1471 = vpop.permute.xlu0 %1470
  %1472 = vrot.lane.b32.xlu0 %v1199, 32
  %v1473 = vpop.permute.xlu0 %1472
  %1474 = vrot.lane.b32.xlu0 %v1200, 32
  %v1475 = vpop.permute.xlu0 %1474
  %1476 = vrot.lane.b32.xlu0 %v1205, 32
  %v1477 = vpop.permute.xlu0 %1476
  %1478 = vrot.lane.b32.xlu0 %v1206, 32
  %v1479 = vpop.permute.xlu0 %1478
  %1480 = vrot.lane.b32.xlu0 %v1207, 32
  %v1481 = vpop.permute.xlu0 %1480
  %1482 = vrot.lane.b32.xlu0 %v1212, 32
  %v1483 = vpop.permute.xlu0 %1482
  %1484 = vrot.lane.b32.xlu0 %v1213, 32
  %v1485 = vpop.permute.xlu0 %1484
  %1486 = vrot.lane.b32.xlu0 %v1214, 32
  %v1487 = vpop.permute.xlu0 %1486
  %1488 = vrot.lane.b32.xlu0 %v1219, 32
  %v1489 = vpop.permute.xlu0 %1488
  %1490 = vrot.lane.b32.xlu0 %v1220, 32
  %v1491 = vpop.permute.xlu0 %1490
  %1492 = vrot.lane.b32.xlu0 %v1221, 32
  %v1493 = vpop.permute.xlu0 %1492
  %1494 = vrot.lane.b32.xlu0 %v1226, 32
  %v1495 = vpop.permute.xlu0 %1494
  %1496 = vrot.lane.b32.xlu0 %v1227, 32
  %v1497 = vpop.permute.xlu0 %1496
  %1498 = vrot.lane.b32.xlu0 %v1228, 32
  %v1499 = vpop.permute.xlu0 %1498
  %1500 = vrot.lane.b32.xlu0 %v1233, 32
  %v1501 = vpop.permute.xlu0 %1500
  %1502 = vrot.lane.b32.xlu0 %v1234, 32
  %v1503 = vpop.permute.xlu0 %1502
  %1504 = vrot.lane.b32.xlu0 %v1235, 32
  %v1505 = vpop.permute.xlu0 %1504
  %1506 = vrot.lane.b32.xlu0 %v1240, 32
  %v1507 = vpop.permute.xlu0 %1506
  %1508 = vrot.lane.b32.xlu0 %v1241, 32
  %v1509 = vpop.permute.xlu0 %1508
  %1510 = vrot.lane.b32.xlu0 %v1242, 32
  %v1511 = vpop.permute.xlu0 %1510
  %1512 = vrot.lane.b32.xlu0 %v1247, 32
  %v1513 = vpop.permute.xlu0 %1512
  %1514 = vrot.lane.b32.xlu0 %v1248, 32
  %v1515 = vpop.permute.xlu0 %1514
  %1516 = vrot.lane.b32.xlu0 %v1249, 32
  %v1517 = vpop.permute.xlu0 %1516
  %1518 = vrot.lane.b32.xlu0 %v1254, 32
  %v1519 = vpop.permute.xlu0 %1518
  %1520 = vrot.lane.b32.xlu0 %v1255, 32
  %v1521 = vpop.permute.xlu0 %1520
  %1522 = vrot.lane.b32.xlu0 %v1256, 32
  %v1523 = vpop.permute.xlu0 %1522
  %1524 = vrot.lane.b32.xlu0 %v1261, 32
  %v1525 = vpop.permute.xlu0 %1524
  %1526 = vrot.lane.b32.xlu0 %v1262, 32
  %v1527 = vpop.permute.xlu0 %1526
  %1528 = vrot.lane.b32.xlu0 %v1263, 32
  %v1529 = vpop.permute.xlu0 %1528
  %1530 = vrot.lane.b32.xlu0 %v1268, 32
  %v1531 = vpop.permute.xlu0 %1530
  %1532 = vrot.lane.b32.xlu0 %v1269, 32
  %v1533 = vpop.permute.xlu0 %1532
  %1534 = vrot.lane.b32.xlu0 %v1270, 32
  %v1535 = vpop.permute.xlu0 %1534
  %1536 = vrot.lane.b32.xlu0 %v1275, 32
  %v1537 = vpop.permute.xlu0 %1536
  %1538 = vrot.lane.b32.xlu0 %v1276, 32
  %v1539 = vpop.permute.xlu0 %1538
  %1540 = vrot.lane.b32.xlu0 %v1277, 32
  %v1541 = vpop.permute.xlu0 %1540
  %1542 = vrot.lane.b32.xlu0 %v1282, 32
  %v1543 = vpop.permute.xlu0 %1542
  %1544 = vrot.lane.b32.xlu0 %v1283, 32
  %v1545 = vpop.permute.xlu0 %1544
  %1546 = vrot.lane.b32.xlu0 %v1284, 32
  %v1547 = vpop.permute.xlu0 %1546
  %1548 = vrot.lane.b32.xlu0 %v1289, 32
  %v1549 = vpop.permute.xlu0 %1548
  %1550 = vrot.lane.b32.xlu0 %v1290, 32
  %v1551 = vpop.permute.xlu0 %1550
  %1552 = vrot.lane.b32.xlu0 %v1291, 32
  %v1553 = vpop.permute.xlu0 %1552
  %1554 = vrot.lane.b32.xlu0 %v1296, 32
  %v1555 = vpop.permute.xlu0 %1554
  %1556 = vrot.lane.b32.xlu0 %v1297, 32
  %v1557 = vpop.permute.xlu0 %1556
  %1558 = vrot.lane.b32.xlu0 %v1298, 32
  %v1559 = vpop.permute.xlu0 %1558
  %1560 = vrot.lane.b32.xlu0 %v1303, 32
  %v1561 = vpop.permute.xlu0 %1560
  %1562 = vrot.lane.b32.xlu0 %v1304, 32
  %v1563 = vpop.permute.xlu0 %1562
  %1564 = vrot.lane.b32.xlu0 %v1305, 32
  %v1565 = vpop.permute.xlu0 %1564
  %1566 = vrot.lane.b32.xlu0 %v1310, 32
  %v1567 = vpop.permute.xlu0 %1566
  %1568 = vrot.lane.b32.xlu0 %v1311, 32
  %v1569 = vpop.permute.xlu0 %1568
  %1570 = vrot.lane.b32.xlu0 %v1312, 32
  %v1571 = vpop.permute.xlu0 %1570
  %1572 = vrot.lane.b32.xlu0 %v1317, 32
  %v1573 = vpop.permute.xlu0 %1572
  %1574 = vrot.lane.b32.xlu0 %v1318, 32
  %v1575 = vpop.permute.xlu0 %1574
  %1576 = vrot.lane.b32.xlu0 %v1319, 32
  %v1577 = vpop.permute.xlu0 %1576
  %1578 = vrot.lane.b32.xlu0 %v1324, 32
  %v1579 = vpop.permute.xlu0 %1578
  %1580 = vrot.lane.b32.xlu0 %v1325, 32
  %v1581 = vpop.permute.xlu0 %1580
  %1582 = vrot.lane.b32.xlu0 %v1326, 32
  %v1583 = vpop.permute.xlu0 %1582
  %1584 = vrot.lane.b32.xlu0 %v1331, 32
  %v1585 = vpop.permute.xlu0 %1584
  %1586 = vrot.lane.b32.xlu0 %v1332, 32
  %v1587 = vpop.permute.xlu0 %1586
  %1588 = vrot.lane.b32.xlu0 %v1333, 32
  %v1589 = vpop.permute.xlu0 %1588
  %1590 = vrot.lane.b32.xlu0 %v1338, 32
  %v1591 = vpop.permute.xlu0 %1590
  %1592 = vrot.lane.b32.xlu0 %v1339, 32
  %v1593 = vpop.permute.xlu0 %1592
  %1594 = vrot.lane.b32.xlu0 %v1340, 32
  %v1595 = vpop.permute.xlu0 %1594
  %vm1596 = vcmask 261120
  %v1597 = vsel %vm1596, %v1429, %v1431
  %v1598 = vsel %vm1596, %v1431, %v1433
  %v1599 = vsel %vm1596, %v1435, %v1437
  %v1600 = vsel %vm1596, %v1437, %v1439
  %v1601 = vsel %vm1596, %v1441, %v1443
  %v1602 = vsel %vm1596, %v1443, %v1445
  %v1603 = vsel %vm1596, %v1447, %v1449
  %v1604 = vsel %vm1596, %v1449, %v1451
  %v1605 = vsel %vm1596, %v1453, %v1455
  %v1606 = vsel %vm1596, %v1455, %v1457
  %v1607 = vsel %vm1596, %v1459, %v1461
  %v1608 = vsel %vm1596, %v1461, %v1463
  %v1609 = vsel %vm1596, %v1465, %v1467
  %v1610 = vsel %vm1596, %v1467, %v1469
  %v1611 = vsel %vm1596, %v1471, %v1473
  %v1612 = vsel %vm1596, %v1473, %v1475
  %v1613 = vsel %vm1596, %v1477, %v1479
  %v1614 = vsel %vm1596, %v1479, %v1481
  %v1615 = vsel %vm1596, %v1483, %v1485
  %v1616 = vsel %vm1596, %v1485, %v1487
  %v1617 = vsel %vm1596, %v1489, %v1491
  %v1618 = vsel %vm1596, %v1491, %v1493
  %v1619 = vsel %vm1596, %v1495, %v1497
  %v1620 = vsel %vm1596, %v1497, %v1499
  %v1621 = vsel %vm1596, %v1501, %v1503
  %v1622 = vsel %vm1596, %v1503, %v1505
  %v1623 = vsel %vm1596, %v1507, %v1509
  %v1624 = vsel %vm1596, %v1509, %v1511
  %v1625 = vsel %vm1596, %v1513, %v1515
  %v1626 = vsel %vm1596, %v1515, %v1517
  %v1627 = vsel %vm1596, %v1519, %v1521
  %v1628 = vsel %vm1596, %v1521, %v1523
  %v1629 = vsel %vm1596, %v1525, %v1527
  %v1630 = vsel %vm1596, %v1527, %v1529
  %v1631 = vsel %vm1596, %v1531, %v1533
  %v1632 = vsel %vm1596, %v1533, %v1535
  %v1633 = vsel %vm1596, %v1537, %v1539
  %v1634 = vsel %vm1596, %v1539, %v1541
  %v1635 = vsel %vm1596, %v1543, %v1545
  %v1636 = vsel %vm1596, %v1545, %v1547
  %v1637 = vsel %vm1596, %v1549, %v1551
  %v1638 = vsel %vm1596, %v1551, %v1553
  %v1639 = vsel %vm1596, %v1555, %v1557
  %v1640 = vsel %vm1596, %v1557, %v1559
  %v1641 = vsel %vm1596, %v1561, %v1563
  %v1642 = vsel %vm1596, %v1563, %v1565
  %v1643 = vsel %vm1596, %v1567, %v1569
  %v1644 = vsel %vm1596, %v1569, %v1571
  %v1645 = vsel %vm1596, %v1573, %v1575
  %v1646 = vsel %vm1596, %v1575, %v1577
  %v1647 = vsel %vm1596, %v1579, %v1581
  %v1648 = vsel %vm1596, %v1581, %v1583
  %v1649 = vsel %vm1596, %v1585, %v1587
  %v1650 = vsel %vm1596, %v1587, %v1589
  %v1651 = vsel %vm1596, %v1591, %v1593
  %v1652 = vsel %vm1596, %v1593, %v1595
  %v1709 = vmax.f32 %v1148, %v1597
  %v1710 = vmax.f32 %v1149, %v1598
  %v1711 = vmax.f32 %v1155, %v1599
  %v1712 = vmax.f32 %v1156, %v1600
  %v1713 = vmax.f32 %v1162, %v1601
  %v1714 = vmax.f32 %v1163, %v1602
  %v1715 = vmax.f32 %v1169, %v1603
  %v1716 = vmax.f32 %v1170, %v1604
  %v1717 = vmax.f32 %v1176, %v1605
  %v1718 = vmax.f32 %v1177, %v1606
  %v1719 = vmax.f32 %v1183, %v1607
  %v1720 = vmax.f32 %v1184, %v1608
  %v1721 = vmax.f32 %v1190, %v1609
  %v1722 = vmax.f32 %v1191, %v1610
  %v1723 = vmax.f32 %v1197, %v1611
  %v1724 = vmax.f32 %v1198, %v1612
  %v1725 = vmax.f32 %v1204, %v1613
  %v1726 = vmax.f32 %v1205, %v1614
  %v1727 = vmax.f32 %v1211, %v1615
  %v1728 = vmax.f32 %v1212, %v1616
  %v1729 = vmax.f32 %v1218, %v1617
  %v1730 = vmax.f32 %v1219, %v1618
  %v1731 = vmax.f32 %v1225, %v1619
  %v1732 = vmax.f32 %v1226, %v1620
  %v1733 = vmax.f32 %v1232, %v1621
  %v1734 = vmax.f32 %v1233, %v1622
  %v1735 = vmax.f32 %v1239, %v1623
  %v1736 = vmax.f32 %v1240, %v1624
  %v1737 = vmax.f32 %v1246, %v1625
  %v1738 = vmax.f32 %v1247, %v1626
  %v1739 = vmax.f32 %v1253, %v1627
  %v1740 = vmax.f32 %v1254, %v1628
  %v1741 = vmax.f32 %v1260, %v1629
  %v1742 = vmax.f32 %v1261, %v1630
  %v1743 = vmax.f32 %v1267, %v1631
  %v1744 = vmax.f32 %v1268, %v1632
  %v1745 = vmax.f32 %v1274, %v1633
  %v1746 = vmax.f32 %v1275, %v1634
  %v1747 = vmax.f32 %v1281, %v1635
  %v1748 = vmax.f32 %v1282, %v1636
  %v1749 = vmax.f32 %v1288, %v1637
  %v1750 = vmax.f32 %v1289, %v1638
  %v1751 = vmax.f32 %v1295, %v1639
  %v1752 = vmax.f32 %v1296, %v1640
  %v1753 = vmax.f32 %v1302, %v1641
  %v1754 = vmax.f32 %v1303, %v1642
  %v1755 = vmax.f32 %v1309, %v1643
  %v1756 = vmax.f32 %v1310, %v1644
  %v1757 = vmax.f32 %v1316, %v1645
  %v1758 = vmax.f32 %v1317, %v1646
  %v1759 = vmax.f32 %v1323, %v1647
  %v1760 = vmax.f32 %v1324, %v1648
  %v1761 = vmax.f32 %v1330, %v1649
  %v1762 = vmax.f32 %v1331, %v1650
  %v1763 = vmax.f32 %v1337, %v1651
  %v1764 = vmax.f32 %v1338, %v1652
  %1821 = vrot.lane.b32.xlu0 %v1153, 32
  %v1822 = vpop.permute.xlu0 %1821
  %1823 = vrot.lane.b32.xlu0 %v1154, 32
  %v1824 = vpop.permute.xlu0 %1823
  %1825 = vrot.lane.b32.xlu0 %v1160, 32
  %v1826 = vpop.permute.xlu0 %1825
  %1827 = vrot.lane.b32.xlu0 %v1161, 32
  %v1828 = vpop.permute.xlu0 %1827
  %1829 = vrot.lane.b32.xlu0 %v1167, 32
  %v1830 = vpop.permute.xlu0 %1829
  %1831 = vrot.lane.b32.xlu0 %v1168, 32
  %v1832 = vpop.permute.xlu0 %1831
  %1833 = vrot.lane.b32.xlu0 %v1174, 32
  %v1834 = vpop.permute.xlu0 %1833
  %1835 = vrot.lane.b32.xlu0 %v1175, 32
  %v1836 = vpop.permute.xlu0 %1835
  %1837 = vrot.lane.b32.xlu0 %v1181, 32
  %v1838 = vpop.permute.xlu0 %1837
  %1839 = vrot.lane.b32.xlu0 %v1182, 32
  %v1840 = vpop.permute.xlu0 %1839
  %1841 = vrot.lane.b32.xlu0 %v1188, 32
  %v1842 = vpop.permute.xlu0 %1841
  %1843 = vrot.lane.b32.xlu0 %v1189, 32
  %v1844 = vpop.permute.xlu0 %1843
  %1845 = vrot.lane.b32.xlu0 %v1195, 32
  %v1846 = vpop.permute.xlu0 %1845
  %1847 = vrot.lane.b32.xlu0 %v1196, 32
  %v1848 = vpop.permute.xlu0 %1847
  %1849 = vrot.lane.b32.xlu0 %v1202, 32
  %v1850 = vpop.permute.xlu0 %1849
  %1851 = vrot.lane.b32.xlu0 %v1203, 32
  %v1852 = vpop.permute.xlu0 %1851
  %1853 = vrot.lane.b32.xlu0 %v1209, 32
  %v1854 = vpop.permute.xlu0 %1853
  %1855 = vrot.lane.b32.xlu0 %v1210, 32
  %v1856 = vpop.permute.xlu0 %1855
  %1857 = vrot.lane.b32.xlu0 %v1216, 32
  %v1858 = vpop.permute.xlu0 %1857
  %1859 = vrot.lane.b32.xlu0 %v1217, 32
  %v1860 = vpop.permute.xlu0 %1859
  %1861 = vrot.lane.b32.xlu0 %v1223, 32
  %v1862 = vpop.permute.xlu0 %1861
  %1863 = vrot.lane.b32.xlu0 %v1224, 32
  %v1864 = vpop.permute.xlu0 %1863
  %1865 = vrot.lane.b32.xlu0 %v1230, 32
  %v1866 = vpop.permute.xlu0 %1865
  %1867 = vrot.lane.b32.xlu0 %v1231, 32
  %v1868 = vpop.permute.xlu0 %1867
  %1869 = vrot.lane.b32.xlu0 %v1237, 32
  %v1870 = vpop.permute.xlu0 %1869
  %1871 = vrot.lane.b32.xlu0 %v1238, 32
  %v1872 = vpop.permute.xlu0 %1871
  %1873 = vrot.lane.b32.xlu0 %v1244, 32
  %v1874 = vpop.permute.xlu0 %1873
  %1875 = vrot.lane.b32.xlu0 %v1245, 32
  %v1876 = vpop.permute.xlu0 %1875
  %1877 = vrot.lane.b32.xlu0 %v1251, 32
  %v1878 = vpop.permute.xlu0 %1877
  %1879 = vrot.lane.b32.xlu0 %v1252, 32
  %v1880 = vpop.permute.xlu0 %1879
  %1881 = vrot.lane.b32.xlu0 %v1258, 32
  %v1882 = vpop.permute.xlu0 %1881
  %1883 = vrot.lane.b32.xlu0 %v1259, 32
  %v1884 = vpop.permute.xlu0 %1883
  %1885 = vrot.lane.b32.xlu0 %v1265, 32
  %v1886 = vpop.permute.xlu0 %1885
  %1887 = vrot.lane.b32.xlu0 %v1266, 32
  %v1888 = vpop.permute.xlu0 %1887
  %1889 = vrot.lane.b32.xlu0 %v1272, 32
  %v1890 = vpop.permute.xlu0 %1889
  %1891 = vrot.lane.b32.xlu0 %v1273, 32
  %v1892 = vpop.permute.xlu0 %1891
  %1893 = vrot.lane.b32.xlu0 %v1279, 32
  %v1894 = vpop.permute.xlu0 %1893
  %1895 = vrot.lane.b32.xlu0 %v1280, 32
  %v1896 = vpop.permute.xlu0 %1895
  %1897 = vrot.lane.b32.xlu0 %v1286, 32
  %v1898 = vpop.permute.xlu0 %1897
  %1899 = vrot.lane.b32.xlu0 %v1287, 32
  %v1900 = vpop.permute.xlu0 %1899
  %1901 = vrot.lane.b32.xlu0 %v1293, 32
  %v1902 = vpop.permute.xlu0 %1901
  %1903 = vrot.lane.b32.xlu0 %v1294, 32
  %v1904 = vpop.permute.xlu0 %1903
  %1905 = vrot.lane.b32.xlu0 %v1300, 32
  %v1906 = vpop.permute.xlu0 %1905
  %1907 = vrot.lane.b32.xlu0 %v1301, 32
  %v1908 = vpop.permute.xlu0 %1907
  %1909 = vrot.lane.b32.xlu0 %v1307, 32
  %v1910 = vpop.permute.xlu0 %1909
  %1911 = vrot.lane.b32.xlu0 %v1308, 32
  %v1912 = vpop.permute.xlu0 %1911
  %1913 = vrot.lane.b32.xlu0 %v1314, 32
  %v1914 = vpop.permute.xlu0 %1913
  %1915 = vrot.lane.b32.xlu0 %v1315, 32
  %v1916 = vpop.permute.xlu0 %1915
  %1917 = vrot.lane.b32.xlu0 %v1321, 32
  %v1918 = vpop.permute.xlu0 %1917
  %1919 = vrot.lane.b32.xlu0 %v1322, 32
  %v1920 = vpop.permute.xlu0 %1919
  %1921 = vrot.lane.b32.xlu0 %v1328, 32
  %v1922 = vpop.permute.xlu0 %1921
  %1923 = vrot.lane.b32.xlu0 %v1329, 32
  %v1924 = vpop.permute.xlu0 %1923
  %1925 = vrot.lane.b32.xlu0 %v1335, 32
  %v1926 = vpop.permute.xlu0 %1925
  %1927 = vrot.lane.b32.xlu0 %v1336, 32
  %v1928 = vpop.permute.xlu0 %1927
  %1929 = vrot.lane.b32.xlu0 %v1342, 32
  %v1930 = vpop.permute.xlu0 %1929
  %1931 = vrot.lane.b32.xlu0 %v1343, 32
  %v1932 = vpop.permute.xlu0 %1931
  %v1933 = vsel %vm1596, %v1822, %v1824
  %v1934 = vsel %vm1596, %v1826, %v1828
  %v1935 = vsel %vm1596, %v1830, %v1832
  %v1936 = vsel %vm1596, %v1834, %v1836
  %v1937 = vsel %vm1596, %v1838, %v1840
  %v1938 = vsel %vm1596, %v1842, %v1844
  %v1939 = vsel %vm1596, %v1846, %v1848
  %v1940 = vsel %vm1596, %v1850, %v1852
  %v1941 = vsel %vm1596, %v1854, %v1856
  %v1942 = vsel %vm1596, %v1858, %v1860
  %v1943 = vsel %vm1596, %v1862, %v1864
  %v1944 = vsel %vm1596, %v1866, %v1868
  %v1945 = vsel %vm1596, %v1870, %v1872
  %v1946 = vsel %vm1596, %v1874, %v1876
  %v1947 = vsel %vm1596, %v1878, %v1880
  %v1948 = vsel %vm1596, %v1882, %v1884
  %v1949 = vsel %vm1596, %v1886, %v1888
  %v1950 = vsel %vm1596, %v1890, %v1892
  %v1951 = vsel %vm1596, %v1894, %v1896
  %v1952 = vsel %vm1596, %v1898, %v1900
  %v1953 = vsel %vm1596, %v1902, %v1904
  %v1954 = vsel %vm1596, %v1906, %v1908
  %v1955 = vsel %vm1596, %v1910, %v1912
  %v1956 = vsel %vm1596, %v1914, %v1916
  %v1957 = vsel %vm1596, %v1918, %v1920
  %v1958 = vsel %vm1596, %v1922, %v1924
  %v1959 = vsel %vm1596, %v1926, %v1928
  %v1960 = vsel %vm1596, %v1930, %v1932
  %v2045 = vmax.f32 %v1151, %v1822
  %v2046 = vmax.f32 %v1152, %v1933
  %v2047 = vmax.f32 %v1153, %v1824
  %v2048 = vmax.f32 %v1158, %v1826
  %v2049 = vmax.f32 %v1159, %v1934
  %v2050 = vmax.f32 %v1160, %v1828
  %v2051 = vmax.f32 %v1165, %v1830
  %v2052 = vmax.f32 %v1166, %v1935
  %v2053 = vmax.f32 %v1167, %v1832
  %v2054 = vmax.f32 %v1172, %v1834
  %v2055 = vmax.f32 %v1173, %v1936
  %v2056 = vmax.f32 %v1174, %v1836
  %v2057 = vmax.f32 %v1179, %v1838
  %v2058 = vmax.f32 %v1180, %v1937
  %v2059 = vmax.f32 %v1181, %v1840
  %v2060 = vmax.f32 %v1186, %v1842
  %v2061 = vmax.f32 %v1187, %v1938
  %v2062 = vmax.f32 %v1188, %v1844
  %v2063 = vmax.f32 %v1193, %v1846
  %v2064 = vmax.f32 %v1194, %v1939
  %v2065 = vmax.f32 %v1195, %v1848
  %v2066 = vmax.f32 %v1200, %v1850
  %v2067 = vmax.f32 %v1201, %v1940
  %v2068 = vmax.f32 %v1202, %v1852
  %v2069 = vmax.f32 %v1207, %v1854
  %v2070 = vmax.f32 %v1208, %v1941
  %v2071 = vmax.f32 %v1209, %v1856
  %v2072 = vmax.f32 %v1214, %v1858
  %v2073 = vmax.f32 %v1215, %v1942
  %v2074 = vmax.f32 %v1216, %v1860
  %v2075 = vmax.f32 %v1221, %v1862
  %v2076 = vmax.f32 %v1222, %v1943
  %v2077 = vmax.f32 %v1223, %v1864
  %v2078 = vmax.f32 %v1228, %v1866
  %v2079 = vmax.f32 %v1229, %v1944
  %v2080 = vmax.f32 %v1230, %v1868
  %v2081 = vmax.f32 %v1235, %v1870
  %v2082 = vmax.f32 %v1236, %v1945
  %v2083 = vmax.f32 %v1237, %v1872
  %v2084 = vmax.f32 %v1242, %v1874
  %v2085 = vmax.f32 %v1243, %v1946
  %v2086 = vmax.f32 %v1244, %v1876
  %v2087 = vmax.f32 %v1249, %v1878
  %v2088 = vmax.f32 %v1250, %v1947
  %v2089 = vmax.f32 %v1251, %v1880
  %v2090 = vmax.f32 %v1256, %v1882
  %v2091 = vmax.f32 %v1257, %v1948
  %v2092 = vmax.f32 %v1258, %v1884
  %v2093 = vmax.f32 %v1263, %v1886
  %v2094 = vmax.f32 %v1264, %v1949
  %v2095 = vmax.f32 %v1265, %v1888
  %v2096 = vmax.f32 %v1270, %v1890
  %v2097 = vmax.f32 %v1271, %v1950
  %v2098 = vmax.f32 %v1272, %v1892
  %v2099 = vmax.f32 %v1277, %v1894
  %v2100 = vmax.f32 %v1278, %v1951
  %v2101 = vmax.f32 %v1279, %v1896
  %v2102 = vmax.f32 %v1284, %v1898
  %v2103 = vmax.f32 %v1285, %v1952
  %v2104 = vmax.f32 %v1286, %v1900
  %v2105 = vmax.f32 %v1291, %v1902
  %v2106 = vmax.f32 %v1292, %v1953
  %v2107 = vmax.f32 %v1293, %v1904
  %v2108 = vmax.f32 %v1298, %v1906
  %v2109 = vmax.f32 %v1299, %v1954
  %v2110 = vmax.f32 %v1300, %v1908
  %v2111 = vmax.f32 %v1305, %v1910
  %v2112 = vmax.f32 %v1306, %v1955
  %v2113 = vmax.f32 %v1307, %v1912
  %v2114 = vmax.f32 %v1312, %v1914
  %v2115 = vmax.f32 %v1313, %v1956
  %v2116 = vmax.f32 %v1314, %v1916
  %v2117 = vmax.f32 %v1319, %v1918
  %v2118 = vmax.f32 %v1320, %v1957
  %v2119 = vmax.f32 %v1321, %v1920
  %v2120 = vmax.f32 %v1326, %v1922
  %v2121 = vmax.f32 %v1327, %v1958
  %v2122 = vmax.f32 %v1328, %v1924
  %v2123 = vmax.f32 %v1333, %v1926
  %v2124 = vmax.f32 %v1334, %v1959
  %v2125 = vmax.f32 %v1335, %v1928
  %v2126 = vmax.f32 %v1340, %v1930
  %v2127 = vmax.f32 %v1341, %v1960
  %v2128 = vmax.f32 %v1342, %v1932
  %2213 = vrot.lane.b32.xlu0 %v2045, 64
  %v2214 = vpop.permute.xlu0 %2213
  %2215 = vrot.lane.b32.xlu0 %v2046, 64
  %v2216 = vpop.permute.xlu0 %2215
  %2217 = vrot.lane.b32.xlu0 %v2047, 64
  %v2218 = vpop.permute.xlu0 %2217
  %2219 = vrot.lane.b32.xlu0 %v2048, 64
  %v2220 = vpop.permute.xlu0 %2219
  %2221 = vrot.lane.b32.xlu0 %v2049, 64
  %v2222 = vpop.permute.xlu0 %2221
  %2223 = vrot.lane.b32.xlu0 %v2050, 64
  %v2224 = vpop.permute.xlu0 %2223
  %2225 = vrot.lane.b32.xlu0 %v2051, 64
  %v2226 = vpop.permute.xlu0 %2225
  %2227 = vrot.lane.b32.xlu0 %v2052, 64
  %v2228 = vpop.permute.xlu0 %2227
  %2229 = vrot.lane.b32.xlu0 %v2053, 64
  %v2230 = vpop.permute.xlu0 %2229
  %2231 = vrot.lane.b32.xlu0 %v2054, 64
  %v2232 = vpop.permute.xlu0 %2231
  %2233 = vrot.lane.b32.xlu0 %v2055, 64
  %v2234 = vpop.permute.xlu0 %2233
  %2235 = vrot.lane.b32.xlu0 %v2056, 64
  %v2236 = vpop.permute.xlu0 %2235
  %2237 = vrot.lane.b32.xlu0 %v2057, 64
  %v2238 = vpop.permute.xlu0 %2237
  %2239 = vrot.lane.b32.xlu0 %v2058, 64
  %v2240 = vpop.permute.xlu0 %2239
  %2241 = vrot.lane.b32.xlu0 %v2059, 64
  %v2242 = vpop.permute.xlu0 %2241
  %2243 = vrot.lane.b32.xlu0 %v2060, 64
  %v2244 = vpop.permute.xlu0 %2243
  %2245 = vrot.lane.b32.xlu0 %v2061, 64
  %v2246 = vpop.permute.xlu0 %2245
  %2247 = vrot.lane.b32.xlu0 %v2062, 64
  %v2248 = vpop.permute.xlu0 %2247
  %2249 = vrot.lane.b32.xlu0 %v2063, 64
  %v2250 = vpop.permute.xlu0 %2249
  %2251 = vrot.lane.b32.xlu0 %v2064, 64
  %v2252 = vpop.permute.xlu0 %2251
  %2253 = vrot.lane.b32.xlu0 %v2065, 64
  %v2254 = vpop.permute.xlu0 %2253
  %2255 = vrot.lane.b32.xlu0 %v2066, 64
  %v2256 = vpop.permute.xlu0 %2255
  %2257 = vrot.lane.b32.xlu0 %v2067, 64
  %v2258 = vpop.permute.xlu0 %2257
  %2259 = vrot.lane.b32.xlu0 %v2068, 64
  %v2260 = vpop.permute.xlu0 %2259
  %2261 = vrot.lane.b32.xlu0 %v2069, 64
  %v2262 = vpop.permute.xlu0 %2261
  %2263 = vrot.lane.b32.xlu0 %v2070, 64
  %v2264 = vpop.permute.xlu0 %2263
  %2265 = vrot.lane.b32.xlu0 %v2071, 64
  %v2266 = vpop.permute.xlu0 %2265
  %2267 = vrot.lane.b32.xlu0 %v2072, 64
  %v2268 = vpop.permute.xlu0 %2267
  %2269 = vrot.lane.b32.xlu0 %v2073, 64
  %v2270 = vpop.permute.xlu0 %2269
  %2271 = vrot.lane.b32.xlu0 %v2074, 64
  %v2272 = vpop.permute.xlu0 %2271
  %2273 = vrot.lane.b32.xlu0 %v2075, 64
  %v2274 = vpop.permute.xlu0 %2273
  %2275 = vrot.lane.b32.xlu0 %v2076, 64
  %v2276 = vpop.permute.xlu0 %2275
  %2277 = vrot.lane.b32.xlu0 %v2077, 64
  %v2278 = vpop.permute.xlu0 %2277
  %2279 = vrot.lane.b32.xlu0 %v2078, 64
  %v2280 = vpop.permute.xlu0 %2279
  %2281 = vrot.lane.b32.xlu0 %v2079, 64
  %v2282 = vpop.permute.xlu0 %2281
  %2283 = vrot.lane.b32.xlu0 %v2080, 64
  %v2284 = vpop.permute.xlu0 %2283
  %2285 = vrot.lane.b32.xlu0 %v2081, 64
  %v2286 = vpop.permute.xlu0 %2285
  %2287 = vrot.lane.b32.xlu0 %v2082, 64
  %v2288 = vpop.permute.xlu0 %2287
  %2289 = vrot.lane.b32.xlu0 %v2083, 64
  %v2290 = vpop.permute.xlu0 %2289
  %2291 = vrot.lane.b32.xlu0 %v2084, 64
  %v2292 = vpop.permute.xlu0 %2291
  %2293 = vrot.lane.b32.xlu0 %v2085, 64
  %v2294 = vpop.permute.xlu0 %2293
  %2295 = vrot.lane.b32.xlu0 %v2086, 64
  %v2296 = vpop.permute.xlu0 %2295
  %2297 = vrot.lane.b32.xlu0 %v2087, 64
  %v2298 = vpop.permute.xlu0 %2297
  %2299 = vrot.lane.b32.xlu0 %v2088, 64
  %v2300 = vpop.permute.xlu0 %2299
  %2301 = vrot.lane.b32.xlu0 %v2089, 64
  %v2302 = vpop.permute.xlu0 %2301
  %2303 = vrot.lane.b32.xlu0 %v2090, 64
  %v2304 = vpop.permute.xlu0 %2303
  %2305 = vrot.lane.b32.xlu0 %v2091, 64
  %v2306 = vpop.permute.xlu0 %2305
  %2307 = vrot.lane.b32.xlu0 %v2092, 64
  %v2308 = vpop.permute.xlu0 %2307
  %2309 = vrot.lane.b32.xlu0 %v2093, 64
  %v2310 = vpop.permute.xlu0 %2309
  %2311 = vrot.lane.b32.xlu0 %v2094, 64
  %v2312 = vpop.permute.xlu0 %2311
  %2313 = vrot.lane.b32.xlu0 %v2095, 64
  %v2314 = vpop.permute.xlu0 %2313
  %2315 = vrot.lane.b32.xlu0 %v2096, 64
  %v2316 = vpop.permute.xlu0 %2315
  %2317 = vrot.lane.b32.xlu0 %v2097, 64
  %v2318 = vpop.permute.xlu0 %2317
  %2319 = vrot.lane.b32.xlu0 %v2098, 64
  %v2320 = vpop.permute.xlu0 %2319
  %2321 = vrot.lane.b32.xlu0 %v2099, 64
  %v2322 = vpop.permute.xlu0 %2321
  %2323 = vrot.lane.b32.xlu0 %v2100, 64
  %v2324 = vpop.permute.xlu0 %2323
  %2325 = vrot.lane.b32.xlu0 %v2101, 64
  %v2326 = vpop.permute.xlu0 %2325
  %2327 = vrot.lane.b32.xlu0 %v2102, 64
  %v2328 = vpop.permute.xlu0 %2327
  %2329 = vrot.lane.b32.xlu0 %v2103, 64
  %v2330 = vpop.permute.xlu0 %2329
  %2331 = vrot.lane.b32.xlu0 %v2104, 64
  %v2332 = vpop.permute.xlu0 %2331
  %2333 = vrot.lane.b32.xlu0 %v2105, 64
  %v2334 = vpop.permute.xlu0 %2333
  %2335 = vrot.lane.b32.xlu0 %v2106, 64
  %v2336 = vpop.permute.xlu0 %2335
  %2337 = vrot.lane.b32.xlu0 %v2107, 64
  %v2338 = vpop.permute.xlu0 %2337
  %2339 = vrot.lane.b32.xlu0 %v2108, 64
  %v2340 = vpop.permute.xlu0 %2339
  %2341 = vrot.lane.b32.xlu0 %v2109, 64
  %v2342 = vpop.permute.xlu0 %2341
  %2343 = vrot.lane.b32.xlu0 %v2110, 64
  %v2344 = vpop.permute.xlu0 %2343
  %2345 = vrot.lane.b32.xlu0 %v2111, 64
  %v2346 = vpop.permute.xlu0 %2345
  %2347 = vrot.lane.b32.xlu0 %v2112, 64
  %v2348 = vpop.permute.xlu0 %2347
  %2349 = vrot.lane.b32.xlu0 %v2113, 64
  %v2350 = vpop.permute.xlu0 %2349
  %2351 = vrot.lane.b32.xlu0 %v2114, 64
  %v2352 = vpop.permute.xlu0 %2351
  %2353 = vrot.lane.b32.xlu0 %v2115, 64
  %v2354 = vpop.permute.xlu0 %2353
  %2355 = vrot.lane.b32.xlu0 %v2116, 64
  %v2356 = vpop.permute.xlu0 %2355
  %2357 = vrot.lane.b32.xlu0 %v2117, 64
  %v2358 = vpop.permute.xlu0 %2357
  %2359 = vrot.lane.b32.xlu0 %v2118, 64
  %v2360 = vpop.permute.xlu0 %2359
  %2361 = vrot.lane.b32.xlu0 %v2119, 64
  %v2362 = vpop.permute.xlu0 %2361
  %2363 = vrot.lane.b32.xlu0 %v2120, 64
  %v2364 = vpop.permute.xlu0 %2363
  %2365 = vrot.lane.b32.xlu0 %v2121, 64
  %v2366 = vpop.permute.xlu0 %2365
  %2367 = vrot.lane.b32.xlu0 %v2122, 64
  %v2368 = vpop.permute.xlu0 %2367
  %2369 = vrot.lane.b32.xlu0 %v2123, 64
  %v2370 = vpop.permute.xlu0 %2369
  %2371 = vrot.lane.b32.xlu0 %v2124, 64
  %v2372 = vpop.permute.xlu0 %2371
  %2373 = vrot.lane.b32.xlu0 %v2125, 64
  %v2374 = vpop.permute.xlu0 %2373
  %2375 = vrot.lane.b32.xlu0 %v2126, 64
  %v2376 = vpop.permute.xlu0 %2375
  %2377 = vrot.lane.b32.xlu0 %v2127, 64
  %v2378 = vpop.permute.xlu0 %2377
  %2379 = vrot.lane.b32.xlu0 %v2128, 64
  %v2380 = vpop.permute.xlu0 %2379
  %vm2381 = vcmask 523264
  %v2382 = vsel %vm2381, %v2214, %v2216
  %v2383 = vsel %vm2381, %v2216, %v2218
  %v2384 = vsel %vm2381, %v2220, %v2222
  %v2385 = vsel %vm2381, %v2222, %v2224
  %v2386 = vsel %vm2381, %v2226, %v2228
  %v2387 = vsel %vm2381, %v2228, %v2230
  %v2388 = vsel %vm2381, %v2232, %v2234
  %v2389 = vsel %vm2381, %v2234, %v2236
  %v2390 = vsel %vm2381, %v2238, %v2240
  %v2391 = vsel %vm2381, %v2240, %v2242
  %v2392 = vsel %vm2381, %v2244, %v2246
  %v2393 = vsel %vm2381, %v2246, %v2248
  %v2394 = vsel %vm2381, %v2250, %v2252
  %v2395 = vsel %vm2381, %v2252, %v2254
  %v2396 = vsel %vm2381, %v2256, %v2258
  %v2397 = vsel %vm2381, %v2258, %v2260
  %v2398 = vsel %vm2381, %v2262, %v2264
  %v2399 = vsel %vm2381, %v2264, %v2266
  %v2400 = vsel %vm2381, %v2268, %v2270
  %v2401 = vsel %vm2381, %v2270, %v2272
  %v2402 = vsel %vm2381, %v2274, %v2276
  %v2403 = vsel %vm2381, %v2276, %v2278
  %v2404 = vsel %vm2381, %v2280, %v2282
  %v2405 = vsel %vm2381, %v2282, %v2284
  %v2406 = vsel %vm2381, %v2286, %v2288
  %v2407 = vsel %vm2381, %v2288, %v2290
  %v2408 = vsel %vm2381, %v2292, %v2294
  %v2409 = vsel %vm2381, %v2294, %v2296
  %v2410 = vsel %vm2381, %v2298, %v2300
  %v2411 = vsel %vm2381, %v2300, %v2302
  %v2412 = vsel %vm2381, %v2304, %v2306
  %v2413 = vsel %vm2381, %v2306, %v2308
  %v2414 = vsel %vm2381, %v2310, %v2312
  %v2415 = vsel %vm2381, %v2312, %v2314
  %v2416 = vsel %vm2381, %v2316, %v2318
  %v2417 = vsel %vm2381, %v2318, %v2320
  %v2418 = vsel %vm2381, %v2322, %v2324
  %v2419 = vsel %vm2381, %v2324, %v2326
  %v2420 = vsel %vm2381, %v2328, %v2330
  %v2421 = vsel %vm2381, %v2330, %v2332
  %v2422 = vsel %vm2381, %v2334, %v2336
  %v2423 = vsel %vm2381, %v2336, %v2338
  %v2424 = vsel %vm2381, %v2340, %v2342
  %v2425 = vsel %vm2381, %v2342, %v2344
  %v2426 = vsel %vm2381, %v2346, %v2348
  %v2427 = vsel %vm2381, %v2348, %v2350
  %v2428 = vsel %vm2381, %v2352, %v2354
  %v2429 = vsel %vm2381, %v2354, %v2356
  %v2430 = vsel %vm2381, %v2358, %v2360
  %v2431 = vsel %vm2381, %v2360, %v2362
  %v2432 = vsel %vm2381, %v2364, %v2366
  %v2433 = vsel %vm2381, %v2366, %v2368
  %v2434 = vsel %vm2381, %v2370, %v2372
  %v2435 = vsel %vm2381, %v2372, %v2374
  %v2436 = vsel %vm2381, %v2376, %v2378
  %v2437 = vsel %vm2381, %v2378, %v2380
  %v2494 = vmax.f32 %v1709, %v2382
  %v2495 = vmax.f32 %v1710, %v2383
  %v2496 = vmax.f32 %v1711, %v2384
  %v2497 = vmax.f32 %v1712, %v2385
  %v2498 = vmax.f32 %v1713, %v2386
  %v2499 = vmax.f32 %v1714, %v2387
  %v2500 = vmax.f32 %v1715, %v2388
  %v2501 = vmax.f32 %v1716, %v2389
  %v2502 = vmax.f32 %v1717, %v2390
  %v2503 = vmax.f32 %v1718, %v2391
  %v2504 = vmax.f32 %v1719, %v2392
  %v2505 = vmax.f32 %v1720, %v2393
  %v2506 = vmax.f32 %v1721, %v2394
  %v2507 = vmax.f32 %v1722, %v2395
  %v2508 = vmax.f32 %v1723, %v2396
  %v2509 = vmax.f32 %v1724, %v2397
  %v2510 = vmax.f32 %v1725, %v2398
  %v2511 = vmax.f32 %v1726, %v2399
  %v2512 = vmax.f32 %v1727, %v2400
  %v2513 = vmax.f32 %v1728, %v2401
  %v2514 = vmax.f32 %v1729, %v2402
  %v2515 = vmax.f32 %v1730, %v2403
  %v2516 = vmax.f32 %v1731, %v2404
  %v2517 = vmax.f32 %v1732, %v2405
  %v2518 = vmax.f32 %v1733, %v2406
  %v2519 = vmax.f32 %v1734, %v2407
  %v2520 = vmax.f32 %v1735, %v2408
  %v2521 = vmax.f32 %v1736, %v2409
  %v2522 = vmax.f32 %v1737, %v2410
  %v2523 = vmax.f32 %v1738, %v2411
  %v2524 = vmax.f32 %v1739, %v2412
  %v2525 = vmax.f32 %v1740, %v2413
  %v2526 = vmax.f32 %v1741, %v2414
  %v2527 = vmax.f32 %v1742, %v2415
  %v2528 = vmax.f32 %v1743, %v2416
  %v2529 = vmax.f32 %v1744, %v2417
  %v2530 = vmax.f32 %v1745, %v2418
  %v2531 = vmax.f32 %v1746, %v2419
  %v2532 = vmax.f32 %v1747, %v2420
  %v2533 = vmax.f32 %v1748, %v2421
  %v2534 = vmax.f32 %v1749, %v2422
  %v2535 = vmax.f32 %v1750, %v2423
  %v2536 = vmax.f32 %v1751, %v2424
  %v2537 = vmax.f32 %v1752, %v2425
  %v2538 = vmax.f32 %v1753, %v2426
  %v2539 = vmax.f32 %v1754, %v2427
  %v2540 = vmax.f32 %v1755, %v2428
  %v2541 = vmax.f32 %v1756, %v2429
  %v2542 = vmax.f32 %v1757, %v2430
  %v2543 = vmax.f32 %v1758, %v2431
  %v2544 = vmax.f32 %v1759, %v2432
  %v2545 = vmax.f32 %v1760, %v2433
  %v2546 = vmax.f32 %v1761, %v2434
  %v2547 = vmax.f32 %v1762, %v2435
  %v2548 = vmax.f32 %v1763, %v2436
  %v2549 = vmax.f32 %v1764, %v2437
  %v2550 = vmax.f32 %v2494, %v2496
  %v2551 = vmax.f32 %v2495, %v2497
  %v2552 = vmax.f32 %v2498, %v2500
  %v2553 = vmax.f32 %v2499, %v2501
  %v2554 = vmax.f32 %v2502, %v2504
  %v2555 = vmax.f32 %v2503, %v2505
  %v2556 = vmax.f32 %v2506, %v2508
  %v2557 = vmax.f32 %v2507, %v2509
  %v2558 = vmax.f32 %v2510, %v2512
  %v2559 = vmax.f32 %v2511, %v2513
  %v2560 = vmax.f32 %v2514, %v2516
  %v2561 = vmax.f32 %v2515, %v2517
  %v2562 = vmax.f32 %v2518, %v2520
  %v2563 = vmax.f32 %v2519, %v2521
  %v2564 = vmax.f32 %v2522, %v2524
  %v2565 = vmax.f32 %v2523, %v2525
  %v2566 = vmax.f32 %v2526, %v2528
  %v2567 = vmax.f32 %v2527, %v2529
  %v2568 = vmax.f32 %v2530, %v2532
  %v2569 = vmax.f32 %v2531, %v2533
  %v2570 = vmax.f32 %v2534, %v2536
  %v2571 = vmax.f32 %v2535, %v2537
  %v2572 = vmax.f32 %v2538, %v2540
  %v2573 = vmax.f32 %v2539, %v2541
  %v2574 = vmax.f32 %v2542, %v2544
  %v2575 = vmax.f32 %v2543, %v2545
  %v2576 = vmax.f32 %v2546, %v2548
  %v2577 = vmax.f32 %v2547, %v2549
  %v2578 = vmax.f32 %v2550, %v2552
  %v2579 = vmax.f32 %v2551, %v2553
  %v2580 = vmax.f32 %v2554, %v2556
  %v2581 = vmax.f32 %v2555, %v2557
  %v2582 = vmax.f32 %v2558, %v2560
  %v2583 = vmax.f32 %v2559, %v2561
  %v2584 = vmax.f32 %v2562, %v2564
  %v2585 = vmax.f32 %v2563, %v2565
  %v2586 = vmax.f32 %v2566, %v2568
  %v2587 = vmax.f32 %v2567, %v2569
  %v2588 = vmax.f32 %v2570, %v2572
  %v2589 = vmax.f32 %v2571, %v2573
  %v2590 = vmax.f32 %v2574, %v2576
  %v2591 = vmax.f32 %v2575, %v2577
  %vm2592 = vcmask 785408
  %v2593 = vsel %vm2592, %v2579, 0.0
  %v2594 = vsel %vm2592, %v2581, 0.0
  %v2595 = vsel %vm2592, %v2583, 0.0
  %v2596 = vsel %vm2592, %v2585, 0.0
  %v2597 = vsel %vm2592, %v2587, 0.0
  %v2598 = vsel %vm2592, %v2589, 0.0
  %v2599 = vsel %vm2592, %v2591, 0.0
  %v2600 = vpack.c.bf16 %v2578, 0.0
  %v2601 = vpack.c.bf16 %v2593, 0.0
  %v2602 = vpack.c.bf16 %v2580, %v2578
  %v2603 = vpack.c.bf16 %v2594, %v2593
  %v2604 = vpack.c.bf16 %v2582, %v2580
  %v2605 = vpack.c.bf16 %v2595, %v2594
  %v2606 = vpack.c.bf16 %v2584, %v2582
  %v2607 = vpack.c.bf16 %v2596, %v2595
  %v2608 = vpack.c.bf16 %v2586, %v2584
  %v2609 = vpack.c.bf16 %v2597, %v2596
  %v2610 = vpack.c.bf16 %v2588, %v2586
  %v2611 = vpack.c.bf16 %v2598, %v2597
  %v2612 = vpack.c.bf16 %v2590, %v2588
  %v2613 = vpack.c.bf16 %v2599, %v2598
  %v2614 = vpack.c.bf16 0.0, %v2590
  %v2615 = vpack.c.bf16 0.0, %v2599
  %v2616 = vld [vmem:[%s3] sm:$0xff]
  %v2617 = vld [vmem:[%s3 + $0x8] sm:$0xff]
  %v2618 = vld [vmem:[%s3 + $0x10] sm:$0xff]
  %v2619 = vld [vmem:[%s3 + $0x18] sm:$0xff]
  %v2620 = vld [vmem:[%s3 + $0x20] sm:$0xff]
  %v2621 = vld [vmem:[%s3 + $0x28] sm:$0xff]
  %v2622 = vld [vmem:[%s3 + $0x30] sm:$0xff]
  %v2623 = vld [vmem:[%s3 + $0x38] sm:$0xff]
  %v2624 = vld [vmem:[%s3 + $0x40] sm:$0xff]
  %v2625 = vld [vmem:[%s3 + $0x48] sm:$0xff]
  %v2626 = vld [vmem:[%s3 + $0x50] sm:$0xff]
  %v2627 = vld [vmem:[%s3 + $0x58] sm:$0xff]
  %v2628 = vld [vmem:[%s3 + $0x60] sm:$0xff]
  %v2629 = vld [vmem:[%s3 + $0x68] sm:$0xff]
  %v2630 = vld [vmem:[%s3 + $0x70] sm:$0xff]
  %v2631 = vld [vmem:[%s3 + $0x78] sm:$0xff]
  %v2632 = vld [vmem:[%s3 + $0x80] sm:$0xff]
  %v2633 = vld [vmem:[%s3 + $0x88] sm:$0xff]
  %v2634 = vld [vmem:[%s3 + $0x90] sm:$0xff]
  %v2635 = vld [vmem:[%s3 + $0x98] sm:$0xff]
  %v2636 = vld [vmem:[%s3 + $0xa0] sm:$0xff]
  %v2637 = vld [vmem:[%s3 + $0xa8] sm:$0xff]
  %v2638 = vld [vmem:[%s3 + $0xb0] sm:$0xff]
  %v2639 = vld [vmem:[%s3 + $0xb8] sm:$0xff]
  %v2640 = vld [vmem:[%s3 + $0xc0] sm:$0xff]
  %v2641 = vld [vmem:[%s3 + $0xc8] sm:$0xff]
  %v2642 = vld [vmem:[%s3 + $0xd0] sm:$0xff]
  %v2643 = vld [vmem:[%s3 + $0xd8] sm:$0xff]
  %v2644 = vld [vmem:[%s3 + $0xe0] sm:$0xff]
  %v2645 = vld [vmem:[%s3 + $0xe8] sm:$0xff]
  %v2646 = vld [vmem:[%s3 + $0xf0] sm:$0xff]
  %v2647 = vld [vmem:[%s3 + $0xf8] sm:$0xff]
  %v2648 = vld [vmem:[%s3 + $0x100] sm:$0xff]
  %v2649 = vld [vmem:[%s3 + $0x108] sm:$0xff]
  %v2650 = vld [vmem:[%s3 + $0x110] sm:$0xff]
  %v2651 = vld [vmem:[%s3 + $0x118] sm:$0xff]
  %v2652 = vld [vmem:[%s3 + $0x120] sm:$0xff]
  %v2653 = vld [vmem:[%s3 + $0x128] sm:$0xff]
  %v2654 = vld [vmem:[%s3 + $0x130] sm:$0xff]
  %v2655 = vld [vmem:[%s3 + $0x138] sm:$0xff]
  %v2656 = vld [vmem:[%s3 + $0x140] sm:$0xff]
  %v2657 = vld [vmem:[%s3 + $0x148] sm:$0xff]
  %v2658 = vld [vmem:[%s3 + $0x150] sm:$0xff]
  %v2659 = vld [vmem:[%s3 + $0x158] sm:$0xff]
  %v2660 = vld [vmem:[%s3 + $0x160] sm:$0xff]
  %v2661 = vld [vmem:[%s3 + $0x168] sm:$0xff]
  %v2662 = vld [vmem:[%s3 + $0x170] sm:$0xff]
  %v2663 = vld [vmem:[%s3 + $0x178] sm:$0xff]
  %v2664 = vld [vmem:[%s3 + $0x180] sm:$0xff]
  %v2665 = vld [vmem:[%s3 + $0x188] sm:$0xff]
  %v2666 = vld [vmem:[%s3 + $0x190] sm:$0xff]
  %v2667 = vld [vmem:[%s3 + $0x198] sm:$0xff]
  %v2668 = vld [vmem:[%s3 + $0x1a0] sm:$0xff]
  %v2669 = vld [vmem:[%s3 + $0x1a8] sm:$0xff]
  %v2670 = vld [vmem:[%s3 + $0x1b0] sm:$0xff]
  %v2671 = vld [vmem:[%s3 + $0x1b8] sm:$0xff]
  %v2672 = vld [vmem:[%s3 + $0x1c0] sm:$0xff]
  %v2673 = vld [vmem:[%s3 + $0x1c8] sm:$0xff]
  %v2674 = vld [vmem:[%s3 + $0x1d0] sm:$0xff]
  %v2675 = vld [vmem:[%s3 + $0x1d8] sm:$0xff]
  %v2676 = vld [vmem:[%s3 + $0x1e0] sm:$0xff]
  %v2677 = vld [vmem:[%s3 + $0x1e8] sm:$0xff]
  %v2678 = vld [vmem:[%s3 + $0x1f0] sm:$0xff]
  %v2679 = vld [vmem:[%s3 + $0x1f8] sm:$0xff]
  %v2680 = vld [vmem:[%s3 + $0x200] sm:$0xff]
  %v2681 = vld [vmem:[%s3 + $0x208] sm:$0xff]
  %v2682 = vld [vmem:[%s3 + $0x210] sm:$0xff]
  %v2683 = vld [vmem:[%s3 + $0x218] sm:$0xff]
  %v2684 = vld [vmem:[%s3 + $0x220] sm:$0xff]
  %v2685 = vld [vmem:[%s3 + $0x228] sm:$0xff]
  %v2686 = vld [vmem:[%s3 + $0x230] sm:$0xff]
  %v2687 = vld [vmem:[%s3 + $0x238] sm:$0xff]
  %v2688 = vld [vmem:[%s3 + $0x240] sm:$0xff]
  %v2689 = vld [vmem:[%s3 + $0x248] sm:$0xff]
  %v2690 = vld [vmem:[%s3 + $0x250] sm:$0xff]
  %v2691 = vld [vmem:[%s3 + $0x258] sm:$0xff]
  %v2692 = vld [vmem:[%s3 + $0x260] sm:$0xff]
  %v2693 = vld [vmem:[%s3 + $0x268] sm:$0xff]
  %v2694 = vld [vmem:[%s3 + $0x270] sm:$0xff]
  %v2695 = vld [vmem:[%s3 + $0x278] sm:$0xff]
  %v2696 = vld [vmem:[%s3 + $0x280] sm:$0xff]
  %v2697 = vld [vmem:[%s3 + $0x288] sm:$0xff]
  %v2698 = vld [vmem:[%s3 + $0x290] sm:$0xff]
  %v2699 = vld [vmem:[%s3 + $0x298] sm:$0xff]
  %v2700 = vld [vmem:[%s3 + $0x2a0] sm:$0xff]
  %v2701 = vld [vmem:[%s3 + $0x2a8] sm:$0xff]
  %v2702 = vld [vmem:[%s3 + $0x2b0] sm:$0xff]
  %v2703 = vld [vmem:[%s3 + $0x2b8] sm:$0xff]
  %v2704 = vld [vmem:[%s3 + $0x2c0] sm:$0xff]
  %v2705 = vld [vmem:[%s3 + $0x2c8] sm:$0xff]
  %v2706 = vld [vmem:[%s3 + $0x2d0] sm:$0xff]
  %v2707 = vld [vmem:[%s3 + $0x2d8] sm:$0xff]
  %v2708 = vld [vmem:[%s3 + $0x2e0] sm:$0xff]
  %v2709 = vld [vmem:[%s3 + $0x2e8] sm:$0xff]
  %v2710 = vld [vmem:[%s3 + $0x2f0] sm:$0xff]
  %v2711 = vld [vmem:[%s3 + $0x2f8] sm:$0xff]
  %v2712 = vld [vmem:[%s3 + $0x300] sm:$0xff]
  %v2713 = vld [vmem:[%s3 + $0x308] sm:$0xff]
  %v2714 = vld [vmem:[%s3 + $0x310] sm:$0xff]
  %v2715 = vld [vmem:[%s3 + $0x318] sm:$0xff]
  %v2716 = vld [vmem:[%s3 + $0x320] sm:$0xff]
  %v2717 = vld [vmem:[%s3 + $0x328] sm:$0xff]
  %v2718 = vld [vmem:[%s3 + $0x330] sm:$0xff]
  %v2719 = vld [vmem:[%s3 + $0x338] sm:$0xff]
  %v2720 = vld [vmem:[%s3 + $0x340] sm:$0xff]
  %v2721 = vld [vmem:[%s3 + $0x348] sm:$0xff]
  %v2722 = vld [vmem:[%s3 + $0x350] sm:$0xff]
  %v2723 = vld [vmem:[%s3 + $0x358] sm:$0xff]
  %v2724 = vld [vmem:[%s3 + $0x360] sm:$0xff]
  %v2725 = vld [vmem:[%s3 + $0x368] sm:$0xff]
  %v2726 = vld [vmem:[%s3 + $0x370] sm:$0xff]
  %v2727 = vld [vmem:[%s3 + $0x378] sm:$0xff]
  %v2728 = vld [vmem:[%s3 + $0x380] sm:$0xff]
  %v2729 = vld [vmem:[%s3 + $0x388] sm:$0xff]
  %v2730 = vld [vmem:[%s3 + $0x390] sm:$0xff]
  %v2731 = vld [vmem:[%s3 + $0x398] sm:$0xff]
  %v2732 = vld [vmem:[%s3 + $0x3a0] sm:$0xff]
  %v2733 = vld [vmem:[%s3 + $0x3a8] sm:$0xff]
  %v2734 = vld [vmem:[%s3 + $0x3b0] sm:$0xff]
  %v2735 = vld [vmem:[%s3 + $0x3b8] sm:$0xff]
  %v2736 = vld [vmem:[%s3 + $0x3c0] sm:$0xff]
  %v2737 = vld [vmem:[%s3 + $0x3c8] sm:$0xff]
  %v2738 = vld [vmem:[%s3 + $0x3d0] sm:$0xff]
  %v2739 = vld [vmem:[%s3 + $0x3d8] sm:$0xff]
  %v2740 = vld [vmem:[%s3 + $0x3e0] sm:$0xff]
  %v2741 = vld [vmem:[%s3 + $0x3e8] sm:$0xff]
  %v2742 = vld [vmem:[%s3 + $0x3f0] sm:$0xff]
  %v2743 = vld [vmem:[%s3 + $0x3f8] sm:$0xff]
  %v2744 = vld [vmem:[%s3 + $0x400] sm:$0xff]
  %v2745 = vld [vmem:[%s3 + $0x408] sm:$0xff]
  %v2746 = vld [vmem:[%s3 + $0x410] sm:$0xff]
  %v2747 = vld [vmem:[%s3 + $0x418] sm:$0xff]
  %v2748 = vld [vmem:[%s3 + $0x420] sm:$0xff]
  %v2749 = vld [vmem:[%s3 + $0x428] sm:$0xff]
  %v2750 = vld [vmem:[%s3 + $0x430] sm:$0xff]
  %v2751 = vld [vmem:[%s3 + $0x438] sm:$0xff]
  %v2752 = vld [vmem:[%s3 + $0x440] sm:$0xff]
  %v2753 = vld [vmem:[%s3 + $0x448] sm:$0xff]
  %v2754 = vld [vmem:[%s3 + $0x450] sm:$0xff]
  %v2755 = vld [vmem:[%s3 + $0x458] sm:$0xff]
  %v2756 = vld [vmem:[%s3 + $0x460] sm:$0xff]
  %v2757 = vld [vmem:[%s3 + $0x468] sm:$0xff]
  %v2758 = vld [vmem:[%s3 + $0x470] sm:$0xff]
  %v2759 = vld [vmem:[%s3 + $0x478] sm:$0xff]
  %v2760 = vld [vmem:[%s3 + $0x480] sm:$0xff]
  %v2761 = vld [vmem:[%s3 + $0x488] sm:$0xff]
  %v2762 = vld [vmem:[%s3 + $0x490] sm:$0xff]
  %v2763 = vld [vmem:[%s3 + $0x498] sm:$0xff]
  %v2764 = vld [vmem:[%s3 + $0x4a0] sm:$0xff]
  %v2765 = vld [vmem:[%s3 + $0x4a8] sm:$0xff]
  %v2766 = vld [vmem:[%s3 + $0x4b0] sm:$0xff]
  %v2767 = vld [vmem:[%s3 + $0x4b8] sm:$0xff]
  %v2768 = vld [vmem:[%s3 + $0x4c0] sm:$0xff]
  %v2769 = vld [vmem:[%s3 + $0x4c8] sm:$0xff]
  %v2770 = vld [vmem:[%s3 + $0x4d0] sm:$0xff]
  %v2771 = vld [vmem:[%s3 + $0x4d8] sm:$0xff]
  %v2772 = vld [vmem:[%s3 + $0x4e0] sm:$0xff]
  %v2773 = vld [vmem:[%s3 + $0x4e8] sm:$0xff]
  %v2774 = vld [vmem:[%s3 + $0x4f0] sm:$0xff]
  %v2775 = vld [vmem:[%s3 + $0x4f8] sm:$0xff]
  %v2776 = vld [vmem:[%s3 + $0x500] sm:$0xff]
  %v2777 = vld [vmem:[%s3 + $0x508] sm:$0xff]
  %v2778 = vld [vmem:[%s3 + $0x510] sm:$0xff]
  %v2779 = vld [vmem:[%s3 + $0x518] sm:$0xff]
  %v2780 = vld [vmem:[%s3 + $0x520] sm:$0xff]
  %v2781 = vld [vmem:[%s3 + $0x528] sm:$0xff]
  %v2782 = vld [vmem:[%s3 + $0x530] sm:$0xff]
  %v2783 = vld [vmem:[%s3 + $0x538] sm:$0xff]
  %v2784 = vld [vmem:[%s3 + $0x540] sm:$0xff]
  %v2785 = vld [vmem:[%s3 + $0x548] sm:$0xff]
  %v2786 = vld [vmem:[%s3 + $0x550] sm:$0xff]
  %v2787 = vld [vmem:[%s3 + $0x558] sm:$0xff]
  %v2788 = vld [vmem:[%s3 + $0x560] sm:$0xff]
  %v2789 = vld [vmem:[%s3 + $0x568] sm:$0xff]
  %v2790 = vld [vmem:[%s3 + $0x570] sm:$0xff]
  %v2791 = vld [vmem:[%s3 + $0x578] sm:$0xff]
  %v2792 = vld [vmem:[%s3 + $0x580] sm:$0xff]
  %v2793 = vld [vmem:[%s3 + $0x588] sm:$0xff]
  %v2794 = vld [vmem:[%s3 + $0x590] sm:$0xff]
  %v2795 = vld [vmem:[%s3 + $0x598] sm:$0xff]
  %v2796 = vld [vmem:[%s3 + $0x5a0] sm:$0xff]
  %v2797 = vld [vmem:[%s3 + $0x5a8] sm:$0xff]
  %v2798 = vld [vmem:[%s3 + $0x5b0] sm:$0xff]
  %v2799 = vld [vmem:[%s3 + $0x5b8] sm:$0xff]
  %v2800 = vld [vmem:[%s3 + $0x5c0] sm:$0xff]
  %v2801 = vld [vmem:[%s3 + $0x5c8] sm:$0xff]
  %v2802 = vld [vmem:[%s3 + $0x5d0] sm:$0xff]
  %v2803 = vld [vmem:[%s3 + $0x5d8] sm:$0xff]
  %v2804 = vld [vmem:[%s3 + $0x5e0] sm:$0xff]
  %v2805 = vld [vmem:[%s3 + $0x5e8] sm:$0xff]
  %v2806 = vld [vmem:[%s3 + $0x5f0] sm:$0xff]
  %v2807 = vld [vmem:[%s3 + $0x5f8] sm:$0xff]
  %v2808 = vld [vmem:[%s4] sm:$0xf]
  %v2810 = vlaneseq
  %v2811 = vshrl.u32 %v2810, 7
  %v2812 = vsub.s32 0, %v2811
  %v2813 = vrot.slane %v2808, %v2812
  %v2814 = vlaneseq
  %v2815 = vshrl.u32 %v2814, 7
  %v2816 = vsub.s32 1, %v2815
  %v2817 = vrot.slane %v2808, %v2816
  %v2818 = vlaneseq
  %v2819 = vshrl.u32 %v2818, 7
  %v2820 = vsub.s32 2, %v2819
  %v2821 = vrot.slane %v2808, %v2820
  %v2822 = vlaneseq
  %v2823 = vshrl.u32 %v2822, 7
  %v2824 = vsub.s32 3, %v2823
  %v2825 = vrot.slane %v2808, %v2824
  %v3022 = vunpack.c.l.b16 %v2616
  %v3023 = vunpack.c.h.b16 %v2616
  %v3024 = vunpack.c.l.b16 %v2617
  %v3025 = vunpack.c.h.b16 %v2617
  %v3026 = vunpack.c.l.b16 %v2618
  %v3027 = vunpack.c.h.b16 %v2618
  %v3028 = vunpack.c.l.b16 %v2619
  %v3029 = vunpack.c.h.b16 %v2619
  %v3030 = vunpack.c.l.b16 %v2620
  %v3031 = vunpack.c.h.b16 %v2620
  %v3032 = vunpack.c.l.b16 %v2621
  %v3033 = vunpack.c.h.b16 %v2621
  %v3034 = vunpack.c.l.b16 %v2622
  %v3035 = vunpack.c.h.b16 %v2622
  %v3036 = vunpack.c.l.b16 %v2623
  %v3037 = vunpack.c.h.b16 %v2623
  %v3038 = vunpack.c.l.b16 %v2624
  %v3039 = vunpack.c.h.b16 %v2624
  %v3040 = vunpack.c.l.b16 %v2625
  %v3041 = vunpack.c.h.b16 %v2625
  %v3042 = vunpack.c.l.b16 %v2626
  %v3043 = vunpack.c.h.b16 %v2626
  %v3044 = vunpack.c.l.b16 %v2627
  %v3045 = vunpack.c.h.b16 %v2627
  %v3046 = vunpack.c.l.b16 %v2628
  %v3047 = vunpack.c.h.b16 %v2628
  %v3048 = vunpack.c.l.b16 %v2629
  %v3049 = vunpack.c.h.b16 %v2629
  %v3050 = vunpack.c.l.b16 %v2630
  %v3051 = vunpack.c.h.b16 %v2630
  %v3052 = vunpack.c.l.b16 %v2631
  %v3053 = vunpack.c.h.b16 %v2631
  %v3054 = vunpack.c.l.b16 %v2632
  %v3055 = vunpack.c.h.b16 %v2632
  %v3056 = vunpack.c.l.b16 %v2633
  %v3057 = vunpack.c.h.b16 %v2633
  %v3058 = vunpack.c.l.b16 %v2634
  %v3059 = vunpack.c.h.b16 %v2634
  %v3060 = vunpack.c.l.b16 %v2635
  %v3061 = vunpack.c.h.b16 %v2635
  %v3062 = vunpack.c.l.b16 %v2636
  %v3063 = vunpack.c.h.b16 %v2636
  %v3064 = vunpack.c.l.b16 %v2637
  %v3065 = vunpack.c.h.b16 %v2637
  %v3066 = vunpack.c.l.b16 %v2638
  %v3067 = vunpack.c.h.b16 %v2638
  %v3068 = vunpack.c.l.b16 %v2639
  %v3069 = vunpack.c.h.b16 %v2639
  %v3070 = vunpack.c.l.b16 %v2640
  %v3071 = vunpack.c.h.b16 %v2640
  %v3072 = vunpack.c.l.b16 %v2641
  %v3073 = vunpack.c.h.b16 %v2641
  %v3074 = vunpack.c.l.b16 %v2642
  %v3075 = vunpack.c.h.b16 %v2642
  %v3076 = vunpack.c.l.b16 %v2643
  %v3077 = vunpack.c.h.b16 %v2643
  %v3078 = vunpack.c.l.b16 %v2644
  %v3079 = vunpack.c.h.b16 %v2644
  %v3080 = vunpack.c.l.b16 %v2645
  %v3081 = vunpack.c.h.b16 %v2645
  %v3082 = vunpack.c.l.b16 %v2646
  %v3083 = vunpack.c.h.b16 %v2646
  %v3084 = vunpack.c.l.b16 %v2647
  %v3085 = vunpack.c.h.b16 %v2647
  %v3086 = vunpack.c.l.b16 %v2648
  %v3087 = vunpack.c.h.b16 %v2648
  %v3088 = vunpack.c.l.b16 %v2649
  %v3089 = vunpack.c.h.b16 %v2649
  %v3090 = vunpack.c.l.b16 %v2650
  %v3091 = vunpack.c.h.b16 %v2650
  %v3092 = vunpack.c.l.b16 %v2651
  %v3093 = vunpack.c.h.b16 %v2651
  %v3094 = vunpack.c.l.b16 %v2652
  %v3095 = vunpack.c.h.b16 %v2652
  %v3096 = vunpack.c.l.b16 %v2653
  %v3097 = vunpack.c.h.b16 %v2653
  %v3098 = vunpack.c.l.b16 %v2654
  %v3099 = vunpack.c.h.b16 %v2654
  %v3100 = vunpack.c.l.b16 %v2655
  %v3101 = vunpack.c.h.b16 %v2655
  %v3102 = vunpack.c.l.b16 %v2656
  %v3103 = vunpack.c.h.b16 %v2656
  %v3104 = vunpack.c.l.b16 %v2657
  %v3105 = vunpack.c.h.b16 %v2657
  %v3106 = vunpack.c.l.b16 %v2658
  %v3107 = vunpack.c.h.b16 %v2658
  %v3108 = vunpack.c.l.b16 %v2659
  %v3109 = vunpack.c.h.b16 %v2659
  %v3110 = vunpack.c.l.b16 %v2660
  %v3111 = vunpack.c.h.b16 %v2660
  %v3112 = vunpack.c.l.b16 %v2661
  %v3113 = vunpack.c.h.b16 %v2661
  %v3114 = vunpack.c.l.b16 %v2662
  %v3115 = vunpack.c.h.b16 %v2662
  %v3116 = vunpack.c.l.b16 %v2663
  %v3117 = vunpack.c.h.b16 %v2663
  %v3118 = vunpack.c.l.b16 %v2664
  %v3119 = vunpack.c.h.b16 %v2664
  %v3120 = vunpack.c.l.b16 %v2665
  %v3121 = vunpack.c.h.b16 %v2665
  %v3122 = vunpack.c.l.b16 %v2666
  %v3123 = vunpack.c.h.b16 %v2666
  %v3124 = vunpack.c.l.b16 %v2667
  %v3125 = vunpack.c.h.b16 %v2667
  %v3126 = vunpack.c.l.b16 %v2668
  %v3127 = vunpack.c.h.b16 %v2668
  %v3128 = vunpack.c.l.b16 %v2669
  %v3129 = vunpack.c.h.b16 %v2669
  %v3130 = vunpack.c.l.b16 %v2670
  %v3131 = vunpack.c.h.b16 %v2670
  %v3132 = vunpack.c.l.b16 %v2671
  %v3133 = vunpack.c.h.b16 %v2671
  %v3134 = vunpack.c.l.b16 %v2672
  %v3135 = vunpack.c.h.b16 %v2672
  %v3136 = vunpack.c.l.b16 %v2673
  %v3137 = vunpack.c.h.b16 %v2673
  %v3138 = vunpack.c.l.b16 %v2674
  %v3139 = vunpack.c.h.b16 %v2674
  %v3140 = vunpack.c.l.b16 %v2675
  %v3141 = vunpack.c.h.b16 %v2675
  %v3142 = vunpack.c.l.b16 %v2676
  %v3143 = vunpack.c.h.b16 %v2676
  %v3144 = vunpack.c.l.b16 %v2677
  %v3145 = vunpack.c.h.b16 %v2677
  %v3146 = vunpack.c.l.b16 %v2678
  %v3147 = vunpack.c.h.b16 %v2678
  %v3148 = vunpack.c.l.b16 %v2679
  %v3149 = vunpack.c.h.b16 %v2679
  %v3150 = vunpack.c.l.b16 %v2680
  %v3151 = vunpack.c.h.b16 %v2680
  %v3152 = vunpack.c.l.b16 %v2681
  %v3153 = vunpack.c.h.b16 %v2681
  %v3154 = vunpack.c.l.b16 %v2682
  %v3155 = vunpack.c.h.b16 %v2682
  %v3156 = vunpack.c.l.b16 %v2683
  %v3157 = vunpack.c.h.b16 %v2683
  %v3158 = vunpack.c.l.b16 %v2684
  %v3159 = vunpack.c.h.b16 %v2684
  %v3160 = vunpack.c.l.b16 %v2685
  %v3161 = vunpack.c.h.b16 %v2685
  %v3162 = vunpack.c.l.b16 %v2686
  %v3163 = vunpack.c.h.b16 %v2686
  %v3164 = vunpack.c.l.b16 %v2687
  %v3165 = vunpack.c.h.b16 %v2687
  %v3166 = vunpack.c.l.b16 %v2688
  %v3167 = vunpack.c.h.b16 %v2688
  %v3168 = vunpack.c.l.b16 %v2689
  %v3169 = vunpack.c.h.b16 %v2689
  %v3170 = vunpack.c.l.b16 %v2690
  %v3171 = vunpack.c.h.b16 %v2690
  %v3172 = vunpack.c.l.b16 %v2691
  %v3173 = vunpack.c.h.b16 %v2691
  %v3174 = vunpack.c.l.b16 %v2692
  %v3175 = vunpack.c.h.b16 %v2692
  %v3176 = vunpack.c.l.b16 %v2693
  %v3177 = vunpack.c.h.b16 %v2693
  %v3178 = vunpack.c.l.b16 %v2694
  %v3179 = vunpack.c.h.b16 %v2694
  %v3180 = vunpack.c.l.b16 %v2695
  %v3181 = vunpack.c.h.b16 %v2695
  %v3182 = vunpack.c.l.b16 %v2696
  %v3183 = vunpack.c.h.b16 %v2696
  %v3184 = vunpack.c.l.b16 %v2697
  %v3185 = vunpack.c.h.b16 %v2697
  %v3186 = vunpack.c.l.b16 %v2698
  %v3187 = vunpack.c.h.b16 %v2698
  %v3188 = vunpack.c.l.b16 %v2699
  %v3189 = vunpack.c.h.b16 %v2699
  %v3190 = vunpack.c.l.b16 %v2700
  %v3191 = vunpack.c.h.b16 %v2700
  %v3192 = vunpack.c.l.b16 %v2701
  %v3193 = vunpack.c.h.b16 %v2701
  %v3194 = vunpack.c.l.b16 %v2702
  %v3195 = vunpack.c.h.b16 %v2702
  %v3196 = vunpack.c.l.b16 %v2703
  %v3197 = vunpack.c.h.b16 %v2703
  %v3198 = vunpack.c.l.b16 %v2704
  %v3199 = vunpack.c.h.b16 %v2704
  %v3200 = vunpack.c.l.b16 %v2705
  %v3201 = vunpack.c.h.b16 %v2705
  %v3202 = vunpack.c.l.b16 %v2706
  %v3203 = vunpack.c.h.b16 %v2706
  %v3204 = vunpack.c.l.b16 %v2707
  %v3205 = vunpack.c.h.b16 %v2707
  %v3206 = vunpack.c.l.b16 %v2708
  %v3207 = vunpack.c.h.b16 %v2708
  %v3208 = vunpack.c.l.b16 %v2709
  %v3209 = vunpack.c.h.b16 %v2709
  %v3210 = vunpack.c.l.b16 %v2710
  %v3211 = vunpack.c.h.b16 %v2710
  %v3212 = vunpack.c.l.b16 %v2711
  %v3213 = vunpack.c.h.b16 %v2711
  %v3214 = vunpack.c.l.b16 %v2712
  %v3215 = vunpack.c.h.b16 %v2712
  %v3216 = vunpack.c.l.b16 %v2713
  %v3217 = vunpack.c.h.b16 %v2713
  %v3218 = vunpack.c.l.b16 %v2714
  %v3219 = vunpack.c.h.b16 %v2714
  %v3220 = vunpack.c.l.b16 %v2715
  %v3221 = vunpack.c.h.b16 %v2715
  %v3222 = vunpack.c.l.b16 %v2716
  %v3223 = vunpack.c.h.b16 %v2716
  %v3224 = vunpack.c.l.b16 %v2717
  %v3225 = vunpack.c.h.b16 %v2717
  %v3226 = vunpack.c.l.b16 %v2718
  %v3227 = vunpack.c.h.b16 %v2718
  %v3228 = vunpack.c.l.b16 %v2719
  %v3229 = vunpack.c.h.b16 %v2719
  %v3230 = vunpack.c.l.b16 %v2720
  %v3231 = vunpack.c.h.b16 %v2720
  %v3232 = vunpack.c.l.b16 %v2721
  %v3233 = vunpack.c.h.b16 %v2721
  %v3234 = vunpack.c.l.b16 %v2722
  %v3235 = vunpack.c.h.b16 %v2722
  %v3236 = vunpack.c.l.b16 %v2723
  %v3237 = vunpack.c.h.b16 %v2723
  %v3238 = vunpack.c.l.b16 %v2724
  %v3239 = vunpack.c.h.b16 %v2724
  %v3240 = vunpack.c.l.b16 %v2725
  %v3241 = vunpack.c.h.b16 %v2725
  %v3242 = vunpack.c.l.b16 %v2726
  %v3243 = vunpack.c.h.b16 %v2726
  %v3244 = vunpack.c.l.b16 %v2727
  %v3245 = vunpack.c.h.b16 %v2727
  %v3246 = vunpack.c.l.b16 %v2728
  %v3247 = vunpack.c.h.b16 %v2728
  %v3248 = vunpack.c.l.b16 %v2729
  %v3249 = vunpack.c.h.b16 %v2729
  %v3250 = vunpack.c.l.b16 %v2730
  %v3251 = vunpack.c.h.b16 %v2730
  %v3252 = vunpack.c.l.b16 %v2731
  %v3253 = vunpack.c.h.b16 %v2731
  %v3254 = vunpack.c.l.b16 %v2732
  %v3255 = vunpack.c.h.b16 %v2732
  %v3256 = vunpack.c.l.b16 %v2733
  %v3257 = vunpack.c.h.b16 %v2733
  %v3258 = vunpack.c.l.b16 %v2734
  %v3259 = vunpack.c.h.b16 %v2734
  %v3260 = vunpack.c.l.b16 %v2735
  %v3261 = vunpack.c.h.b16 %v2735
  %v3262 = vunpack.c.l.b16 %v2736
  %v3263 = vunpack.c.h.b16 %v2736
  %v3264 = vunpack.c.l.b16 %v2737
  %v3265 = vunpack.c.h.b16 %v2737
  %v3266 = vunpack.c.l.b16 %v2738
  %v3267 = vunpack.c.h.b16 %v2738
  %v3268 = vunpack.c.l.b16 %v2739
  %v3269 = vunpack.c.h.b16 %v2739
  %v3270 = vunpack.c.l.b16 %v2740
  %v3271 = vunpack.c.h.b16 %v2740
  %v3272 = vunpack.c.l.b16 %v2741
  %v3273 = vunpack.c.h.b16 %v2741
  %v3274 = vunpack.c.l.b16 %v2742
  %v3275 = vunpack.c.h.b16 %v2742
  %v3276 = vunpack.c.l.b16 %v2743
  %v3277 = vunpack.c.h.b16 %v2743
  %v3278 = vunpack.c.l.b16 %v2744
  %v3279 = vunpack.c.h.b16 %v2744
  %v3280 = vunpack.c.l.b16 %v2745
  %v3281 = vunpack.c.h.b16 %v2745
  %v3282 = vunpack.c.l.b16 %v2746
  %v3283 = vunpack.c.h.b16 %v2746
  %v3284 = vunpack.c.l.b16 %v2747
  %v3285 = vunpack.c.h.b16 %v2747
  %v3286 = vunpack.c.l.b16 %v2748
  %v3287 = vunpack.c.h.b16 %v2748
  %v3288 = vunpack.c.l.b16 %v2749
  %v3289 = vunpack.c.h.b16 %v2749
  %v3290 = vunpack.c.l.b16 %v2750
  %v3291 = vunpack.c.h.b16 %v2750
  %v3292 = vunpack.c.l.b16 %v2751
  %v3293 = vunpack.c.h.b16 %v2751
  %v3294 = vunpack.c.l.b16 %v2752
  %v3295 = vunpack.c.h.b16 %v2752
  %v3296 = vunpack.c.l.b16 %v2753
  %v3297 = vunpack.c.h.b16 %v2753
  %v3298 = vunpack.c.l.b16 %v2754
  %v3299 = vunpack.c.h.b16 %v2754
  %v3300 = vunpack.c.l.b16 %v2755
  %v3301 = vunpack.c.h.b16 %v2755
  %v3302 = vunpack.c.l.b16 %v2756
  %v3303 = vunpack.c.h.b16 %v2756
  %v3304 = vunpack.c.l.b16 %v2757
  %v3305 = vunpack.c.h.b16 %v2757
  %v3306 = vunpack.c.l.b16 %v2758
  %v3307 = vunpack.c.h.b16 %v2758
  %v3308 = vunpack.c.l.b16 %v2759
  %v3309 = vunpack.c.h.b16 %v2759
  %v3310 = vunpack.c.l.b16 %v2760
  %v3311 = vunpack.c.h.b16 %v2760
  %v3312 = vunpack.c.l.b16 %v2761
  %v3313 = vunpack.c.h.b16 %v2761
  %v3314 = vunpack.c.l.b16 %v2762
  %v3315 = vunpack.c.h.b16 %v2762
  %v3316 = vunpack.c.l.b16 %v2763
  %v3317 = vunpack.c.h.b16 %v2763
  %v3318 = vunpack.c.l.b16 %v2764
  %v3319 = vunpack.c.h.b16 %v2764
  %v3320 = vunpack.c.l.b16 %v2765
  %v3321 = vunpack.c.h.b16 %v2765
  %v3322 = vunpack.c.l.b16 %v2766
  %v3323 = vunpack.c.h.b16 %v2766
  %v3324 = vunpack.c.l.b16 %v2767
  %v3325 = vunpack.c.h.b16 %v2767
  %v3326 = vunpack.c.l.b16 %v2768
  %v3327 = vunpack.c.h.b16 %v2768
  %v3328 = vunpack.c.l.b16 %v2769
  %v3329 = vunpack.c.h.b16 %v2769
  %v3330 = vunpack.c.l.b16 %v2770
  %v3331 = vunpack.c.h.b16 %v2770
  %v3332 = vunpack.c.l.b16 %v2771
  %v3333 = vunpack.c.h.b16 %v2771
  %v3334 = vunpack.c.l.b16 %v2772
  %v3335 = vunpack.c.h.b16 %v2772
  %v3336 = vunpack.c.l.b16 %v2773
  %v3337 = vunpack.c.h.b16 %v2773
  %v3338 = vunpack.c.l.b16 %v2774
  %v3339 = vunpack.c.h.b16 %v2774
  %v3340 = vunpack.c.l.b16 %v2775
  %v3341 = vunpack.c.h.b16 %v2775
  %v3342 = vunpack.c.l.b16 %v2776
  %v3343 = vunpack.c.h.b16 %v2776
  %v3344 = vunpack.c.l.b16 %v2777
  %v3345 = vunpack.c.h.b16 %v2777
  %v3346 = vunpack.c.l.b16 %v2778
  %v3347 = vunpack.c.h.b16 %v2778
  %v3348 = vunpack.c.l.b16 %v2779
  %v3349 = vunpack.c.h.b16 %v2779
  %v3350 = vunpack.c.l.b16 %v2780
  %v3351 = vunpack.c.h.b16 %v2780
  %v3352 = vunpack.c.l.b16 %v2781
  %v3353 = vunpack.c.h.b16 %v2781
  %v3354 = vunpack.c.l.b16 %v2782
  %v3355 = vunpack.c.h.b16 %v2782
  %v3356 = vunpack.c.l.b16 %v2783
  %v3357 = vunpack.c.h.b16 %v2783
  %v3358 = vunpack.c.l.b16 %v2784
  %v3359 = vunpack.c.h.b16 %v2784
  %v3360 = vunpack.c.l.b16 %v2785
  %v3361 = vunpack.c.h.b16 %v2785
  %v3362 = vunpack.c.l.b16 %v2786
  %v3363 = vunpack.c.h.b16 %v2786
  %v3364 = vunpack.c.l.b16 %v2787
  %v3365 = vunpack.c.h.b16 %v2787
  %v3366 = vunpack.c.l.b16 %v2788
  %v3367 = vunpack.c.h.b16 %v2788
  %v3368 = vunpack.c.l.b16 %v2789
  %v3369 = vunpack.c.h.b16 %v2789
  %v3370 = vunpack.c.l.b16 %v2790
  %v3371 = vunpack.c.h.b16 %v2790
  %v3372 = vunpack.c.l.b16 %v2791
  %v3373 = vunpack.c.h.b16 %v2791
  %v3374 = vunpack.c.l.b16 %v2792
  %v3375 = vunpack.c.h.b16 %v2792
  %v3376 = vunpack.c.l.b16 %v2793
  %v3377 = vunpack.c.h.b16 %v2793
  %v3378 = vunpack.c.l.b16 %v2794
  %v3379 = vunpack.c.h.b16 %v2794
  %v3380 = vunpack.c.l.b16 %v2795
  %v3381 = vunpack.c.h.b16 %v2795
  %v3382 = vunpack.c.l.b16 %v2796
  %v3383 = vunpack.c.h.b16 %v2796
  %v3384 = vunpack.c.l.b16 %v2797
  %v3385 = vunpack.c.h.b16 %v2797
  %v3386 = vunpack.c.l.b16 %v2798
  %v3387 = vunpack.c.h.b16 %v2798
  %v3388 = vunpack.c.l.b16 %v2799
  %v3389 = vunpack.c.h.b16 %v2799
  %v3390 = vunpack.c.l.b16 %v2800
  %v3391 = vunpack.c.h.b16 %v2800
  %v3392 = vunpack.c.l.b16 %v2801
  %v3393 = vunpack.c.h.b16 %v2801
  %v3394 = vunpack.c.l.b16 %v2802
  %v3395 = vunpack.c.h.b16 %v2802
  %v3396 = vunpack.c.l.b16 %v2803
  %v3397 = vunpack.c.h.b16 %v2803
  %v3398 = vunpack.c.l.b16 %v2804
  %v3399 = vunpack.c.h.b16 %v2804
  %v3400 = vunpack.c.l.b16 %v2805
  %v3401 = vunpack.c.h.b16 %v2805
  %v3402 = vunpack.c.l.b16 %v2806
  %v3403 = vunpack.c.h.b16 %v2806
  %v3404 = vunpack.c.l.b16 %v2807
  %v3405 = vunpack.c.h.b16 %v2807
  %v3406 = vpack.c.b16 %v3026, %v3022
  %v3407 = vpack.c.b16 %v3027, %v3023
  %v3408 = vpack.c.b16 %v3028, %v3024
  %v3409 = vpack.c.b16 %v3029, %v3025
  %v3410 = vpack.c.b16 %v3034, %v3030
  %v3411 = vpack.c.b16 %v3035, %v3031
  %v3412 = vpack.c.b16 %v3036, %v3032
  %v3413 = vpack.c.b16 %v3037, %v3033
  %v3414 = vpack.c.b16 %v3042, %v3038
  %v3415 = vpack.c.b16 %v3043, %v3039
  %v3416 = vpack.c.b16 %v3044, %v3040
  %v3417 = vpack.c.b16 %v3045, %v3041
  %v3418 = vpack.c.b16 %v3050, %v3046
  %v3419 = vpack.c.b16 %v3051, %v3047
  %v3420 = vpack.c.b16 %v3052, %v3048
  %v3421 = vpack.c.b16 %v3053, %v3049
  %v3422 = vpack.c.b16 %v3058, %v3054
  %v3423 = vpack.c.b16 %v3059, %v3055
  %v3424 = vpack.c.b16 %v3060, %v3056
  %v3425 = vpack.c.b16 %v3061, %v3057
  %v3426 = vpack.c.b16 %v3066, %v3062
  %v3427 = vpack.c.b16 %v3067, %v3063
  %v3428 = vpack.c.b16 %v3068, %v3064
  %v3429 = vpack.c.b16 %v3069, %v3065
  %v3430 = vpack.c.b16 %v3074, %v3070
  %v3431 = vpack.c.b16 %v3075, %v3071
  %v3432 = vpack.c.b16 %v3076, %v3072
  %v3433 = vpack.c.b16 %v3077, %v3073
  %v3434 = vpack.c.b16 %v3082, %v3078
  %v3435 = vpack.c.b16 %v3083, %v3079
  %v3436 = vpack.c.b16 %v3084, %v3080
  %v3437 = vpack.c.b16 %v3085, %v3081
  %v3438 = vpack.c.b16 %v3090, %v3086
  %v3439 = vpack.c.b16 %v3091, %v3087
  %v3440 = vpack.c.b16 %v3092, %v3088
  %v3441 = vpack.c.b16 %v3093, %v3089
  %v3442 = vpack.c.b16 %v3098, %v3094
  %v3443 = vpack.c.b16 %v3099, %v3095
  %v3444 = vpack.c.b16 %v3100, %v3096
  %v3445 = vpack.c.b16 %v3101, %v3097
  %v3446 = vpack.c.b16 %v3106, %v3102
  %v3447 = vpack.c.b16 %v3107, %v3103
  %v3448 = vpack.c.b16 %v3108, %v3104
  %v3449 = vpack.c.b16 %v3109, %v3105
  %v3450 = vpack.c.b16 %v3114, %v3110
  %v3451 = vpack.c.b16 %v3115, %v3111
  %v3452 = vpack.c.b16 %v3116, %v3112
  %v3453 = vpack.c.b16 %v3117, %v3113
  %v3454 = vpack.c.b16 %v3122, %v3118
  %v3455 = vpack.c.b16 %v3123, %v3119
  %v3456 = vpack.c.b16 %v3124, %v3120
  %v3457 = vpack.c.b16 %v3125, %v3121
  %v3458 = vpack.c.b16 %v3130, %v3126
  %v3459 = vpack.c.b16 %v3131, %v3127
  %v3460 = vpack.c.b16 %v3132, %v3128
  %v3461 = vpack.c.b16 %v3133, %v3129
  %v3462 = vpack.c.b16 %v3138, %v3134
  %v3463 = vpack.c.b16 %v3139, %v3135
  %v3464 = vpack.c.b16 %v3140, %v3136
  %v3465 = vpack.c.b16 %v3141, %v3137
  %v3466 = vpack.c.b16 %v3146, %v3142
  %v3467 = vpack.c.b16 %v3147, %v3143
  %v3468 = vpack.c.b16 %v3148, %v3144
  %v3469 = vpack.c.b16 %v3149, %v3145
  %v3470 = vpack.c.b16 %v3154, %v3150
  %v3471 = vpack.c.b16 %v3155, %v3151
  %v3472 = vpack.c.b16 %v3156, %v3152
  %v3473 = vpack.c.b16 %v3157, %v3153
  %v3474 = vpack.c.b16 %v3162, %v3158
  %v3475 = vpack.c.b16 %v3163, %v3159
  %v3476 = vpack.c.b16 %v3164, %v3160
  %v3477 = vpack.c.b16 %v3165, %v3161
  %v3478 = vpack.c.b16 %v3170, %v3166
  %v3479 = vpack.c.b16 %v3171, %v3167
  %v3480 = vpack.c.b16 %v3172, %v3168
  %v3481 = vpack.c.b16 %v3173, %v3169
  %v3482 = vpack.c.b16 %v3178, %v3174
  %v3483 = vpack.c.b16 %v3179, %v3175
  %v3484 = vpack.c.b16 %v3180, %v3176
  %v3485 = vpack.c.b16 %v3181, %v3177
  %v3486 = vpack.c.b16 %v3186, %v3182
  %v3487 = vpack.c.b16 %v3187, %v3183
  %v3488 = vpack.c.b16 %v3188, %v3184
  %v3489 = vpack.c.b16 %v3189, %v3185
  %v3490 = vpack.c.b16 %v3194, %v3190
  %v3491 = vpack.c.b16 %v3195, %v3191
  %v3492 = vpack.c.b16 %v3196, %v3192
  %v3493 = vpack.c.b16 %v3197, %v3193
  %v3494 = vpack.c.b16 %v3202, %v3198
  %v3495 = vpack.c.b16 %v3203, %v3199
  %v3496 = vpack.c.b16 %v3204, %v3200
  %v3497 = vpack.c.b16 %v3205, %v3201
  %v3498 = vpack.c.b16 %v3210, %v3206
  %v3499 = vpack.c.b16 %v3211, %v3207
  %v3500 = vpack.c.b16 %v3212, %v3208
  %v3501 = vpack.c.b16 %v3213, %v3209
  %v3502 = vpack.c.b16 %v3218, %v3214
  %v3503 = vpack.c.b16 %v3219, %v3215
  %v3504 = vpack.c.b16 %v3220, %v3216
  %v3505 = vpack.c.b16 %v3221, %v3217
  %v3506 = vpack.c.b16 %v3226, %v3222
  %v3507 = vpack.c.b16 %v3227, %v3223
  %v3508 = vpack.c.b16 %v3228, %v3224
  %v3509 = vpack.c.b16 %v3229, %v3225
  %v3510 = vpack.c.b16 %v3234, %v3230
  %v3511 = vpack.c.b16 %v3235, %v3231
  %v3512 = vpack.c.b16 %v3236, %v3232
  %v3513 = vpack.c.b16 %v3237, %v3233
  %v3514 = vpack.c.b16 %v3242, %v3238
  %v3515 = vpack.c.b16 %v3243, %v3239
  %v3516 = vpack.c.b16 %v3244, %v3240
  %v3517 = vpack.c.b16 %v3245, %v3241
  %v3518 = vpack.c.b16 %v3250, %v3246
  %v3519 = vpack.c.b16 %v3251, %v3247
  %v3520 = vpack.c.b16 %v3252, %v3248
  %v3521 = vpack.c.b16 %v3253, %v3249
  %v3522 = vpack.c.b16 %v3258, %v3254
  %v3523 = vpack.c.b16 %v3259, %v3255
  %v3524 = vpack.c.b16 %v3260, %v3256
  %v3525 = vpack.c.b16 %v3261, %v3257
  %v3526 = vpack.c.b16 %v3266, %v3262
  %v3527 = vpack.c.b16 %v3267, %v3263
  %v3528 = vpack.c.b16 %v3268, %v3264
  %v3529 = vpack.c.b16 %v3269, %v3265
  %v3530 = vpack.c.b16 %v3274, %v3270
  %v3531 = vpack.c.b16 %v3275, %v3271
  %v3532 = vpack.c.b16 %v3276, %v3272
  %v3533 = vpack.c.b16 %v3277, %v3273
  %v3534 = vpack.c.b16 %v3282, %v3278
  %v3535 = vpack.c.b16 %v3283, %v3279
  %v3536 = vpack.c.b16 %v3284, %v3280
  %v3537 = vpack.c.b16 %v3285, %v3281
  %v3538 = vpack.c.b16 %v3290, %v3286
  %v3539 = vpack.c.b16 %v3291, %v3287
  %v3540 = vpack.c.b16 %v3292, %v3288
  %v3541 = vpack.c.b16 %v3293, %v3289
  %v3542 = vpack.c.b16 %v3298, %v3294
  %v3543 = vpack.c.b16 %v3299, %v3295
  %v3544 = vpack.c.b16 %v3300, %v3296
  %v3545 = vpack.c.b16 %v3301, %v3297
  %v3546 = vpack.c.b16 %v3306, %v3302
  %v3547 = vpack.c.b16 %v3307, %v3303
  %v3548 = vpack.c.b16 %v3308, %v3304
  %v3549 = vpack.c.b16 %v3309, %v3305
  %v3550 = vpack.c.b16 %v3314, %v3310
  %v3551 = vpack.c.b16 %v3315, %v3311
  %v3552 = vpack.c.b16 %v3316, %v3312
  %v3553 = vpack.c.b16 %v3317, %v3313
  %v3554 = vpack.c.b16 %v3322, %v3318
  %v3555 = vpack.c.b16 %v3323, %v3319
  %v3556 = vpack.c.b16 %v3324, %v3320
  %v3557 = vpack.c.b16 %v3325, %v3321
  %v3558 = vpack.c.b16 %v3330, %v3326
  %v3559 = vpack.c.b16 %v3331, %v3327
  %v3560 = vpack.c.b16 %v3332, %v3328
  %v3561 = vpack.c.b16 %v3333, %v3329
  %v3562 = vpack.c.b16 %v3338, %v3334
  %v3563 = vpack.c.b16 %v3339, %v3335
  %v3564 = vpack.c.b16 %v3340, %v3336
  %v3565 = vpack.c.b16 %v3341, %v3337
  %v3566 = vpack.c.b16 %v3346, %v3342
  %v3567 = vpack.c.b16 %v3347, %v3343
  %v3568 = vpack.c.b16 %v3348, %v3344
  %v3569 = vpack.c.b16 %v3349, %v3345
  %v3570 = vpack.c.b16 %v3354, %v3350
  %v3571 = vpack.c.b16 %v3355, %v3351
  %v3572 = vpack.c.b16 %v3356, %v3352
  %v3573 = vpack.c.b16 %v3357, %v3353
  %v3574 = vpack.c.b16 %v3362, %v3358
  %v3575 = vpack.c.b16 %v3363, %v3359
  %v3576 = vpack.c.b16 %v3364, %v3360
  %v3577 = vpack.c.b16 %v3365, %v3361
  %v3578 = vpack.c.b16 %v3370, %v3366
  %v3579 = vpack.c.b16 %v3371, %v3367
  %v3580 = vpack.c.b16 %v3372, %v3368
  %v3581 = vpack.c.b16 %v3373, %v3369
  %v3582 = vpack.c.b16 %v3378, %v3374
  %v3583 = vpack.c.b16 %v3379, %v3375
  %v3584 = vpack.c.b16 %v3380, %v3376
  %v3585 = vpack.c.b16 %v3381, %v3377
  %v3586 = vpack.c.b16 %v3386, %v3382
  %v3587 = vpack.c.b16 %v3387, %v3383
  %v3588 = vpack.c.b16 %v3388, %v3384
  %v3589 = vpack.c.b16 %v3389, %v3385
  %v3590 = vpack.c.b16 %v3394, %v3390
  %v3591 = vpack.c.b16 %v3395, %v3391
  %v3592 = vpack.c.b16 %v3396, %v3392
  %v3593 = vpack.c.b16 %v3397, %v3393
  %v3594 = vpack.c.b16 %v3402, %v3398
  %v3595 = vpack.c.b16 %v3403, %v3399
  %v3596 = vpack.c.b16 %v3404, %v3400
  %v3597 = vpack.c.b16 %v3405, %v3401
  %3790 = vmatprep.subr.bf16.mxu0 %v3435
  %3791 = vmatpush1.bf16.msra.mxu0 %v3434
  %3792 = vmatprep.subr.bf16.mxu0 %v3431
  %3793 = vmatpush1.bf16.msra.mxu0 %v3430
  %3794 = vmatprep.subr.bf16.mxu0 %v3427
  %3795 = vmatpush1.bf16.msra.mxu0 %v3426
  %3796 = vmatprep.subr.bf16.mxu0 %v3423
  %3797 = vmatpush1.bf16.msra.mxu0 %v3422
  %3798 = vmatprep.subr.bf16.mxu0 %v3419
  %3799 = vmatpush1.bf16.msra.mxu0 %v3418
  %3800 = vmatprep.subr.bf16.mxu0 %v3415
  %3801 = vmatpush1.bf16.msra.mxu0 %v3414
  %3802 = vmatprep.subr.bf16.mxu0 %v3411
  %3803 = vmatpush1.bf16.msra.mxu0 %v3410
  %3804 = vmatprep.subr.bf16.mxu0 %v3407
  %3805 = vmatpush1.bf16.msra.mxu0 %v3406
  %3806 = vmatprep.subr.bf16.mxu0 %v3467
  %3807 = vmatpush2.bf16.msra.mxu0 %v3466
  %3808 = vmatprep.subr.bf16.mxu0 %v3463
  %3809 = vmatpush2.bf16.msra.mxu0 %v3462
  %3810 = vmatprep.subr.bf16.mxu0 %v3459
  %3811 = vmatpush2.bf16.msra.mxu0 %v3458
  %3812 = vmatprep.subr.bf16.mxu0 %v3455
  %3813 = vmatpush2.bf16.msra.mxu0 %v3454
  %3814 = vmatprep.subr.bf16.mxu0 %v3451
  %3815 = vmatpush2.bf16.msra.mxu0 %v3450
  %3816 = vmatprep.subr.bf16.mxu0 %v3447
  %3817 = vmatpush2.bf16.msra.mxu0 %v3446
  %3818 = vmatprep.subr.bf16.mxu0 %v3443
  %3819 = vmatpush2.bf16.msra.mxu0 %v3442
  %3820 = vmatprep.subr.bf16.mxu0 %v3439
  %3821 = vmatpush2.bf16.msra.mxu0 %v3438
  %3822 = vmatprep.mubr.bf16.mxu0 %v2601
  %3823 = vmatmul.mubr.bf16.gmra.mxu0 %v2600
  %v3824 = vpop.f32.mrf.mxu0
  %v3825 = vadd.f32 %v2813, %v3824
  %v3826 = vpop.f32.mrf.mxu0
  %v3827 = vadd.f32 %v2817, %v3826
  %v3828 = vpop.f32.mrf.mxu0
  %v3829 = vadd.f32 %v2813, %v3828
  %v3830 = vpop.f32.mrf.mxu0
  %v3831 = vadd.f32 %v2817, %v3830
  %3832 = vmatprep.mubr.bf16.mxu0 %v2605
  %3833 = vmatmul.mubr.bf16.gmra.mxu0 %v2604
  %v3834 = vpop.f32.mrf.mxu0
  %v3835 = vadd.f32 %v2813, %v3834
  %v3836 = vpop.f32.mrf.mxu0
  %v3837 = vadd.f32 %v2817, %v3836
  %v3838 = vpop.f32.mrf.mxu0
  %v3839 = vadd.f32 %v2813, %v3838
  %v3840 = vpop.f32.mrf.mxu0
  %v3841 = vadd.f32 %v2817, %v3840
  %3842 = vmatprep.mubr.bf16.mxu0 %v2609
  %3843 = vmatmul.mubr.bf16.gmra.mxu0 %v2608
  %v3844 = vpop.f32.mrf.mxu0
  %v3845 = vadd.f32 %v2813, %v3844
  %v3846 = vpop.f32.mrf.mxu0
  %v3847 = vadd.f32 %v2817, %v3846
  %v3848 = vpop.f32.mrf.mxu0
  %v3849 = vadd.f32 %v2813, %v3848
  %v3850 = vpop.f32.mrf.mxu0
  %v3851 = vadd.f32 %v2817, %v3850
  %3852 = vmatprep.mubr.bf16.mxu0 %v2613
  %3853 = vmatmul.mubr.bf16.gmra.mxu0 %v2612
  %v3854 = vpop.f32.mrf.mxu0
  %v3855 = vadd.f32 %v2813, %v3854
  %v3856 = vpop.f32.mrf.mxu0
  %v3857 = vadd.f32 %v2817, %v3856
  %v3858 = vpop.f32.mrf.mxu0
  %v3859 = vadd.f32 %v2813, %v3858
  %v3860 = vpop.f32.mrf.mxu0
  %v3861 = vadd.f32 %v2817, %v3860
  %3862 = vdwg.mxu0
  %3863 = vmatprep.subr.bf16.mxu0 %v3499
  %3864 = vmatpush1.bf16.msra.mxu0 %v3498
  %3865 = vmatprep.subr.bf16.mxu0 %v3495
  %3866 = vmatpush1.bf16.msra.mxu0 %v3494
  %3867 = vmatprep.subr.bf16.mxu0 %v3491
  %3868 = vmatpush1.bf16.msra.mxu0 %v3490
  %3869 = vmatprep.subr.bf16.mxu0 %v3487
  %3870 = vmatpush1.bf16.msra.mxu0 %v3486
  %3871 = vmatprep.subr.bf16.mxu0 %v3483
  %3872 = vmatpush1.bf16.msra.mxu0 %v3482
  %3873 = vmatprep.subr.bf16.mxu0 %v3479
  %3874 = vmatpush1.bf16.msra.mxu0 %v3478
  %3875 = vmatprep.subr.bf16.mxu0 %v3475
  %3876 = vmatpush1.bf16.msra.mxu0 %v3474
  %3877 = vmatprep.subr.bf16.mxu0 %v3471
  %3878 = vmatpush1.bf16.msra.mxu0 %v3470
  %3879 = vmatprep.subr.bf16.mxu0 %v3531
  %3880 = vmatpush2.bf16.msra.mxu0 %v3530
  %3881 = vmatprep.subr.bf16.mxu0 %v3527
  %3882 = vmatpush2.bf16.msra.mxu0 %v3526
  %3883 = vmatprep.subr.bf16.mxu0 %v3523
  %3884 = vmatpush2.bf16.msra.mxu0 %v3522
  %3885 = vmatprep.subr.bf16.mxu0 %v3519
  %3886 = vmatpush2.bf16.msra.mxu0 %v3518
  %3887 = vmatprep.subr.bf16.mxu0 %v3515
  %3888 = vmatpush2.bf16.msra.mxu0 %v3514
  %3889 = vmatprep.subr.bf16.mxu0 %v3511
  %3890 = vmatpush2.bf16.msra.mxu0 %v3510
  %3891 = vmatprep.subr.bf16.mxu0 %v3507
  %3892 = vmatpush2.bf16.msra.mxu0 %v3506
  %3893 = vmatprep.subr.bf16.mxu0 %v3503
  %3894 = vmatpush2.bf16.msra.mxu0 %v3502
  %3895 = vmatprep.mubr.bf16.mxu0 %v2603
  %3896 = vmatmul.mubr.bf16.gmra.mxu0 %v2602
  %v3897 = vpop.f32.mrf.mxu0
  %v3898 = vadd.f32 %v3825, %v3897
  %v3899 = vpop.f32.mrf.mxu0
  %v3900 = vadd.f32 %v3827, %v3899
  %v3901 = vpop.f32.mrf.mxu0
  %v3902 = vadd.f32 %v3829, %v3901
  %v3903 = vpop.f32.mrf.mxu0
  %v3904 = vadd.f32 %v3831, %v3903
  %3905 = vmatprep.mubr.bf16.mxu0 %v2607
  %3906 = vmatmul.mubr.bf16.gmra.mxu0 %v2606
  %v3907 = vpop.f32.mrf.mxu0
  %v3908 = vadd.f32 %v3835, %v3907
  %v3909 = vpop.f32.mrf.mxu0
  %v3910 = vadd.f32 %v3837, %v3909
  %v3911 = vpop.f32.mrf.mxu0
  %v3912 = vadd.f32 %v3839, %v3911
  %v3913 = vpop.f32.mrf.mxu0
  %v3914 = vadd.f32 %v3841, %v3913
  %3915 = vmatprep.mubr.bf16.mxu0 %v2611
  %3916 = vmatmul.mubr.bf16.gmra.mxu0 %v2610
  %v3917 = vpop.f32.mrf.mxu0
  %v3918 = vadd.f32 %v3845, %v3917
  %v3919 = vpop.f32.mrf.mxu0
  %v3920 = vadd.f32 %v3847, %v3919
  %v3921 = vpop.f32.mrf.mxu0
  %v3922 = vadd.f32 %v3849, %v3921
  %v3923 = vpop.f32.mrf.mxu0
  %v3924 = vadd.f32 %v3851, %v3923
  %3925 = vmatprep.mubr.bf16.mxu0 %v2615
  %3926 = vmatmul.mubr.bf16.gmra.mxu0 %v2614
  %v3927 = vpop.f32.mrf.mxu0
  %v3928 = vadd.f32 %v3855, %v3927
  %v3929 = vpop.f32.mrf.mxu0
  %v3930 = vadd.f32 %v3857, %v3929
  %v3931 = vpop.f32.mrf.mxu0
  %v3932 = vadd.f32 %v3859, %v3931
  %v3933 = vpop.f32.mrf.mxu0
  %v3934 = vadd.f32 %v3861, %v3933
  %3935 = vdwg.mxu0
  %3936 = vmatprep.subr.bf16.mxu0 %v3563
  %3937 = vmatpush1.bf16.msra.mxu0 %v3562
  %3938 = vmatprep.subr.bf16.mxu0 %v3559
  %3939 = vmatpush1.bf16.msra.mxu0 %v3558
  %3940 = vmatprep.subr.bf16.mxu0 %v3555
  %3941 = vmatpush1.bf16.msra.mxu0 %v3554
  %3942 = vmatprep.subr.bf16.mxu0 %v3551
  %3943 = vmatpush1.bf16.msra.mxu0 %v3550
  %3944 = vmatprep.subr.bf16.mxu0 %v3547
  %3945 = vmatpush1.bf16.msra.mxu0 %v3546
  %3946 = vmatprep.subr.bf16.mxu0 %v3543
  %3947 = vmatpush1.bf16.msra.mxu0 %v3542
  %3948 = vmatprep.subr.bf16.mxu0 %v3539
  %3949 = vmatpush1.bf16.msra.mxu0 %v3538
  %3950 = vmatprep.subr.bf16.mxu0 %v3535
  %3951 = vmatpush1.bf16.msra.mxu0 %v3534
  %3952 = vmatprep.subr.bf16.mxu0 %v3595
  %3953 = vmatpush2.bf16.msra.mxu0 %v3594
  %3954 = vmatprep.subr.bf16.mxu0 %v3591
  %3955 = vmatpush2.bf16.msra.mxu0 %v3590
  %3956 = vmatprep.subr.bf16.mxu0 %v3587
  %3957 = vmatpush2.bf16.msra.mxu0 %v3586
  %3958 = vmatprep.subr.bf16.mxu0 %v3583
  %3959 = vmatpush2.bf16.msra.mxu0 %v3582
  %3960 = vmatprep.subr.bf16.mxu0 %v3579
  %3961 = vmatpush2.bf16.msra.mxu0 %v3578
  %3962 = vmatprep.subr.bf16.mxu0 %v3575
  %3963 = vmatpush2.bf16.msra.mxu0 %v3574
  %3964 = vmatprep.subr.bf16.mxu0 %v3571
  %3965 = vmatpush2.bf16.msra.mxu0 %v3570
  %3966 = vmatprep.subr.bf16.mxu0 %v3567
  %3967 = vmatpush2.bf16.msra.mxu0 %v3566
  %3968 = vmatprep.mubr.bf16.mxu0 %v2605
  %3969 = vmatmul.mubr.bf16.gmra.mxu0 %v2604
  %v3970 = vpop.f32.mrf.mxu0
  %v3971 = vadd.f32 %v3898, %v3970
  %v3972 = vpop.f32.mrf.mxu0
  %v3973 = vadd.f32 %v3900, %v3972
  %v3974 = vpop.f32.mrf.mxu0
  %v3975 = vadd.f32 %v3902, %v3974
  %v3976 = vpop.f32.mrf.mxu0
  %v3977 = vadd.f32 %v3904, %v3976
  %3978 = vmatprep.mubr.bf16.mxu0 %v2609
  %3979 = vmatmul.mubr.bf16.gmra.mxu0 %v2608
  %v3980 = vpop.f32.mrf.mxu0
  %v3981 = vadd.f32 %v3908, %v3980
  %v3982 = vpop.f32.mrf.mxu0
  %v3983 = vadd.f32 %v3910, %v3982
  %v3984 = vpop.f32.mrf.mxu0
  %v3985 = vadd.f32 %v3912, %v3984
  %v3986 = vpop.f32.mrf.mxu0
  %v3987 = vadd.f32 %v3914, %v3986
  %3988 = vmatprep.mubr.bf16.mxu0 %v2613
  %3989 = vmatmul.mubr.bf16.gmra.mxu0 %v2612
  %v3990 = vpop.f32.mrf.mxu0
  %v3991 = vadd.f32 %v3918, %v3990
  %v3992 = vpop.f32.mrf.mxu0
  %v3993 = vadd.f32 %v3920, %v3992
  %v3994 = vpop.f32.mrf.mxu0
  %v3995 = vadd.f32 %v3922, %v3994
  %v3996 = vpop.f32.mrf.mxu0
  %v3997 = vadd.f32 %v3924, %v3996
  %3998 = vmatprep.mubr.bf16.mxu0 %v2601
  %3999 = vmatmul.mubr.bf16.gmra.mxu0 %v2600
  %v4000 = vpop.f32.mrf.mxu0
  %v4001 = vadd.f32 %v3928, %v4000
  %v4002 = vpop.f32.mrf.mxu0
  %v4003 = vadd.f32 %v3930, %v4002
  %v4004 = vpop.f32.mrf.mxu0
  %v4005 = vadd.f32 %v3932, %v4004
  %v4006 = vpop.f32.mrf.mxu0
  %v4007 = vadd.f32 %v3934, %v4006
  %4008 = vdwg.mxu0
  %4009 = vmatprep.subr.bf16.mxu0 %v3437
  %4010 = vmatpush1.bf16.msra.mxu0 %v3436
  %4011 = vmatprep.subr.bf16.mxu0 %v3433
  %4012 = vmatpush1.bf16.msra.mxu0 %v3432
  %4013 = vmatprep.subr.bf16.mxu0 %v3429
  %4014 = vmatpush1.bf16.msra.mxu0 %v3428
  %4015 = vmatprep.subr.bf16.mxu0 %v3425
  %4016 = vmatpush1.bf16.msra.mxu0 %v3424
  %4017 = vmatprep.subr.bf16.mxu0 %v3421
  %4018 = vmatpush1.bf16.msra.mxu0 %v3420
  %4019 = vmatprep.subr.bf16.mxu0 %v3417
  %4020 = vmatpush1.bf16.msra.mxu0 %v3416
  %4021 = vmatprep.subr.bf16.mxu0 %v3413
  %4022 = vmatpush1.bf16.msra.mxu0 %v3412
  %4023 = vmatprep.subr.bf16.mxu0 %v3409
  %4024 = vmatpush1.bf16.msra.mxu0 %v3408
  %4025 = vmatprep.subr.bf16.mxu0 %v3469
  %4026 = vmatpush2.bf16.msra.mxu0 %v3468
  %4027 = vmatprep.subr.bf16.mxu0 %v3465
  %4028 = vmatpush2.bf16.msra.mxu0 %v3464
  %4029 = vmatprep.subr.bf16.mxu0 %v3461
  %4030 = vmatpush2.bf16.msra.mxu0 %v3460
  %4031 = vmatprep.subr.bf16.mxu0 %v3457
  %4032 = vmatpush2.bf16.msra.mxu0 %v3456
  %4033 = vmatprep.subr.bf16.mxu0 %v3453
  %4034 = vmatpush2.bf16.msra.mxu0 %v3452
  %4035 = vmatprep.subr.bf16.mxu0 %v3449
  %4036 = vmatpush2.bf16.msra.mxu0 %v3448
  %4037 = vmatprep.subr.bf16.mxu0 %v3445
  %4038 = vmatpush2.bf16.msra.mxu0 %v3444
  %4039 = vmatprep.subr.bf16.mxu0 %v3441
  %4040 = vmatpush2.bf16.msra.mxu0 %v3440
  %4041 = vmatprep.mubr.bf16.mxu0 %v2601
  %4042 = vmatmul.mubr.bf16.gmra.mxu0 %v2600
  %v4043 = vpop.f32.mrf.mxu0
  %v4044 = vadd.f32 %v2821, %v4043
  %v4045 = vpop.f32.mrf.mxu0
  %v4046 = vadd.f32 %v2825, %v4045
  %v4047 = vpop.f32.mrf.mxu0
  %v4048 = vadd.f32 %v2821, %v4047
  %v4049 = vpop.f32.mrf.mxu0
  %v4050 = vadd.f32 %v2825, %v4049
  %4051 = vmatprep.mubr.bf16.mxu0 %v2605
  %4052 = vmatmul.mubr.bf16.gmra.mxu0 %v2604
  %v4053 = vpop.f32.mrf.mxu0
  %v4054 = vadd.f32 %v2821, %v4053
  %v4055 = vpop.f32.mrf.mxu0
  %v4056 = vadd.f32 %v2825, %v4055
  %v4057 = vpop.f32.mrf.mxu0
  %v4058 = vadd.f32 %v2821, %v4057
  %v4059 = vpop.f32.mrf.mxu0
  %v4060 = vadd.f32 %v2825, %v4059
  %4061 = vmatprep.mubr.bf16.mxu0 %v2609
  %4062 = vmatmul.mubr.bf16.gmra.mxu0 %v2608
  %v4063 = vpop.f32.mrf.mxu0
  %v4064 = vadd.f32 %v2821, %v4063
  %v4065 = vpop.f32.mrf.mxu0
  %v4066 = vadd.f32 %v2825, %v4065
  %v4067 = vpop.f32.mrf.mxu0
  %v4068 = vadd.f32 %v2821, %v4067
  %v4069 = vpop.f32.mrf.mxu0
  %v4070 = vadd.f32 %v2825, %v4069
  %4071 = vmatprep.mubr.bf16.mxu0 %v2613
  %4072 = vmatmul.mubr.bf16.gmra.mxu0 %v2612
  %v4073 = vpop.f32.mrf.mxu0
  %v4074 = vadd.f32 %v2821, %v4073
  %v4075 = vpop.f32.mrf.mxu0
  %v4076 = vadd.f32 %v2825, %v4075
  %v4077 = vpop.f32.mrf.mxu0
  %v4078 = vadd.f32 %v2821, %v4077
  %v4079 = vpop.f32.mrf.mxu0
  %v4080 = vadd.f32 %v2825, %v4079
  %4081 = vdwg.mxu0
  %4082 = vmatprep.subr.bf16.mxu0 %v3501
  %4083 = vmatpush1.bf16.msra.mxu0 %v3500
  %4084 = vmatprep.subr.bf16.mxu0 %v3497
  %4085 = vmatpush1.bf16.msra.mxu0 %v3496
  %4086 = vmatprep.subr.bf16.mxu0 %v3493
  %4087 = vmatpush1.bf16.msra.mxu0 %v3492
  %4088 = vmatprep.subr.bf16.mxu0 %v3489
  %4089 = vmatpush1.bf16.msra.mxu0 %v3488
  %4090 = vmatprep.subr.bf16.mxu0 %v3485
  %4091 = vmatpush1.bf16.msra.mxu0 %v3484
  %4092 = vmatprep.subr.bf16.mxu0 %v3481
  %4093 = vmatpush1.bf16.msra.mxu0 %v3480
  %4094 = vmatprep.subr.bf16.mxu0 %v3477
  %4095 = vmatpush1.bf16.msra.mxu0 %v3476
  %4096 = vmatprep.subr.bf16.mxu0 %v3473
  %4097 = vmatpush1.bf16.msra.mxu0 %v3472
  %4098 = vmatprep.subr.bf16.mxu0 %v3533
  %4099 = vmatpush2.bf16.msra.mxu0 %v3532
  %4100 = vmatprep.subr.bf16.mxu0 %v3529
  %4101 = vmatpush2.bf16.msra.mxu0 %v3528
  %4102 = vmatprep.subr.bf16.mxu0 %v3525
  %4103 = vmatpush2.bf16.msra.mxu0 %v3524
  %4104 = vmatprep.subr.bf16.mxu0 %v3521
  %4105 = vmatpush2.bf16.msra.mxu0 %v3520
  %4106 = vmatprep.subr.bf16.mxu0 %v3517
  %4107 = vmatpush2.bf16.msra.mxu0 %v3516
  %4108 = vmatprep.subr.bf16.mxu0 %v3513
  %4109 = vmatpush2.bf16.msra.mxu0 %v3512
  %4110 = vmatprep.subr.bf16.mxu0 %v3509
  %4111 = vmatpush2.bf16.msra.mxu0 %v3508
  %4112 = vmatprep.subr.bf16.mxu0 %v3505
  %4113 = vmatpush2.bf16.msra.mxu0 %v3504
  %4114 = vmatprep.mubr.bf16.mxu0 %v2603
  %4115 = vmatmul.mubr.bf16.gmra.mxu0 %v2602
  %v4116 = vpop.f32.mrf.mxu0
  %v4117 = vadd.f32 %v4044, %v4116
  %v4118 = vpop.f32.mrf.mxu0
  %v4119 = vadd.f32 %v4046, %v4118
  %v4120 = vpop.f32.mrf.mxu0
  %v4121 = vadd.f32 %v4048, %v4120
  %v4122 = vpop.f32.mrf.mxu0
  %v4123 = vadd.f32 %v4050, %v4122
  %4124 = vmatprep.mubr.bf16.mxu0 %v2607
  %4125 = vmatmul.mubr.bf16.gmra.mxu0 %v2606
  %v4126 = vpop.f32.mrf.mxu0
  %v4127 = vadd.f32 %v4054, %v4126
  %v4128 = vpop.f32.mrf.mxu0
  %v4129 = vadd.f32 %v4056, %v4128
  %v4130 = vpop.f32.mrf.mxu0
  %v4131 = vadd.f32 %v4058, %v4130
  %v4132 = vpop.f32.mrf.mxu0
  %v4133 = vadd.f32 %v4060, %v4132
  %4134 = vmatprep.mubr.bf16.mxu0 %v2611
  %4135 = vmatmul.mubr.bf16.gmra.mxu0 %v2610
  %v4136 = vpop.f32.mrf.mxu0
  %v4137 = vadd.f32 %v4064, %v4136
  %v4138 = vpop.f32.mrf.mxu0
  %v4139 = vadd.f32 %v4066, %v4138
  %v4140 = vpop.f32.mrf.mxu0
  %v4141 = vadd.f32 %v4068, %v4140
  %v4142 = vpop.f32.mrf.mxu0
  %v4143 = vadd.f32 %v4070, %v4142
  %4144 = vmatprep.mubr.bf16.mxu0 %v2615
  %4145 = vmatmul.mubr.bf16.gmra.mxu0 %v2614
  %v4146 = vpop.f32.mrf.mxu0
  %v4147 = vadd.f32 %v4074, %v4146
  %v4148 = vpop.f32.mrf.mxu0
  %v4149 = vadd.f32 %v4076, %v4148
  %v4150 = vpop.f32.mrf.mxu0
  %v4151 = vadd.f32 %v4078, %v4150
  %v4152 = vpop.f32.mrf.mxu0
  %v4153 = vadd.f32 %v4080, %v4152
  %4154 = vdwg.mxu0
  %4155 = vmatprep.subr.bf16.mxu0 %v3565
  %4156 = vmatpush1.bf16.msra.mxu0 %v3564
  %4157 = vmatprep.subr.bf16.mxu0 %v3561
  %4158 = vmatpush1.bf16.msra.mxu0 %v3560
  %4159 = vmatprep.subr.bf16.mxu0 %v3557
  %4160 = vmatpush1.bf16.msra.mxu0 %v3556
  %4161 = vmatprep.subr.bf16.mxu0 %v3553
  %4162 = vmatpush1.bf16.msra.mxu0 %v3552
  %4163 = vmatprep.subr.bf16.mxu0 %v3549
  %4164 = vmatpush1.bf16.msra.mxu0 %v3548
  %4165 = vmatprep.subr.bf16.mxu0 %v3545
  %4166 = vmatpush1.bf16.msra.mxu0 %v3544
  %4167 = vmatprep.subr.bf16.mxu0 %v3541
  %4168 = vmatpush1.bf16.msra.mxu0 %v3540
  %4169 = vmatprep.subr.bf16.mxu0 %v3537
  %4170 = vmatpush1.bf16.msra.mxu0 %v3536
  %4171 = vmatprep.subr.bf16.mxu0 %v3597
  %4172 = vmatpush2.bf16.msra.mxu0 %v3596
  %4173 = vmatprep.subr.bf16.mxu0 %v3593
  %4174 = vmatpush2.bf16.msra.mxu0 %v3592
  %4175 = vmatprep.subr.bf16.mxu0 %v3589
  %4176 = vmatpush2.bf16.msra.mxu0 %v3588
  %4177 = vmatprep.subr.bf16.mxu0 %v3585
  %4178 = vmatpush2.bf16.msra.mxu0 %v3584
  %4179 = vmatprep.subr.bf16.mxu0 %v3581
  %4180 = vmatpush2.bf16.msra.mxu0 %v3580
  %4181 = vmatprep.subr.bf16.mxu0 %v3577
  %4182 = vmatpush2.bf16.msra.mxu0 %v3576
  %4183 = vmatprep.subr.bf16.mxu0 %v3573
  %4184 = vmatpush2.bf16.msra.mxu0 %v3572
  %4185 = vmatprep.subr.bf16.mxu0 %v3569
  %4186 = vmatpush2.bf16.msra.mxu0 %v3568
  %4187 = vmatprep.mubr.bf16.mxu0 %v2605
  %4188 = vmatmul.mubr.bf16.gmra.mxu0 %v2604
  %v4189 = vpop.f32.mrf.mxu0
  %v4190 = vadd.f32 %v4117, %v4189
  %v4191 = vpop.f32.mrf.mxu0
  %v4192 = vadd.f32 %v4119, %v4191
  %v4193 = vpop.f32.mrf.mxu0
  %v4194 = vadd.f32 %v4121, %v4193
  %v4195 = vpop.f32.mrf.mxu0
  %v4196 = vadd.f32 %v4123, %v4195
  %4197 = vmatprep.mubr.bf16.mxu0 %v2609
  %4198 = vmatmul.mubr.bf16.gmra.mxu0 %v2608
  %v4199 = vpop.f32.mrf.mxu0
  %v4200 = vadd.f32 %v4127, %v4199
  %v4201 = vpop.f32.mrf.mxu0
  %v4202 = vadd.f32 %v4129, %v4201
  %v4203 = vpop.f32.mrf.mxu0
  %v4204 = vadd.f32 %v4131, %v4203
  %v4205 = vpop.f32.mrf.mxu0
  %v4206 = vadd.f32 %v4133, %v4205
  %4207 = vmatprep.mubr.bf16.mxu0 %v2613
  %4208 = vmatmul.mubr.bf16.gmra.mxu0 %v2612
  %v4209 = vpop.f32.mrf.mxu0
  %v4210 = vadd.f32 %v4137, %v4209
  %v4211 = vpop.f32.mrf.mxu0
  %v4212 = vadd.f32 %v4139, %v4211
  %v4213 = vpop.f32.mrf.mxu0
  %v4214 = vadd.f32 %v4141, %v4213
  %v4215 = vpop.f32.mrf.mxu0
  %v4216 = vadd.f32 %v4143, %v4215
  %4217 = vmatprep.mubr.bf16.mxu0 %v2601
  %4218 = vmatmul.mubr.bf16.gmra.mxu0 %v2600
  %v4219 = vpop.f32.mrf.mxu0
  %v4220 = vadd.f32 %v4147, %v4219
  %v4221 = vpop.f32.mrf.mxu0
  %v4222 = vadd.f32 %v4149, %v4221
  %v4223 = vpop.f32.mrf.mxu0
  %v4224 = vadd.f32 %v4151, %v4223
  %v4225 = vpop.f32.mrf.mxu0
  %v4226 = vadd.f32 %v4153, %v4225
  %4227 = vdwg.mxu0
  %v4228 = vmax.f32 %v3971, 0.0
  %v4229 = vmax.f32 %v3973, 0.0
  %v4230 = vmax.f32 %v4190, 0.0
  %v4231 = vmax.f32 %v4192, 0.0
  %v4232 = vmax.f32 %v3975, 0.0
  %v4233 = vmax.f32 %v3977, 0.0
  %v4234 = vmax.f32 %v4194, 0.0
  %v4235 = vmax.f32 %v4196, 0.0
  %v4236 = vmax.f32 %v3981, 0.0
  %v4237 = vmax.f32 %v3983, 0.0
  %v4238 = vmax.f32 %v4200, 0.0
  %v4239 = vmax.f32 %v4202, 0.0
  %v4240 = vmax.f32 %v3985, 0.0
  %v4241 = vmax.f32 %v3987, 0.0
  %v4242 = vmax.f32 %v4204, 0.0
  %v4243 = vmax.f32 %v4206, 0.0
  %v4244 = vmax.f32 %v3991, 0.0
  %v4245 = vmax.f32 %v3993, 0.0
  %v4246 = vmax.f32 %v4210, 0.0
  %v4247 = vmax.f32 %v4212, 0.0
  %v4248 = vmax.f32 %v3995, 0.0
  %v4249 = vmax.f32 %v3997, 0.0
  %v4250 = vmax.f32 %v4214, 0.0
  %v4251 = vmax.f32 %v4216, 0.0
  %v4252 = vmax.f32 %v4001, 0.0
  %v4253 = vmax.f32 %v4003, 0.0
  %v4254 = vmax.f32 %v4220, 0.0
  %v4255 = vmax.f32 %v4222, 0.0
  %v4256 = vmax.f32 %v4005, 0.0
  %v4257 = vmax.f32 %v4007, 0.0
  %v4258 = vmax.f32 %v4224, 0.0
  %v4259 = vmax.f32 %v4226, 0.0
  %v4260 = vpack.c.bf16 %v4232, %v4228
  %v4261 = vpack.c.bf16 %v4233, %v4229
  %v4262 = vpack.c.bf16 %v4234, %v4230
  %v4263 = vpack.c.bf16 %v4235, %v4231
  %v4264 = vpack.c.bf16 %v4240, %v4236
  %v4265 = vpack.c.bf16 %v4241, %v4237
  %v4266 = vpack.c.bf16 %v4242, %v4238
  %v4267 = vpack.c.bf16 %v4243, %v4239
  %v4268 = vpack.c.bf16 %v4248, %v4244
  %v4269 = vpack.c.bf16 %v4249, %v4245
  %v4270 = vpack.c.bf16 %v4250, %v4246
  %v4271 = vpack.c.bf16 %v4251, %v4247
  %v4272 = vpack.c.bf16 %v4256, %v4252
  %v4273 = vpack.c.bf16 %v4257, %v4253
  %v4274 = vpack.c.bf16 %v4258, %v4254
  %v4275 = vpack.c.bf16 %v4259, %v4255
  %v4276 = vld [vmem:[%s5] sm:$0xf]
  %v4277 = vld [vmem:[%s5 + $0x4] sm:$0xf]
  %v4278 = vld [vmem:[%s5 + $0x8] sm:$0xf]
  %v4279 = vld [vmem:[%s5 + $0xc] sm:$0xf]
  %v4280 = vld [vmem:[%s5 + $0x10] sm:$0xf]
  %v4281 = vld [vmem:[%s5 + $0x14] sm:$0xf]
  %v4282 = vld [vmem:[%s5 + $0x18] sm:$0xf]
  %v4283 = vld [vmem:[%s5 + $0x1c] sm:$0xf]
  %v4284 = vld [vmem:[%s5 + $0x20] sm:$0xf]
  %v4285 = vld [vmem:[%s5 + $0x24] sm:$0xf]
  %v4286 = vld [vmem:[%s5 + $0x28] sm:$0xf]
  %v4287 = vld [vmem:[%s5 + $0x2c] sm:$0xf]
  %v4288 = vld [vmem:[%s5 + $0x30] sm:$0xf]
  %v4289 = vld [vmem:[%s5 + $0x34] sm:$0xf]
  %v4290 = vld [vmem:[%s5 + $0x38] sm:$0xf]
  %v4291 = vld [vmem:[%s5 + $0x3c] sm:$0xf]
  %v4292 = vld [vmem:[%s5 + $0x40] sm:$0xf]
  %v4293 = vld [vmem:[%s5 + $0x44] sm:$0xf]
  %v4294 = vld [vmem:[%s5 + $0x48] sm:$0xf]
  %v4295 = vld [vmem:[%s5 + $0x4c] sm:$0xf]
  %v4296 = vld [vmem:[%s5 + $0x50] sm:$0xf]
  %v4297 = vld [vmem:[%s5 + $0x54] sm:$0xf]
  %v4298 = vld [vmem:[%s5 + $0x58] sm:$0xf]
  %v4299 = vld [vmem:[%s5 + $0x5c] sm:$0xf]
  %v4300 = vld [vmem:[%s5 + $0x60] sm:$0xf]
  %v4301 = vld [vmem:[%s5 + $0x64] sm:$0xf]
  %v4302 = vld [vmem:[%s5 + $0x68] sm:$0xf]
  %v4303 = vld [vmem:[%s5 + $0x6c] sm:$0xf]
  %v4304 = vld [vmem:[%s5 + $0x70] sm:$0xf]
  %v4305 = vld [vmem:[%s5 + $0x74] sm:$0xf]
  %v4306 = vld [vmem:[%s5 + $0x78] sm:$0xf]
  %v4307 = vld [vmem:[%s5 + $0x7c] sm:$0xf]
  %v4308 = vld [vmem:[%s5 + $0x80] sm:$0xf]
  %v4309 = vld [vmem:[%s5 + $0x84] sm:$0xf]
  %v4310 = vld [vmem:[%s5 + $0x88] sm:$0xf]
  %v4311 = vld [vmem:[%s5 + $0x8c] sm:$0xf]
  %v4312 = vld [vmem:[%s5 + $0x90] sm:$0xf]
  %v4313 = vld [vmem:[%s5 + $0x94] sm:$0xf]
  %v4314 = vld [vmem:[%s5 + $0x98] sm:$0xf]
  %v4315 = vld [vmem:[%s5 + $0x9c] sm:$0xf]
  %v4316 = vld [vmem:[%s5 + $0xa0] sm:$0xf]
  %v4317 = vld [vmem:[%s5 + $0xa4] sm:$0xf]
  %v4318 = vld [vmem:[%s5 + $0xa8] sm:$0xf]
  %v4319 = vld [vmem:[%s5 + $0xac] sm:$0xf]
  %v4320 = vld [vmem:[%s5 + $0xb0] sm:$0xf]
  %v4321 = vld [vmem:[%s5 + $0xb4] sm:$0xf]
  %v4322 = vld [vmem:[%s5 + $0xb8] sm:$0xf]
  %v4323 = vld [vmem:[%s5 + $0xbc] sm:$0xf]
  %v4324 = vld [vmem:[%s5 + $0xc0] sm:$0xf]
  %v4325 = vld [vmem:[%s5 + $0xc4] sm:$0xf]
  %v4326 = vld [vmem:[%s5 + $0xc8] sm:$0xf]
  %v4327 = vld [vmem:[%s5 + $0xcc] sm:$0xf]
  %v4328 = vld [vmem:[%s5 + $0xd0] sm:$0xf]
  %v4329 = vld [vmem:[%s5 + $0xd4] sm:$0xf]
  %v4330 = vld [vmem:[%s5 + $0xd8] sm:$0xf]
  %v4331 = vld [vmem:[%s5 + $0xdc] sm:$0xf]
  %s4332 = scalar_lea.vmem %s5, 224
  %v4333 = vld [vmem:[%s4332] sm:$0xf]
  %v4334 = vld [vmem:[%s4332 + $0x4] sm:$0xf]
  %v4335 = vld [vmem:[%s4332 + $0x8] sm:$0xf]
  %v4336 = vld [vmem:[%s4332 + $0xc] sm:$0xf]
  %v4337 = vld [vmem:[%s4332 + $0x10] sm:$0xf]
  %v4338 = vld [vmem:[%s4332 + $0x14] sm:$0xf]
  %v4339 = vld [vmem:[%s4332 + $0x18] sm:$0xf]
  %v4340 = vld [vmem:[%s4332 + $0x1c] sm:$0xf]
  %v4341 = vld [vmem:[%s4332 + $0x20] sm:$0xf]
  %v4342 = vld [vmem:[%s4332 + $0x24] sm:$0xf]
  %v4343 = vld [vmem:[%s4332 + $0x28] sm:$0xf]
  %v4344 = vld [vmem:[%s4332 + $0x2c] sm:$0xf]
  %v4345 = vld [vmem:[%s4332 + $0x30] sm:$0xf]
  %v4346 = vld [vmem:[%s4332 + $0x34] sm:$0xf]
  %v4347 = vld [vmem:[%s4332 + $0x38] sm:$0xf]
  %v4348 = vld [vmem:[%s4332 + $0x3c] sm:$0xf]
  %v4349 = vld [vmem:[%s4332 + $0x40] sm:$0xf]
  %v4350 = vld [vmem:[%s4332 + $0x44] sm:$0xf]
  %v4351 = vld [vmem:[%s4332 + $0x48] sm:$0xf]
  %v4352 = vld [vmem:[%s4332 + $0x4c] sm:$0xf]
  %v4353 = vld [vmem:[%s4332 + $0x50] sm:$0xf]
  %v4354 = vld [vmem:[%s4332 + $0x54] sm:$0xf]
  %v4355 = vld [vmem:[%s4332 + $0x58] sm:$0xf]
  %v4356 = vld [vmem:[%s4332 + $0x5c] sm:$0xf]
  %v4357 = vld [vmem:[%s4332 + $0x60] sm:$0xf]
  %v4358 = vld [vmem:[%s4332 + $0x64] sm:$0xf]
  %v4359 = vld [vmem:[%s4332 + $0x68] sm:$0xf]
  %v4360 = vld [vmem:[%s4332 + $0x6c] sm:$0xf]
  %v4361 = vld [vmem:[%s4332 + $0x70] sm:$0xf]
  %v4362 = vld [vmem:[%s4332 + $0x74] sm:$0xf]
  %v4363 = vld [vmem:[%s4332 + $0x78] sm:$0xf]
  %v4364 = vld [vmem:[%s4332 + $0x7c] sm:$0xf]
  %v4365 = vld [vmem:[%s4332 + $0x80] sm:$0xf]
  %v4366 = vld [vmem:[%s4332 + $0x84] sm:$0xf]
  %v4367 = vld [vmem:[%s4332 + $0x88] sm:$0xf]
  %v4368 = vld [vmem:[%s4332 + $0x8c] sm:$0xf]
  %v4369 = vld [vmem:[%s4332 + $0x90] sm:$0xf]
  %v4370 = vld [vmem:[%s4332 + $0x94] sm:$0xf]
  %v4371 = vld [vmem:[%s4332 + $0x98] sm:$0xf]
  %v4372 = vld [vmem:[%s4332 + $0x9c] sm:$0xf]
  %v4373 = vld [vmem:[%s4332 + $0xa0] sm:$0xf]
  %v4374 = vld [vmem:[%s4332 + $0xa4] sm:$0xf]
  %v4375 = vld [vmem:[%s4332 + $0xa8] sm:$0xf]
  %v4376 = vld [vmem:[%s4332 + $0xac] sm:$0xf]
  %v4377 = vld [vmem:[%s4332 + $0xb0] sm:$0xf]
  %v4378 = vld [vmem:[%s4332 + $0xb4] sm:$0xf]
  %v4379 = vld [vmem:[%s4332 + $0xb8] sm:$0xf]
  %v4380 = vld [vmem:[%s4332 + $0xbc] sm:$0xf]
  %v4381 = vld [vmem:[%s4332 + $0xc0] sm:$0xf]
  %v4382 = vld [vmem:[%s4332 + $0xc4] sm:$0xf]
  %v4383 = vld [vmem:[%s4332 + $0xc8] sm:$0xf]
  %v4384 = vld [vmem:[%s4332 + $0xcc] sm:$0xf]
  %v4385 = vld [vmem:[%s4332 + $0xd0] sm:$0xf]
  %v4386 = vld [vmem:[%s4332 + $0xd4] sm:$0xf]
  %v4387 = vld [vmem:[%s4332 + $0xd8] sm:$0xf]
  %v4388 = vld [vmem:[%s4332 + $0xdc] sm:$0xf]
  %v4393 = vrot.slane %v4260, 4
  %v4394 = vrot.slane %v4261, 4
  %v4395 = vrot.slane %v4262, 4
  %v4396 = vrot.slane %v4263, 4
  %v4456 = vunpack.c.l.b16 %v4333
  %v4457 = vunpack.c.l.b16 %v4334
  %v4458 = vunpack.c.l.b16 %v4335
  %v4459 = vunpack.c.l.b16 %v4336
  %v4460 = vunpack.c.l.b16 %v4337
  %v4461 = vunpack.c.l.b16 %v4338
  %v4462 = vunpack.c.l.b16 %v4339
  %v4463 = vunpack.c.l.b16 %v4340
  %v4464 = vunpack.c.l.b16 %v4341
  %v4465 = vunpack.c.l.b16 %v4342
  %v4466 = vunpack.c.l.b16 %v4343
  %v4467 = vunpack.c.l.b16 %v4344
  %v4468 = vunpack.c.l.b16 %v4345
  %v4469 = vunpack.c.l.b16 %v4346
  %v4470 = vunpack.c.l.b16 %v4347
  %v4471 = vunpack.c.l.b16 %v4348
  %v4472 = vunpack.c.l.b16 %v4349
  %v4473 = vunpack.c.l.b16 %v4350
  %v4474 = vunpack.c.l.b16 %v4351
  %v4475 = vunpack.c.l.b16 %v4352
  %v4476 = vunpack.c.l.b16 %v4353
  %v4477 = vunpack.c.l.b16 %v4354
  %v4478 = vunpack.c.l.b16 %v4355
  %v4479 = vunpack.c.l.b16 %v4356
  %v4480 = vunpack.c.l.b16 %v4357
  %v4481 = vunpack.c.l.b16 %v4358
  %v4482 = vunpack.c.l.b16 %v4359
  %v4483 = vunpack.c.l.b16 %v4360
  %v4484 = vunpack.c.l.b16 %v4361
  %v4485 = vunpack.c.l.b16 %v4362
  %v4486 = vunpack.c.l.b16 %v4363
  %v4487 = vunpack.c.l.b16 %v4364
  %v4488 = vunpack.c.l.b16 %v4365
  %v4489 = vunpack.c.l.b16 %v4366
  %v4490 = vunpack.c.l.b16 %v4367
  %v4491 = vunpack.c.l.b16 %v4368
  %v4492 = vunpack.c.l.b16 %v4369
  %v4493 = vunpack.c.l.b16 %v4370
  %v4494 = vunpack.c.l.b16 %v4371
  %v4495 = vunpack.c.l.b16 %v4372
  %v4496 = vunpack.c.l.b16 %v4373
  %v4497 = vunpack.c.l.b16 %v4374
  %v4498 = vunpack.c.l.b16 %v4375
  %v4499 = vunpack.c.l.b16 %v4376
  %v4500 = vunpack.c.l.b16 %v4377
  %v4501 = vunpack.c.l.b16 %v4378
  %v4502 = vunpack.c.l.b16 %v4379
  %v4503 = vunpack.c.l.b16 %v4380
  %v4504 = vunpack.c.l.b16 %v4381
  %v4505 = vunpack.c.l.b16 %v4382
  %v4506 = vunpack.c.l.b16 %v4383
  %v4507 = vunpack.c.l.b16 %v4384
  %v4508 = vunpack.c.l.b16 %v4385
  %v4509 = vunpack.c.l.b16 %v4386
  %v4510 = vunpack.c.l.b16 %v4387
  %v4511 = vunpack.c.l.b16 %v4388
  %v4512 = vpack.c.b16 %v4457, %v4456
  %v4513 = vpack.c.b16 %v4459, %v4458
  %v4514 = vpack.c.b16 %v4461, %v4460
  %v4515 = vpack.c.b16 %v4463, %v4462
  %v4516 = vpack.c.b16 %v4465, %v4464
  %v4517 = vpack.c.b16 %v4467, %v4466
  %v4518 = vpack.c.b16 %v4469, %v4468
  %v4519 = vpack.c.b16 %v4471, %v4470
  %v4520 = vpack.c.b16 %v4473, %v4472
  %v4521 = vpack.c.b16 %v4475, %v4474
  %v4522 = vpack.c.b16 %v4477, %v4476
  %v4523 = vpack.c.b16 %v4479, %v4478
  %v4524 = vpack.c.b16 %v4481, %v4480
  %v4525 = vpack.c.b16 %v4483, %v4482
  %v4526 = vpack.c.b16 %v4485, %v4484
  %v4527 = vpack.c.b16 %v4487, %v4486
  %v4528 = vpack.c.b16 %v4489, %v4488
  %v4529 = vpack.c.b16 %v4491, %v4490
  %v4530 = vpack.c.b16 %v4493, %v4492
  %v4531 = vpack.c.b16 %v4495, %v4494
  %v4532 = vpack.c.b16 %v4497, %v4496
  %v4533 = vpack.c.b16 %v4499, %v4498
  %v4534 = vpack.c.b16 %v4501, %v4500
  %v4535 = vpack.c.b16 %v4503, %v4502
  %v4536 = vpack.c.b16 %v4505, %v4504
  %v4537 = vpack.c.b16 %v4507, %v4506
  %v4538 = vpack.c.b16 %v4509, %v4508
  %v4539 = vpack.c.b16 %v4511, %v4510
  %v4569 = vsel %vm2381, %v4396, 0
  %4571 = vmatprep.subr.bf16.mxu0 0
  %4572 = vmatpush1.bf16.msra.mxu0 %v4519
  %4573 = vmatprep.subr.bf16.mxu0 0
  %4574 = vmatpush1.bf16.msra.mxu0 %v4518
  %4575 = vmatprep.subr.bf16.mxu0 0
  %4576 = vmatpush1.bf16.msra.mxu0 %v4517
  %4577 = vmatprep.subr.bf16.mxu0 0
  %4578 = vmatpush1.bf16.msra.mxu0 %v4516
  %4579 = vmatprep.subr.bf16.mxu0 0
  %4580 = vmatpush1.bf16.msra.mxu0 %v4515
  %4581 = vmatprep.subr.bf16.mxu0 0
  %4582 = vmatpush1.bf16.msra.mxu0 %v4514
  %4583 = vmatprep.subr.bf16.mxu0 0
  %4584 = vmatpush1.bf16.msra.mxu0 %v4513
  %4585 = vmatprep.subr.bf16.mxu0 0
  %4586 = vmatpush1.bf16.msra.mxu0 %v4512
  %4587 = vmatprep.subr.bf16.mxu0 0
  %4588 = vmatpush2.bf16.msra.mxu0 %v4527
  %4589 = vmatprep.subr.bf16.mxu0 0
  %4590 = vmatpush2.bf16.msra.mxu0 %v4526
  %4591 = vmatprep.subr.bf16.mxu0 0
  %4592 = vmatpush2.bf16.msra.mxu0 %v4525
  %4593 = vmatprep.subr.bf16.mxu0 0
  %4594 = vmatpush2.bf16.msra.mxu0 %v4524
  %4595 = vmatprep.subr.bf16.mxu0 0
  %4596 = vmatpush2.bf16.msra.mxu0 %v4523
  %4597 = vmatprep.subr.bf16.mxu0 0
  %4598 = vmatpush2.bf16.msra.mxu0 %v4522
  %4599 = vmatprep.subr.bf16.mxu0 0
  %4600 = vmatpush2.bf16.msra.mxu0 %v4521
  %4601 = vmatprep.subr.bf16.mxu0 0
  %4602 = vmatpush2.bf16.msra.mxu0 %v4520
  %4603 = vmatprep.mubr.bf16.mxu0 %v4394
  %4604 = vmatmul.mubr.bf16.gmra.mxu0 %v4393
  %v4605 = vpop.f32.mrf.mxu0
  %v4606 = vadd.f32 0.0, %v4605
  %v4607 = vpop.f32.mrf.mxu0
  %v4608 = vpop.f32.mrf.mxu0
  %v4609 = vpop.f32.mrf.mxu0
  %4610 = vdwg.mxu0
  %4611 = vmatprep.subr.bf16.mxu0 0
  %4612 = vmatpush1.bf16.msra.mxu0 %v4535
  %4613 = vmatprep.subr.bf16.mxu0 0
  %4614 = vmatpush1.bf16.msra.mxu0 %v4534
  %4615 = vmatprep.subr.bf16.mxu0 0
  %4616 = vmatpush1.bf16.msra.mxu0 %v4533
  %4617 = vmatprep.subr.bf16.mxu0 0
  %4618 = vmatpush1.bf16.msra.mxu0 %v4532
  %4619 = vmatprep.subr.bf16.mxu0 0
  %4620 = vmatpush1.bf16.msra.mxu0 %v4531
  %4621 = vmatprep.subr.bf16.mxu0 0
  %4622 = vmatpush1.bf16.msra.mxu0 %v4530
  %4623 = vmatprep.subr.bf16.mxu0 0
  %4624 = vmatpush1.bf16.msra.mxu0 %v4529
  %4625 = vmatprep.subr.bf16.mxu0 0
  %4626 = vmatpush1.bf16.msra.mxu0 %v4528
  %4627 = vmatprep.subr.bf16.mxu0 0
  %4628 = vmatpush2.bf16.msra.mxu0 0
  %4629 = vmatprep.subr.bf16.mxu0 0
  %4630 = vmatpush2.bf16.msra.mxu0 0
  %4631 = vmatprep.subr.bf16.mxu0 0
  %4632 = vmatpush2.bf16.msra.mxu0 0
  %4633 = vmatprep.subr.bf16.mxu0 0
  %4634 = vmatpush2.bf16.msra.mxu0 0
  %4635 = vmatprep.subr.bf16.mxu0 0
  %4636 = vmatpush2.bf16.msra.mxu0 %v4539
  %4637 = vmatprep.subr.bf16.mxu0 0
  %4638 = vmatpush2.bf16.msra.mxu0 %v4538
  %4639 = vmatprep.subr.bf16.mxu0 0
  %4640 = vmatpush2.bf16.msra.mxu0 %v4537
  %4641 = vmatprep.subr.bf16.mxu0 0
  %4642 = vmatpush2.bf16.msra.mxu0 %v4536
  %4643 = vmatprep.mubr.bf16.mxu0 %v4569
  %4644 = vmatmul.mubr.bf16.gmra.mxu0 %v4395
  %v4645 = vpop.f32.mrf.mxu0
  %v4646 = vadd.f32 %v4606, %v4645
  %v4647 = vpop.f32.mrf.mxu0
  %v4648 = vpop.f32.mrf.mxu0
  %v4649 = vpop.f32.mrf.mxu0
  %4650 = vdwg.mxu0
  %v4707 = vunpack.c.l.b16 %v4276
  %v4708 = vunpack.c.l.b16 %v4277
  %v4709 = vunpack.c.l.b16 %v4278
  %v4710 = vunpack.c.l.b16 %v4279
  %v4711 = vunpack.c.l.b16 %v4280
  %v4712 = vunpack.c.l.b16 %v4281
  %v4713 = vunpack.c.l.b16 %v4282
  %v4714 = vunpack.c.l.b16 %v4283
  %v4715 = vunpack.c.l.b16 %v4284
  %v4716 = vunpack.c.l.b16 %v4285
  %v4717 = vunpack.c.l.b16 %v4286
  %v4718 = vunpack.c.l.b16 %v4287
  %v4719 = vunpack.c.l.b16 %v4288
  %v4720 = vunpack.c.l.b16 %v4289
  %v4721 = vunpack.c.l.b16 %v4290
  %v4722 = vunpack.c.l.b16 %v4291
  %v4723 = vunpack.c.l.b16 %v4292
  %v4724 = vunpack.c.l.b16 %v4293
  %v4725 = vunpack.c.l.b16 %v4294
  %v4726 = vunpack.c.l.b16 %v4295
  %v4727 = vunpack.c.l.b16 %v4296
  %v4728 = vunpack.c.l.b16 %v4297
  %v4729 = vunpack.c.l.b16 %v4298
  %v4730 = vunpack.c.l.b16 %v4299
  %v4731 = vunpack.c.l.b16 %v4300
  %v4732 = vunpack.c.l.b16 %v4301
  %v4733 = vunpack.c.l.b16 %v4302
  %v4734 = vunpack.c.l.b16 %v4303
  %v4735 = vunpack.c.l.b16 %v4304
  %v4736 = vunpack.c.l.b16 %v4305
  %v4737 = vunpack.c.l.b16 %v4306
  %v4738 = vunpack.c.l.b16 %v4307
  %v4739 = vunpack.c.l.b16 %v4308
  %v4740 = vunpack.c.l.b16 %v4309
  %v4741 = vunpack.c.l.b16 %v4310
  %v4742 = vunpack.c.l.b16 %v4311
  %v4743 = vunpack.c.l.b16 %v4312
  %v4744 = vunpack.c.l.b16 %v4313
  %v4745 = vunpack.c.l.b16 %v4314
  %v4746 = vunpack.c.l.b16 %v4315
  %v4747 = vunpack.c.l.b16 %v4316
  %v4748 = vunpack.c.l.b16 %v4317
  %v4749 = vunpack.c.l.b16 %v4318
  %v4750 = vunpack.c.l.b16 %v4319
  %v4751 = vunpack.c.l.b16 %v4320
  %v4752 = vunpack.c.l.b16 %v4321
  %v4753 = vunpack.c.l.b16 %v4322
  %v4754 = vunpack.c.l.b16 %v4323
  %v4755 = vunpack.c.l.b16 %v4324
  %v4756 = vunpack.c.l.b16 %v4325
  %v4757 = vunpack.c.l.b16 %v4326
  %v4758 = vunpack.c.l.b16 %v4327
  %v4759 = vunpack.c.l.b16 %v4328
  %v4760 = vunpack.c.l.b16 %v4329
  %v4761 = vunpack.c.l.b16 %v4330
  %v4762 = vunpack.c.l.b16 %v4331
  %v4763 = vpack.c.b16 %v4708, %v4707
  %v4764 = vpack.c.b16 %v4710, %v4709
  %v4765 = vpack.c.b16 %v4712, %v4711
  %v4766 = vpack.c.b16 %v4714, %v4713
  %v4767 = vpack.c.b16 %v4716, %v4715
  %v4768 = vpack.c.b16 %v4718, %v4717
  %v4769 = vpack.c.b16 %v4720, %v4719
  %v4770 = vpack.c.b16 %v4722, %v4721
  %v4771 = vpack.c.b16 %v4724, %v4723
  %v4772 = vpack.c.b16 %v4726, %v4725
  %v4773 = vpack.c.b16 %v4728, %v4727
  %v4774 = vpack.c.b16 %v4730, %v4729
  %v4775 = vpack.c.b16 %v4732, %v4731
  %v4776 = vpack.c.b16 %v4734, %v4733
  %v4777 = vpack.c.b16 %v4736, %v4735
  %v4778 = vpack.c.b16 %v4738, %v4737
  %v4779 = vpack.c.b16 %v4740, %v4739
  %v4780 = vpack.c.b16 %v4742, %v4741
  %v4781 = vpack.c.b16 %v4744, %v4743
  %v4782 = vpack.c.b16 %v4746, %v4745
  %v4783 = vpack.c.b16 %v4748, %v4747
  %v4784 = vpack.c.b16 %v4750, %v4749
  %v4785 = vpack.c.b16 %v4752, %v4751
  %v4786 = vpack.c.b16 %v4754, %v4753
  %v4787 = vpack.c.b16 %v4756, %v4755
  %v4788 = vpack.c.b16 %v4758, %v4757
  %v4789 = vpack.c.b16 %v4760, %v4759
  %v4790 = vpack.c.b16 %v4762, %v4761
  %v4820 = vsel %vm2381, %v4263, 0
  %4822 = vmatprep.subr.bf16.mxu0 0
  %4823 = vmatpush1.bf16.msra.mxu0 %v4770
  %4824 = vmatprep.subr.bf16.mxu0 0
  %4825 = vmatpush1.bf16.msra.mxu0 %v4769
  %4826 = vmatprep.subr.bf16.mxu0 0
  %4827 = vmatpush1.bf16.msra.mxu0 %v4768
  %4828 = vmatprep.subr.bf16.mxu0 0
  %4829 = vmatpush1.bf16.msra.mxu0 %v4767
  %4830 = vmatprep.subr.bf16.mxu0 0
  %4831 = vmatpush1.bf16.msra.mxu0 %v4766
  %4832 = vmatprep.subr.bf16.mxu0 0
  %4833 = vmatpush1.bf16.msra.mxu0 %v4765
  %4834 = vmatprep.subr.bf16.mxu0 0
  %4835 = vmatpush1.bf16.msra.mxu0 %v4764
  %4836 = vmatprep.subr.bf16.mxu0 0
  %4837 = vmatpush1.bf16.msra.mxu0 %v4763
  %4838 = vmatprep.subr.bf16.mxu0 0
  %4839 = vmatpush2.bf16.msra.mxu0 %v4778
  %4840 = vmatprep.subr.bf16.mxu0 0
  %4841 = vmatpush2.bf16.msra.mxu0 %v4777
  %4842 = vmatprep.subr.bf16.mxu0 0
  %4843 = vmatpush2.bf16.msra.mxu0 %v4776
  %4844 = vmatprep.subr.bf16.mxu0 0
  %4845 = vmatpush2.bf16.msra.mxu0 %v4775
  %4846 = vmatprep.subr.bf16.mxu0 0
  %4847 = vmatpush2.bf16.msra.mxu0 %v4774
  %4848 = vmatprep.subr.bf16.mxu0 0
  %4849 = vmatpush2.bf16.msra.mxu0 %v4773
  %4850 = vmatprep.subr.bf16.mxu0 0
  %4851 = vmatpush2.bf16.msra.mxu0 %v4772
  %4852 = vmatprep.subr.bf16.mxu0 0
  %4853 = vmatpush2.bf16.msra.mxu0 %v4771
  %4854 = vmatprep.mubr.bf16.mxu0 %v4261
  %4855 = vmatmul.mubr.bf16.gmra.mxu0 %v4260
  %v4856 = vpop.f32.mrf.mxu0
  %v4857 = vadd.f32 %v4646, %v4856
  %v4858 = vpop.f32.mrf.mxu0
  %v4859 = vpop.f32.mrf.mxu0
  %v4860 = vpop.f32.mrf.mxu0
  %4861 = vdwg.mxu0
  %4862 = vmatprep.subr.bf16.mxu0 0
  %4863 = vmatpush1.bf16.msra.mxu0 %v4786
  %4864 = vmatprep.subr.bf16.mxu0 0
  %4865 = vmatpush1.bf16.msra.mxu0 %v4785
  %4866 = vmatprep.subr.bf16.mxu0 0
  %4867 = vmatpush1.bf16.msra.mxu0 %v4784
  %4868 = vmatprep.subr.bf16.mxu0 0
  %4869 = vmatpush1.bf16.msra.mxu0 %v4783
  %4870 = vmatprep.subr.bf16.mxu0 0
  %4871 = vmatpush1.bf16.msra.mxu0 %v4782
  %4872 = vmatprep.subr.bf16.mxu0 0
  %4873 = vmatpush1.bf16.msra.mxu0 %v4781
  %4874 = vmatprep.subr.bf16.mxu0 0
  %4875 = vmatpush1.bf16.msra.mxu0 %v4780
  %4876 = vmatprep.subr.bf16.mxu0 0
  %4877 = vmatpush1.bf16.msra.mxu0 %v4779
  %4878 = vmatprep.subr.bf16.mxu0 0
  %4879 = vmatpush2.bf16.msra.mxu0 0
  %4880 = vmatprep.subr.bf16.mxu0 0
  %4881 = vmatpush2.bf16.msra.mxu0 0
  %4882 = vmatprep.subr.bf16.mxu0 0
  %4883 = vmatpush2.bf16.msra.mxu0 0
  %4884 = vmatprep.subr.bf16.mxu0 0
  %4885 = vmatpush2.bf16.msra.mxu0 0
  %4886 = vmatprep.subr.bf16.mxu0 0
  %4887 = vmatpush2.bf16.msra.mxu0 %v4790
  %4888 = vmatprep.subr.bf16.mxu0 0
  %4889 = vmatpush2.bf16.msra.mxu0 %v4789
  %4890 = vmatprep.subr.bf16.mxu0 0
  %4891 = vmatpush2.bf16.msra.mxu0 %v4788
  %4892 = vmatprep.subr.bf16.mxu0 0
  %4893 = vmatpush2.bf16.msra.mxu0 %v4787
  %4894 = vmatprep.mubr.bf16.mxu0 %v4820
  %4895 = vmatmul.mubr.bf16.gmra.mxu0 %v4262
  %v4896 = vpop.f32.mrf.mxu0
  %v4897 = vadd.f32 %v4857, %v4896
  %v4898 = vpop.f32.mrf.mxu0
  %v4899 = vpop.f32.mrf.mxu0
  %v4900 = vpop.f32.mrf.mxu0
  %4901 = vdwg.mxu0
  %s4902 = scalar_lea.vmem %s5, 448
  %v4903 = vld [vmem:[%s4902] sm:$0xf]
  %v4904 = vld [vmem:[%s4902 + $0x4] sm:$0xf]
  %v4905 = vld [vmem:[%s4902 + $0x8] sm:$0xf]
  %v4906 = vld [vmem:[%s4902 + $0xc] sm:$0xf]
  %v4907 = vld [vmem:[%s4902 + $0x10] sm:$0xf]
  %v4908 = vld [vmem:[%s4902 + $0x14] sm:$0xf]
  %v4909 = vld [vmem:[%s4902 + $0x18] sm:$0xf]
  %v4910 = vld [vmem:[%s4902 + $0x1c] sm:$0xf]
  %v4911 = vld [vmem:[%s4902 + $0x20] sm:$0xf]
  %v4912 = vld [vmem:[%s4902 + $0x24] sm:$0xf]
  %v4913 = vld [vmem:[%s4902 + $0x28] sm:$0xf]
  %v4914 = vld [vmem:[%s4902 + $0x2c] sm:$0xf]
  %v4915 = vld [vmem:[%s4902 + $0x30] sm:$0xf]
  %v4916 = vld [vmem:[%s4902 + $0x34] sm:$0xf]
  %v4917 = vld [vmem:[%s4902 + $0x38] sm:$0xf]
  %v4918 = vld [vmem:[%s4902 + $0x3c] sm:$0xf]
  %v4919 = vld [vmem:[%s4902 + $0x40] sm:$0xf]
  %v4920 = vld [vmem:[%s4902 + $0x44] sm:$0xf]
  %v4921 = vld [vmem:[%s4902 + $0x48] sm:$0xf]
  %v4922 = vld [vmem:[%s4902 + $0x4c] sm:$0xf]
  %v4923 = vld [vmem:[%s4902 + $0x50] sm:$0xf]
  %v4924 = vld [vmem:[%s4902 + $0x54] sm:$0xf]
  %v4925 = vld [vmem:[%s4902 + $0x58] sm:$0xf]
  %v4926 = vld [vmem:[%s4902 + $0x5c] sm:$0xf]
  %v4927 = vld [vmem:[%s4902 + $0x60] sm:$0xf]
  %v4928 = vld [vmem:[%s4902 + $0x64] sm:$0xf]
  %v4929 = vld [vmem:[%s4902 + $0x68] sm:$0xf]
  %v4930 = vld [vmem:[%s4902 + $0x6c] sm:$0xf]
  %v4931 = vld [vmem:[%s4902 + $0x70] sm:$0xf]
  %v4932 = vld [vmem:[%s4902 + $0x74] sm:$0xf]
  %v4933 = vld [vmem:[%s4902 + $0x78] sm:$0xf]
  %v4934 = vld [vmem:[%s4902 + $0x7c] sm:$0xf]
  %v4935 = vld [vmem:[%s4902 + $0x80] sm:$0xf]
  %v4936 = vld [vmem:[%s4902 + $0x84] sm:$0xf]
  %v4937 = vld [vmem:[%s4902 + $0x88] sm:$0xf]
  %v4938 = vld [vmem:[%s4902 + $0x8c] sm:$0xf]
  %v4939 = vld [vmem:[%s4902 + $0x90] sm:$0xf]
  %v4940 = vld [vmem:[%s4902 + $0x94] sm:$0xf]
  %v4941 = vld [vmem:[%s4902 + $0x98] sm:$0xf]
  %v4942 = vld [vmem:[%s4902 + $0x9c] sm:$0xf]
  %v4943 = vld [vmem:[%s4902 + $0xa0] sm:$0xf]
  %v4944 = vld [vmem:[%s4902 + $0xa4] sm:$0xf]
  %v4945 = vld [vmem:[%s4902 + $0xa8] sm:$0xf]
  %v4946 = vld [vmem:[%s4902 + $0xac] sm:$0xf]
  %v4947 = vld [vmem:[%s4902 + $0xb0] sm:$0xf]
  %v4948 = vld [vmem:[%s4902 + $0xb4] sm:$0xf]
  %v4949 = vld [vmem:[%s4902 + $0xb8] sm:$0xf]
  %v4950 = vld [vmem:[%s4902 + $0xbc] sm:$0xf]
  %v4951 = vld [vmem:[%s4902 + $0xc0] sm:$0xf]
  %v4952 = vld [vmem:[%s4902 + $0xc4] sm:$0xf]
  %v4953 = vld [vmem:[%s4902 + $0xc8] sm:$0xf]
  %v4954 = vld [vmem:[%s4902 + $0xcc] sm:$0xf]
  %v4955 = vld [vmem:[%s4902 + $0xd0] sm:$0xf]
  %v4956 = vld [vmem:[%s4902 + $0xd4] sm:$0xf]
  %v4957 = vld [vmem:[%s4902 + $0xd8] sm:$0xf]
  %v4958 = vld [vmem:[%s4902 + $0xdc] sm:$0xf]
  %v5015 = vunpack.c.l.b16 %v4903
  %v5016 = vunpack.c.l.b16 %v4904
  %v5017 = vunpack.c.l.b16 %v4905
  %v5018 = vunpack.c.l.b16 %v4906
  %v5019 = vunpack.c.l.b16 %v4907
  %v5020 = vunpack.c.l.b16 %v4908
  %v5021 = vunpack.c.l.b16 %v4909
  %v5022 = vunpack.c.l.b16 %v4910
  %v5023 = vunpack.c.l.b16 %v4911
  %v5024 = vunpack.c.l.b16 %v4912
  %v5025 = vunpack.c.l.b16 %v4913
  %v5026 = vunpack.c.l.b16 %v4914
  %v5027 = vunpack.c.l.b16 %v4915
  %v5028 = vunpack.c.l.b16 %v4916
  %v5029 = vunpack.c.l.b16 %v4917
  %v5030 = vunpack.c.l.b16 %v4918
  %v5031 = vunpack.c.l.b16 %v4919
  %v5032 = vunpack.c.l.b16 %v4920
  %v5033 = vunpack.c.l.b16 %v4921
  %v5034 = vunpack.c.l.b16 %v4922
  %v5035 = vunpack.c.l.b16 %v4923
  %v5036 = vunpack.c.l.b16 %v4924
  %v5037 = vunpack.c.l.b16 %v4925
  %v5038 = vunpack.c.l.b16 %v4926
  %v5039 = vunpack.c.l.b16 %v4927
  %v5040 = vunpack.c.l.b16 %v4928
  %v5041 = vunpack.c.l.b16 %v4929
  %v5042 = vunpack.c.l.b16 %v4930
  %v5043 = vunpack.c.l.b16 %v4931
  %v5044 = vunpack.c.l.b16 %v4932
  %v5045 = vunpack.c.l.b16 %v4933
  %v5046 = vunpack.c.l.b16 %v4934
  %v5047 = vunpack.c.l.b16 %v4935
  %v5048 = vunpack.c.l.b16 %v4936
  %v5049 = vunpack.c.l.b16 %v4937
  %v5050 = vunpack.c.l.b16 %v4938
  %v5051 = vunpack.c.l.b16 %v4939
  %v5052 = vunpack.c.l.b16 %v4940
  %v5053 = vunpack.c.l.b16 %v4941
  %v5054 = vunpack.c.l.b16 %v4942
  %v5055 = vunpack.c.l.b16 %v4943
  %v5056 = vunpack.c.l.b16 %v4944
  %v5057 = vunpack.c.l.b16 %v4945
  %v5058 = vunpack.c.l.b16 %v4946
  %v5059 = vunpack.c.l.b16 %v4947
  %v5060 = vunpack.c.l.b16 %v4948
  %v5061 = vunpack.c.l.b16 %v4949
  %v5062 = vunpack.c.l.b16 %v4950
  %v5063 = vunpack.c.l.b16 %v4951
  %v5064 = vunpack.c.l.b16 %v4952
  %v5065 = vunpack.c.l.b16 %v4953
  %v5066 = vunpack.c.l.b16 %v4954
  %v5067 = vunpack.c.l.b16 %v4955
  %v5068 = vunpack.c.l.b16 %v4956
  %v5069 = vunpack.c.l.b16 %v4957
  %v5070 = vunpack.c.l.b16 %v4958
  %v5071 = vpack.c.b16 %v5016, %v5015
  %v5072 = vpack.c.b16 %v5018, %v5017
  %v5073 = vpack.c.b16 %v5020, %v5019
  %v5074 = vpack.c.b16 %v5022, %v5021
  %v5075 = vpack.c.b16 %v5024, %v5023
  %v5076 = vpack.c.b16 %v5026, %v5025
  %v5077 = vpack.c.b16 %v5028, %v5027
  %v5078 = vpack.c.b16 %v5030, %v5029
  %v5079 = vpack.c.b16 %v5032, %v5031
  %v5080 = vpack.c.b16 %v5034, %v5033
  %v5081 = vpack.c.b16 %v5036, %v5035
  %v5082 = vpack.c.b16 %v5038, %v5037
  %v5083 = vpack.c.b16 %v5040, %v5039
  %v5084 = vpack.c.b16 %v5042, %v5041
  %v5085 = vpack.c.b16 %v5044, %v5043
  %v5086 = vpack.c.b16 %v5046, %v5045
  %v5087 = vpack.c.b16 %v5048, %v5047
  %v5088 = vpack.c.b16 %v5050, %v5049
  %v5089 = vpack.c.b16 %v5052, %v5051
  %v5090 = vpack.c.b16 %v5054, %v5053
  %v5091 = vpack.c.b16 %v5056, %v5055
  %v5092 = vpack.c.b16 %v5058, %v5057
  %v5093 = vpack.c.b16 %v5060, %v5059
  %v5094 = vpack.c.b16 %v5062, %v5061
  %v5095 = vpack.c.b16 %v5064, %v5063
  %v5096 = vpack.c.b16 %v5066, %v5065
  %v5097 = vpack.c.b16 %v5068, %v5067
  %v5098 = vpack.c.b16 %v5070, %v5069
  %v5128 = vsel %vm2381, %v4267, 0
  %5130 = vmatprep.subr.bf16.mxu0 0
  %5131 = vmatpush1.bf16.msra.mxu0 %v5078
  %5132 = vmatprep.subr.bf16.mxu0 0
  %5133 = vmatpush1.bf16.msra.mxu0 %v5077
  %5134 = vmatprep.subr.bf16.mxu0 0
  %5135 = vmatpush1.bf16.msra.mxu0 %v5076
  %5136 = vmatprep.subr.bf16.mxu0 0
  %5137 = vmatpush1.bf16.msra.mxu0 %v5075
  %5138 = vmatprep.subr.bf16.mxu0 0
  %5139 = vmatpush1.bf16.msra.mxu0 %v5074
  %5140 = vmatprep.subr.bf16.mxu0 0
  %5141 = vmatpush1.bf16.msra.mxu0 %v5073
  %5142 = vmatprep.subr.bf16.mxu0 0
  %5143 = vmatpush1.bf16.msra.mxu0 %v5072
  %5144 = vmatprep.subr.bf16.mxu0 0
  %5145 = vmatpush1.bf16.msra.mxu0 %v5071
  %5146 = vmatprep.subr.bf16.mxu0 0
  %5147 = vmatpush2.bf16.msra.mxu0 %v5086
  %5148 = vmatprep.subr.bf16.mxu0 0
  %5149 = vmatpush2.bf16.msra.mxu0 %v5085
  %5150 = vmatprep.subr.bf16.mxu0 0
  %5151 = vmatpush2.bf16.msra.mxu0 %v5084
  %5152 = vmatprep.subr.bf16.mxu0 0
  %5153 = vmatpush2.bf16.msra.mxu0 %v5083
  %5154 = vmatprep.subr.bf16.mxu0 0
  %5155 = vmatpush2.bf16.msra.mxu0 %v5082
  %5156 = vmatprep.subr.bf16.mxu0 0
  %5157 = vmatpush2.bf16.msra.mxu0 %v5081
  %5158 = vmatprep.subr.bf16.mxu0 0
  %5159 = vmatpush2.bf16.msra.mxu0 %v5080
  %5160 = vmatprep.subr.bf16.mxu0 0
  %5161 = vmatpush2.bf16.msra.mxu0 %v5079
  %5162 = vmatprep.mubr.bf16.mxu0 %v4265
  %5163 = vmatmul.mubr.bf16.gmra.mxu0 %v4264
  %v5164 = vpop.f32.mrf.mxu0
  %v5165 = vadd.f32 0.0, %v5164
  %v5166 = vpop.f32.mrf.mxu0
  %v5167 = vpop.f32.mrf.mxu0
  %v5168 = vpop.f32.mrf.mxu0
  %5169 = vdwg.mxu0
  %5170 = vmatprep.subr.bf16.mxu0 0
  %5171 = vmatpush1.bf16.msra.mxu0 %v5094
  %5172 = vmatprep.subr.bf16.mxu0 0
  %5173 = vmatpush1.bf16.msra.mxu0 %v5093
  %5174 = vmatprep.subr.bf16.mxu0 0
  %5175 = vmatpush1.bf16.msra.mxu0 %v5092
  %5176 = vmatprep.subr.bf16.mxu0 0
  %5177 = vmatpush1.bf16.msra.mxu0 %v5091
  %5178 = vmatprep.subr.bf16.mxu0 0
  %5179 = vmatpush1.bf16.msra.mxu0 %v5090
  %5180 = vmatprep.subr.bf16.mxu0 0
  %5181 = vmatpush1.bf16.msra.mxu0 %v5089
  %5182 = vmatprep.subr.bf16.mxu0 0
  %5183 = vmatpush1.bf16.msra.mxu0 %v5088
  %5184 = vmatprep.subr.bf16.mxu0 0
  %5185 = vmatpush1.bf16.msra.mxu0 %v5087
  %5186 = vmatprep.subr.bf16.mxu0 0
  %5187 = vmatpush2.bf16.msra.mxu0 0
  %5188 = vmatprep.subr.bf16.mxu0 0
  %5189 = vmatpush2.bf16.msra.mxu0 0
  %5190 = vmatprep.subr.bf16.mxu0 0
  %5191 = vmatpush2.bf16.msra.mxu0 0
  %5192 = vmatprep.subr.bf16.mxu0 0
  %5193 = vmatpush2.bf16.msra.mxu0 0
  %5194 = vmatprep.subr.bf16.mxu0 0
  %5195 = vmatpush2.bf16.msra.mxu0 %v5098
  %5196 = vmatprep.subr.bf16.mxu0 0
  %5197 = vmatpush2.bf16.msra.mxu0 %v5097
  %5198 = vmatprep.subr.bf16.mxu0 0
  %5199 = vmatpush2.bf16.msra.mxu0 %v5096
  %5200 = vmatprep.subr.bf16.mxu0 0
  %5201 = vmatpush2.bf16.msra.mxu0 %v5095
  %5202 = vmatprep.mubr.bf16.mxu0 %v5128
  %5203 = vmatmul.mubr.bf16.gmra.mxu0 %v4266
  %v5204 = vpop.f32.mrf.mxu0
  %v5205 = vadd.f32 %v5165, %v5204
  %v5206 = vpop.f32.mrf.mxu0
  %v5207 = vpop.f32.mrf.mxu0
  %v5208 = vpop.f32.mrf.mxu0
  %5209 = vdwg.mxu0
  %v5210 = vadd.f32 %v4897, %v5205
  %s5211 = scalar_lea.vmem %s5, 672
  %v5212 = vld [vmem:[%s5211] sm:$0xf]
  %v5213 = vld [vmem:[%s5211 + $0x4] sm:$0xf]
  %v5214 = vld [vmem:[%s5211 + $0x8] sm:$0xf]
  %v5215 = vld [vmem:[%s5211 + $0xc] sm:$0xf]
  %v5216 = vld [vmem:[%s5211 + $0x10] sm:$0xf]
  %v5217 = vld [vmem:[%s5211 + $0x14] sm:$0xf]
  %v5218 = vld [vmem:[%s5211 + $0x18] sm:$0xf]
  %v5219 = vld [vmem:[%s5211 + $0x1c] sm:$0xf]
  %v5220 = vld [vmem:[%s5211 + $0x20] sm:$0xf]
  %v5221 = vld [vmem:[%s5211 + $0x24] sm:$0xf]
  %v5222 = vld [vmem:[%s5211 + $0x28] sm:$0xf]
  %v5223 = vld [vmem:[%s5211 + $0x2c] sm:$0xf]
  %v5224 = vld [vmem:[%s5211 + $0x30] sm:$0xf]
  %v5225 = vld [vmem:[%s5211 + $0x34] sm:$0xf]
  %v5226 = vld [vmem:[%s5211 + $0x38] sm:$0xf]
  %v5227 = vld [vmem:[%s5211 + $0x3c] sm:$0xf]
  %v5228 = vld [vmem:[%s5211 + $0x40] sm:$0xf]
  %v5229 = vld [vmem:[%s5211 + $0x44] sm:$0xf]
  %v5230 = vld [vmem:[%s5211 + $0x48] sm:$0xf]
  %v5231 = vld [vmem:[%s5211 + $0x4c] sm:$0xf]
  %v5232 = vld [vmem:[%s5211 + $0x50] sm:$0xf]
  %v5233 = vld [vmem:[%s5211 + $0x54] sm:$0xf]
  %v5234 = vld [vmem:[%s5211 + $0x58] sm:$0xf]
  %v5235 = vld [vmem:[%s5211 + $0x5c] sm:$0xf]
  %v5236 = vld [vmem:[%s5211 + $0x60] sm:$0xf]
  %v5237 = vld [vmem:[%s5211 + $0x64] sm:$0xf]
  %v5238 = vld [vmem:[%s5211 + $0x68] sm:$0xf]
  %v5239 = vld [vmem:[%s5211 + $0x6c] sm:$0xf]
  %v5240 = vld [vmem:[%s5211 + $0x70] sm:$0xf]
  %v5241 = vld [vmem:[%s5211 + $0x74] sm:$0xf]
  %v5242 = vld [vmem:[%s5211 + $0x78] sm:$0xf]
  %v5243 = vld [vmem:[%s5211 + $0x7c] sm:$0xf]
  %v5244 = vld [vmem:[%s5211 + $0x80] sm:$0xf]
  %v5245 = vld [vmem:[%s5211 + $0x84] sm:$0xf]
  %v5246 = vld [vmem:[%s5211 + $0x88] sm:$0xf]
  %v5247 = vld [vmem:[%s5211 + $0x8c] sm:$0xf]
  %v5248 = vld [vmem:[%s5211 + $0x90] sm:$0xf]
  %v5249 = vld [vmem:[%s5211 + $0x94] sm:$0xf]
  %v5250 = vld [vmem:[%s5211 + $0x98] sm:$0xf]
  %v5251 = vld [vmem:[%s5211 + $0x9c] sm:$0xf]
  %v5252 = vld [vmem:[%s5211 + $0xa0] sm:$0xf]
  %v5253 = vld [vmem:[%s5211 + $0xa4] sm:$0xf]
  %v5254 = vld [vmem:[%s5211 + $0xa8] sm:$0xf]
  %v5255 = vld [vmem:[%s5211 + $0xac] sm:$0xf]
  %v5256 = vld [vmem:[%s5211 + $0xb0] sm:$0xf]
  %v5257 = vld [vmem:[%s5211 + $0xb4] sm:$0xf]
  %v5258 = vld [vmem:[%s5211 + $0xb8] sm:$0xf]
  %v5259 = vld [vmem:[%s5211 + $0xbc] sm:$0xf]
  %v5260 = vld [vmem:[%s5211 + $0xc0] sm:$0xf]
  %v5261 = vld [vmem:[%s5211 + $0xc4] sm:$0xf]
  %v5262 = vld [vmem:[%s5211 + $0xc8] sm:$0xf]
  %v5263 = vld [vmem:[%s5211 + $0xcc] sm:$0xf]
  %v5264 = vld [vmem:[%s5211 + $0xd0] sm:$0xf]
  %v5265 = vld [vmem:[%s5211 + $0xd4] sm:$0xf]
  %v5266 = vld [vmem:[%s5211 + $0xd8] sm:$0xf]
  %v5267 = vld [vmem:[%s5211 + $0xdc] sm:$0xf]
  %v5272 = vrot.slane %v4264, 4
  %v5273 = vrot.slane %v4265, 4
  %v5274 = vrot.slane %v4266, 4
  %v5275 = vrot.slane %v4267, 4
  %v5335 = vunpack.c.l.b16 %v5212
  %v5336 = vunpack.c.l.b16 %v5213
  %v5337 = vunpack.c.l.b16 %v5214
  %v5338 = vunpack.c.l.b16 %v5215
  %v5339 = vunpack.c.l.b16 %v5216
  %v5340 = vunpack.c.l.b16 %v5217
  %v5341 = vunpack.c.l.b16 %v5218
  %v5342 = vunpack.c.l.b16 %v5219
  %v5343 = vunpack.c.l.b16 %v5220
  %v5344 = vunpack.c.l.b16 %v5221
  %v5345 = vunpack.c.l.b16 %v5222
  %v5346 = vunpack.c.l.b16 %v5223
  %v5347 = vunpack.c.l.b16 %v5224
  %v5348 = vunpack.c.l.b16 %v5225
  %v5349 = vunpack.c.l.b16 %v5226
  %v5350 = vunpack.c.l.b16 %v5227
  %v5351 = vunpack.c.l.b16 %v5228
  %v5352 = vunpack.c.l.b16 %v5229
  %v5353 = vunpack.c.l.b16 %v5230
  %v5354 = vunpack.c.l.b16 %v5231
  %v5355 = vunpack.c.l.b16 %v5232
  %v5356 = vunpack.c.l.b16 %v5233
  %v5357 = vunpack.c.l.b16 %v5234
  %v5358 = vunpack.c.l.b16 %v5235
  %v5359 = vunpack.c.l.b16 %v5236
  %v5360 = vunpack.c.l.b16 %v5237
  %v5361 = vunpack.c.l.b16 %v5238
  %v5362 = vunpack.c.l.b16 %v5239
  %v5363 = vunpack.c.l.b16 %v5240
  %v5364 = vunpack.c.l.b16 %v5241
  %v5365 = vunpack.c.l.b16 %v5242
  %v5366 = vunpack.c.l.b16 %v5243
  %v5367 = vunpack.c.l.b16 %v5244
  %v5368 = vunpack.c.l.b16 %v5245
  %v5369 = vunpack.c.l.b16 %v5246
  %v5370 = vunpack.c.l.b16 %v5247
  %v5371 = vunpack.c.l.b16 %v5248
  %v5372 = vunpack.c.l.b16 %v5249
  %v5373 = vunpack.c.l.b16 %v5250
  %v5374 = vunpack.c.l.b16 %v5251
  %v5375 = vunpack.c.l.b16 %v5252
  %v5376 = vunpack.c.l.b16 %v5253
  %v5377 = vunpack.c.l.b16 %v5254
  %v5378 = vunpack.c.l.b16 %v5255
  %v5379 = vunpack.c.l.b16 %v5256
  %v5380 = vunpack.c.l.b16 %v5257
  %v5381 = vunpack.c.l.b16 %v5258
  %v5382 = vunpack.c.l.b16 %v5259
  %v5383 = vunpack.c.l.b16 %v5260
  %v5384 = vunpack.c.l.b16 %v5261
  %v5385 = vunpack.c.l.b16 %v5262
  %v5386 = vunpack.c.l.b16 %v5263
  %v5387 = vunpack.c.l.b16 %v5264
  %v5388 = vunpack.c.l.b16 %v5265
  %v5389 = vunpack.c.l.b16 %v5266
  %v5390 = vunpack.c.l.b16 %v5267
  %v5391 = vpack.c.b16 %v5336, %v5335
  %v5392 = vpack.c.b16 %v5338, %v5337
  %v5393 = vpack.c.b16 %v5340, %v5339
  %v5394 = vpack.c.b16 %v5342, %v5341
  %v5395 = vpack.c.b16 %v5344, %v5343
  %v5396 = vpack.c.b16 %v5346, %v5345
  %v5397 = vpack.c.b16 %v5348, %v5347
  %v5398 = vpack.c.b16 %v5350, %v5349
  %v5399 = vpack.c.b16 %v5352, %v5351
  %v5400 = vpack.c.b16 %v5354, %v5353
  %v5401 = vpack.c.b16 %v5356, %v5355
  %v5402 = vpack.c.b16 %v5358, %v5357
  %v5403 = vpack.c.b16 %v5360, %v5359
  %v5404 = vpack.c.b16 %v5362, %v5361
  %v5405 = vpack.c.b16 %v5364, %v5363
  %v5406 = vpack.c.b16 %v5366, %v5365
  %v5407 = vpack.c.b16 %v5368, %v5367
  %v5408 = vpack.c.b16 %v5370, %v5369
  %v5409 = vpack.c.b16 %v5372, %v5371
  %v5410 = vpack.c.b16 %v5374, %v5373
  %v5411 = vpack.c.b16 %v5376, %v5375
  %v5412 = vpack.c.b16 %v5378, %v5377
  %v5413 = vpack.c.b16 %v5380, %v5379
  %v5414 = vpack.c.b16 %v5382, %v5381
  %v5415 = vpack.c.b16 %v5384, %v5383
  %v5416 = vpack.c.b16 %v5386, %v5385
  %v5417 = vpack.c.b16 %v5388, %v5387
  %v5418 = vpack.c.b16 %v5390, %v5389
  %v5448 = vsel %vm2381, %v5275, 0
  %5450 = vmatprep.subr.bf16.mxu0 0
  %5451 = vmatpush1.bf16.msra.mxu0 %v5398
  %5452 = vmatprep.subr.bf16.mxu0 0
  %5453 = vmatpush1.bf16.msra.mxu0 %v5397
  %5454 = vmatprep.subr.bf16.mxu0 0
  %5455 = vmatpush1.bf16.msra.mxu0 %v5396
  %5456 = vmatprep.subr.bf16.mxu0 0
  %5457 = vmatpush1.bf16.msra.mxu0 %v5395
  %5458 = vmatprep.subr.bf16.mxu0 0
  %5459 = vmatpush1.bf16.msra.mxu0 %v5394
  %5460 = vmatprep.subr.bf16.mxu0 0
  %5461 = vmatpush1.bf16.msra.mxu0 %v5393
  %5462 = vmatprep.subr.bf16.mxu0 0
  %5463 = vmatpush1.bf16.msra.mxu0 %v5392
  %5464 = vmatprep.subr.bf16.mxu0 0
  %5465 = vmatpush1.bf16.msra.mxu0 %v5391
  %5466 = vmatprep.subr.bf16.mxu0 0
  %5467 = vmatpush2.bf16.msra.mxu0 %v5406
  %5468 = vmatprep.subr.bf16.mxu0 0
  %5469 = vmatpush2.bf16.msra.mxu0 %v5405
  %5470 = vmatprep.subr.bf16.mxu0 0
  %5471 = vmatpush2.bf16.msra.mxu0 %v5404
  %5472 = vmatprep.subr.bf16.mxu0 0
  %5473 = vmatpush2.bf16.msra.mxu0 %v5403
  %5474 = vmatprep.subr.bf16.mxu0 0
  %5475 = vmatpush2.bf16.msra.mxu0 %v5402
  %5476 = vmatprep.subr.bf16.mxu0 0
  %5477 = vmatpush2.bf16.msra.mxu0 %v5401
  %5478 = vmatprep.subr.bf16.mxu0 0
  %5479 = vmatpush2.bf16.msra.mxu0 %v5400
  %5480 = vmatprep.subr.bf16.mxu0 0
  %5481 = vmatpush2.bf16.msra.mxu0 %v5399
  %5482 = vmatprep.mubr.bf16.mxu0 %v5273
  %5483 = vmatmul.mubr.bf16.gmra.mxu0 %v5272
  %v5484 = vpop.f32.mrf.mxu0
  %v5485 = vadd.f32 0.0, %v5484
  %v5486 = vpop.f32.mrf.mxu0
  %v5487 = vpop.f32.mrf.mxu0
  %v5488 = vpop.f32.mrf.mxu0
  %5489 = vdwg.mxu0
  %5490 = vmatprep.subr.bf16.mxu0 0
  %5491 = vmatpush1.bf16.msra.mxu0 %v5414
  %5492 = vmatprep.subr.bf16.mxu0 0
  %5493 = vmatpush1.bf16.msra.mxu0 %v5413
  %5494 = vmatprep.subr.bf16.mxu0 0
  %5495 = vmatpush1.bf16.msra.mxu0 %v5412
  %5496 = vmatprep.subr.bf16.mxu0 0
  %5497 = vmatpush1.bf16.msra.mxu0 %v5411
  %5498 = vmatprep.subr.bf16.mxu0 0
  %5499 = vmatpush1.bf16.msra.mxu0 %v5410
  %5500 = vmatprep.subr.bf16.mxu0 0
  %5501 = vmatpush1.bf16.msra.mxu0 %v5409
  %5502 = vmatprep.subr.bf16.mxu0 0
  %5503 = vmatpush1.bf16.msra.mxu0 %v5408
  %5504 = vmatprep.subr.bf16.mxu0 0
  %5505 = vmatpush1.bf16.msra.mxu0 %v5407
  %5506 = vmatprep.subr.bf16.mxu0 0
  %5507 = vmatpush2.bf16.msra.mxu0 0
  %5508 = vmatprep.subr.bf16.mxu0 0
  %5509 = vmatpush2.bf16.msra.mxu0 0
  %5510 = vmatprep.subr.bf16.mxu0 0
  %5511 = vmatpush2.bf16.msra.mxu0 0
  %5512 = vmatprep.subr.bf16.mxu0 0
  %5513 = vmatpush2.bf16.msra.mxu0 0
  %5514 = vmatprep.subr.bf16.mxu0 0
  %5515 = vmatpush2.bf16.msra.mxu0 %v5418
  %5516 = vmatprep.subr.bf16.mxu0 0
  %5517 = vmatpush2.bf16.msra.mxu0 %v5417
  %5518 = vmatprep.subr.bf16.mxu0 0
  %5519 = vmatpush2.bf16.msra.mxu0 %v5416
  %5520 = vmatprep.subr.bf16.mxu0 0
  %5521 = vmatpush2.bf16.msra.mxu0 %v5415
  %5522 = vmatprep.mubr.bf16.mxu0 %v5448
  %5523 = vmatmul.mubr.bf16.gmra.mxu0 %v5274
  %v5524 = vpop.f32.mrf.mxu0
  %v5525 = vadd.f32 %v5485, %v5524
  %v5526 = vpop.f32.mrf.mxu0
  %v5527 = vpop.f32.mrf.mxu0
  %v5528 = vpop.f32.mrf.mxu0
  %5529 = vdwg.mxu0
  %v5530 = vadd.f32 %v5210, %v5525
  %s5531 = scalar_lea.vmem %s5, 896
  %v5532 = vld [vmem:[%s5531] sm:$0xf]
  %v5533 = vld [vmem:[%s5531 + $0x4] sm:$0xf]
  %v5534 = vld [vmem:[%s5531 + $0x8] sm:$0xf]
  %v5535 = vld [vmem:[%s5531 + $0xc] sm:$0xf]
  %v5536 = vld [vmem:[%s5531 + $0x10] sm:$0xf]
  %v5537 = vld [vmem:[%s5531 + $0x14] sm:$0xf]
  %v5538 = vld [vmem:[%s5531 + $0x18] sm:$0xf]
  %v5539 = vld [vmem:[%s5531 + $0x1c] sm:$0xf]
  %v5540 = vld [vmem:[%s5531 + $0x20] sm:$0xf]
  %v5541 = vld [vmem:[%s5531 + $0x24] sm:$0xf]
  %v5542 = vld [vmem:[%s5531 + $0x28] sm:$0xf]
  %v5543 = vld [vmem:[%s5531 + $0x2c] sm:$0xf]
  %v5544 = vld [vmem:[%s5531 + $0x30] sm:$0xf]
  %v5545 = vld [vmem:[%s5531 + $0x34] sm:$0xf]
  %v5546 = vld [vmem:[%s5531 + $0x38] sm:$0xf]
  %v5547 = vld [vmem:[%s5531 + $0x3c] sm:$0xf]
  %v5548 = vld [vmem:[%s5531 + $0x40] sm:$0xf]
  %v5549 = vld [vmem:[%s5531 + $0x44] sm:$0xf]
  %v5550 = vld [vmem:[%s5531 + $0x48] sm:$0xf]
  %v5551 = vld [vmem:[%s5531 + $0x4c] sm:$0xf]
  %v5552 = vld [vmem:[%s5531 + $0x50] sm:$0xf]
  %v5553 = vld [vmem:[%s5531 + $0x54] sm:$0xf]
  %v5554 = vld [vmem:[%s5531 + $0x58] sm:$0xf]
  %v5555 = vld [vmem:[%s5531 + $0x5c] sm:$0xf]
  %v5556 = vld [vmem:[%s5531 + $0x60] sm:$0xf]
  %v5557 = vld [vmem:[%s5531 + $0x64] sm:$0xf]
  %v5558 = vld [vmem:[%s5531 + $0x68] sm:$0xf]
  %v5559 = vld [vmem:[%s5531 + $0x6c] sm:$0xf]
  %v5560 = vld [vmem:[%s5531 + $0x70] sm:$0xf]
  %v5561 = vld [vmem:[%s5531 + $0x74] sm:$0xf]
  %v5562 = vld [vmem:[%s5531 + $0x78] sm:$0xf]
  %v5563 = vld [vmem:[%s5531 + $0x7c] sm:$0xf]
  %v5564 = vld [vmem:[%s5531 + $0x80] sm:$0xf]
  %v5565 = vld [vmem:[%s5531 + $0x84] sm:$0xf]
  %v5566 = vld [vmem:[%s5531 + $0x88] sm:$0xf]
  %v5567 = vld [vmem:[%s5531 + $0x8c] sm:$0xf]
  %v5568 = vld [vmem:[%s5531 + $0x90] sm:$0xf]
  %v5569 = vld [vmem:[%s5531 + $0x94] sm:$0xf]
  %v5570 = vld [vmem:[%s5531 + $0x98] sm:$0xf]
  %v5571 = vld [vmem:[%s5531 + $0x9c] sm:$0xf]
  %v5572 = vld [vmem:[%s5531 + $0xa0] sm:$0xf]
  %v5573 = vld [vmem:[%s5531 + $0xa4] sm:$0xf]
  %v5574 = vld [vmem:[%s5531 + $0xa8] sm:$0xf]
  %v5575 = vld [vmem:[%s5531 + $0xac] sm:$0xf]
  %v5576 = vld [vmem:[%s5531 + $0xb0] sm:$0xf]
  %v5577 = vld [vmem:[%s5531 + $0xb4] sm:$0xf]
  %v5578 = vld [vmem:[%s5531 + $0xb8] sm:$0xf]
  %v5579 = vld [vmem:[%s5531 + $0xbc] sm:$0xf]
  %v5580 = vld [vmem:[%s5531 + $0xc0] sm:$0xf]
  %v5581 = vld [vmem:[%s5531 + $0xc4] sm:$0xf]
  %v5582 = vld [vmem:[%s5531 + $0xc8] sm:$0xf]
  %v5583 = vld [vmem:[%s5531 + $0xcc] sm:$0xf]
  %v5584 = vld [vmem:[%s5531 + $0xd0] sm:$0xf]
  %v5585 = vld [vmem:[%s5531 + $0xd4] sm:$0xf]
  %v5586 = vld [vmem:[%s5531 + $0xd8] sm:$0xf]
  %v5587 = vld [vmem:[%s5531 + $0xdc] sm:$0xf]
  %v5644 = vunpack.c.l.b16 %v5532
  %v5645 = vunpack.c.l.b16 %v5533
  %v5646 = vunpack.c.l.b16 %v5534
  %v5647 = vunpack.c.l.b16 %v5535
  %v5648 = vunpack.c.l.b16 %v5536
  %v5649 = vunpack.c.l.b16 %v5537
  %v5650 = vunpack.c.l.b16 %v5538
  %v5651 = vunpack.c.l.b16 %v5539
  %v5652 = vunpack.c.l.b16 %v5540
  %v5653 = vunpack.c.l.b16 %v5541
  %v5654 = vunpack.c.l.b16 %v5542
  %v5655 = vunpack.c.l.b16 %v5543
  %v5656 = vunpack.c.l.b16 %v5544
  %v5657 = vunpack.c.l.b16 %v5545
  %v5658 = vunpack.c.l.b16 %v5546
  %v5659 = vunpack.c.l.b16 %v5547
  %v5660 = vunpack.c.l.b16 %v5548
  %v5661 = vunpack.c.l.b16 %v5549
  %v5662 = vunpack.c.l.b16 %v5550
  %v5663 = vunpack.c.l.b16 %v5551
  %v5664 = vunpack.c.l.b16 %v5552
  %v5665 = vunpack.c.l.b16 %v5553
  %v5666 = vunpack.c.l.b16 %v5554
  %v5667 = vunpack.c.l.b16 %v5555
  %v5668 = vunpack.c.l.b16 %v5556
  %v5669 = vunpack.c.l.b16 %v5557
  %v5670 = vunpack.c.l.b16 %v5558
  %v5671 = vunpack.c.l.b16 %v5559
  %v5672 = vunpack.c.l.b16 %v5560
  %v5673 = vunpack.c.l.b16 %v5561
  %v5674 = vunpack.c.l.b16 %v5562
  %v5675 = vunpack.c.l.b16 %v5563
  %v5676 = vunpack.c.l.b16 %v5564
  %v5677 = vunpack.c.l.b16 %v5565
  %v5678 = vunpack.c.l.b16 %v5566
  %v5679 = vunpack.c.l.b16 %v5567
  %v5680 = vunpack.c.l.b16 %v5568
  %v5681 = vunpack.c.l.b16 %v5569
  %v5682 = vunpack.c.l.b16 %v5570
  %v5683 = vunpack.c.l.b16 %v5571
  %v5684 = vunpack.c.l.b16 %v5572
  %v5685 = vunpack.c.l.b16 %v5573
  %v5686 = vunpack.c.l.b16 %v5574
  %v5687 = vunpack.c.l.b16 %v5575
  %v5688 = vunpack.c.l.b16 %v5576
  %v5689 = vunpack.c.l.b16 %v5577
  %v5690 = vunpack.c.l.b16 %v5578
  %v5691 = vunpack.c.l.b16 %v5579
  %v5692 = vunpack.c.l.b16 %v5580
  %v5693 = vunpack.c.l.b16 %v5581
  %v5694 = vunpack.c.l.b16 %v5582
  %v5695 = vunpack.c.l.b16 %v5583
  %v5696 = vunpack.c.l.b16 %v5584
  %v5697 = vunpack.c.l.b16 %v5585
  %v5698 = vunpack.c.l.b16 %v5586
  %v5699 = vunpack.c.l.b16 %v5587
  %v5700 = vpack.c.b16 %v5645, %v5644
  %v5701 = vpack.c.b16 %v5647, %v5646
  %v5702 = vpack.c.b16 %v5649, %v5648
  %v5703 = vpack.c.b16 %v5651, %v5650
  %v5704 = vpack.c.b16 %v5653, %v5652
  %v5705 = vpack.c.b16 %v5655, %v5654
  %v5706 = vpack.c.b16 %v5657, %v5656
  %v5707 = vpack.c.b16 %v5659, %v5658
  %v5708 = vpack.c.b16 %v5661, %v5660
  %v5709 = vpack.c.b16 %v5663, %v5662
  %v5710 = vpack.c.b16 %v5665, %v5664
  %v5711 = vpack.c.b16 %v5667, %v5666
  %v5712 = vpack.c.b16 %v5669, %v5668
  %v5713 = vpack.c.b16 %v5671, %v5670
  %v5714 = vpack.c.b16 %v5673, %v5672
  %v5715 = vpack.c.b16 %v5675, %v5674
  %v5716 = vpack.c.b16 %v5677, %v5676
  %v5717 = vpack.c.b16 %v5679, %v5678
  %v5718 = vpack.c.b16 %v5681, %v5680
  %v5719 = vpack.c.b16 %v5683, %v5682
  %v5720 = vpack.c.b16 %v5685, %v5684
  %v5721 = vpack.c.b16 %v5687, %v5686
  %v5722 = vpack.c.b16 %v5689, %v5688
  %v5723 = vpack.c.b16 %v5691, %v5690
  %v5724 = vpack.c.b16 %v5693, %v5692
  %v5725 = vpack.c.b16 %v5695, %v5694
  %v5726 = vpack.c.b16 %v5697, %v5696
  %v5727 = vpack.c.b16 %v5699, %v5698
  %v5757 = vsel %vm2381, %v4271, 0
  %5759 = vmatprep.subr.bf16.mxu0 0
  %5760 = vmatpush1.bf16.msra.mxu0 %v5707
  %5761 = vmatprep.subr.bf16.mxu0 0
  %5762 = vmatpush1.bf16.msra.mxu0 %v5706
  %5763 = vmatprep.subr.bf16.mxu0 0
  %5764 = vmatpush1.bf16.msra.mxu0 %v5705
  %5765 = vmatprep.subr.bf16.mxu0 0
  %5766 = vmatpush1.bf16.msra.mxu0 %v5704
  %5767 = vmatprep.subr.bf16.mxu0 0
  %5768 = vmatpush1.bf16.msra.mxu0 %v5703
  %5769 = vmatprep.subr.bf16.mxu0 0
  %5770 = vmatpush1.bf16.msra.mxu0 %v5702
  %5771 = vmatprep.subr.bf16.mxu0 0
  %5772 = vmatpush1.bf16.msra.mxu0 %v5701
  %5773 = vmatprep.subr.bf16.mxu0 0
  %5774 = vmatpush1.bf16.msra.mxu0 %v5700
  %5775 = vmatprep.subr.bf16.mxu0 0
  %5776 = vmatpush2.bf16.msra.mxu0 %v5715
  %5777 = vmatprep.subr.bf16.mxu0 0
  %5778 = vmatpush2.bf16.msra.mxu0 %v5714
  %5779 = vmatprep.subr.bf16.mxu0 0
  %5780 = vmatpush2.bf16.msra.mxu0 %v5713
  %5781 = vmatprep.subr.bf16.mxu0 0
  %5782 = vmatpush2.bf16.msra.mxu0 %v5712
  %5783 = vmatprep.subr.bf16.mxu0 0
  %5784 = vmatpush2.bf16.msra.mxu0 %v5711
  %5785 = vmatprep.subr.bf16.mxu0 0
  %5786 = vmatpush2.bf16.msra.mxu0 %v5710
  %5787 = vmatprep.subr.bf16.mxu0 0
  %5788 = vmatpush2.bf16.msra.mxu0 %v5709
  %5789 = vmatprep.subr.bf16.mxu0 0
  %5790 = vmatpush2.bf16.msra.mxu0 %v5708
  %5791 = vmatprep.mubr.bf16.mxu0 %v4269
  %5792 = vmatmul.mubr.bf16.gmra.mxu0 %v4268
  %v5793 = vpop.f32.mrf.mxu0
  %v5794 = vadd.f32 0.0, %v5793
  %v5795 = vpop.f32.mrf.mxu0
  %v5796 = vpop.f32.mrf.mxu0
  %v5797 = vpop.f32.mrf.mxu0
  %5798 = vdwg.mxu0
  %5799 = vmatprep.subr.bf16.mxu0 0
  %5800 = vmatpush1.bf16.msra.mxu0 %v5723
  %5801 = vmatprep.subr.bf16.mxu0 0
  %5802 = vmatpush1.bf16.msra.mxu0 %v5722
  %5803 = vmatprep.subr.bf16.mxu0 0
  %5804 = vmatpush1.bf16.msra.mxu0 %v5721
  %5805 = vmatprep.subr.bf16.mxu0 0
  %5806 = vmatpush1.bf16.msra.mxu0 %v5720
  %5807 = vmatprep.subr.bf16.mxu0 0
  %5808 = vmatpush1.bf16.msra.mxu0 %v5719
  %5809 = vmatprep.subr.bf16.mxu0 0
  %5810 = vmatpush1.bf16.msra.mxu0 %v5718
  %5811 = vmatprep.subr.bf16.mxu0 0
  %5812 = vmatpush1.bf16.msra.mxu0 %v5717
  %5813 = vmatprep.subr.bf16.mxu0 0
  %5814 = vmatpush1.bf16.msra.mxu0 %v5716
  %5815 = vmatprep.subr.bf16.mxu0 0
  %5816 = vmatpush2.bf16.msra.mxu0 0
  %5817 = vmatprep.subr.bf16.mxu0 0
  %5818 = vmatpush2.bf16.msra.mxu0 0
  %5819 = vmatprep.subr.bf16.mxu0 0
  %5820 = vmatpush2.bf16.msra.mxu0 0
  %5821 = vmatprep.subr.bf16.mxu0 0
  %5822 = vmatpush2.bf16.msra.mxu0 0
  %5823 = vmatprep.subr.bf16.mxu0 0
  %5824 = vmatpush2.bf16.msra.mxu0 %v5727
  %5825 = vmatprep.subr.bf16.mxu0 0
  %5826 = vmatpush2.bf16.msra.mxu0 %v5726
  %5827 = vmatprep.subr.bf16.mxu0 0
  %5828 = vmatpush2.bf16.msra.mxu0 %v5725
  %5829 = vmatprep.subr.bf16.mxu0 0
  %5830 = vmatpush2.bf16.msra.mxu0 %v5724
  %5831 = vmatprep.mubr.bf16.mxu0 %v5757
  %5832 = vmatmul.mubr.bf16.gmra.mxu0 %v4270
  %v5833 = vpop.f32.mrf.mxu0
  %v5834 = vadd.f32 %v5794, %v5833
  %v5835 = vpop.f32.mrf.mxu0
  %v5836 = vpop.f32.mrf.mxu0
  %v5837 = vpop.f32.mrf.mxu0
  %5838 = vdwg.mxu0
  %v5839 = vadd.f32 %v5530, %v5834
  %s5840 = scalar_lea.vmem %s5, 1120
  %v5841 = vld [vmem:[%s5840] sm:$0xf]
  %v5842 = vld [vmem:[%s5840 + $0x4] sm:$0xf]
  %v5843 = vld [vmem:[%s5840 + $0x8] sm:$0xf]
  %v5844 = vld [vmem:[%s5840 + $0xc] sm:$0xf]
  %v5845 = vld [vmem:[%s5840 + $0x10] sm:$0xf]
  %v5846 = vld [vmem:[%s5840 + $0x14] sm:$0xf]
  %v5847 = vld [vmem:[%s5840 + $0x18] sm:$0xf]
  %v5848 = vld [vmem:[%s5840 + $0x1c] sm:$0xf]
  %v5849 = vld [vmem:[%s5840 + $0x20] sm:$0xf]
  %v5850 = vld [vmem:[%s5840 + $0x24] sm:$0xf]
  %v5851 = vld [vmem:[%s5840 + $0x28] sm:$0xf]
  %v5852 = vld [vmem:[%s5840 + $0x2c] sm:$0xf]
  %v5853 = vld [vmem:[%s5840 + $0x30] sm:$0xf]
  %v5854 = vld [vmem:[%s5840 + $0x34] sm:$0xf]
  %v5855 = vld [vmem:[%s5840 + $0x38] sm:$0xf]
  %v5856 = vld [vmem:[%s5840 + $0x3c] sm:$0xf]
  %v5857 = vld [vmem:[%s5840 + $0x40] sm:$0xf]
  %v5858 = vld [vmem:[%s5840 + $0x44] sm:$0xf]
  %v5859 = vld [vmem:[%s5840 + $0x48] sm:$0xf]
  %v5860 = vld [vmem:[%s5840 + $0x4c] sm:$0xf]
  %v5861 = vld [vmem:[%s5840 + $0x50] sm:$0xf]
  %v5862 = vld [vmem:[%s5840 + $0x54] sm:$0xf]
  %v5863 = vld [vmem:[%s5840 + $0x58] sm:$0xf]
  %v5864 = vld [vmem:[%s5840 + $0x5c] sm:$0xf]
  %v5865 = vld [vmem:[%s5840 + $0x60] sm:$0xf]
  %v5866 = vld [vmem:[%s5840 + $0x64] sm:$0xf]
  %v5867 = vld [vmem:[%s5840 + $0x68] sm:$0xf]
  %v5868 = vld [vmem:[%s5840 + $0x6c] sm:$0xf]
  %v5869 = vld [vmem:[%s5840 + $0x70] sm:$0xf]
  %v5870 = vld [vmem:[%s5840 + $0x74] sm:$0xf]
  %v5871 = vld [vmem:[%s5840 + $0x78] sm:$0xf]
  %v5872 = vld [vmem:[%s5840 + $0x7c] sm:$0xf]
  %v5873 = vld [vmem:[%s5840 + $0x80] sm:$0xf]
  %v5874 = vld [vmem:[%s5840 + $0x84] sm:$0xf]
  %v5875 = vld [vmem:[%s5840 + $0x88] sm:$0xf]
  %v5876 = vld [vmem:[%s5840 + $0x8c] sm:$0xf]
  %v5877 = vld [vmem:[%s5840 + $0x90] sm:$0xf]
  %v5878 = vld [vmem:[%s5840 + $0x94] sm:$0xf]
  %v5879 = vld [vmem:[%s5840 + $0x98] sm:$0xf]
  %v5880 = vld [vmem:[%s5840 + $0x9c] sm:$0xf]
  %v5881 = vld [vmem:[%s5840 + $0xa0] sm:$0xf]
  %v5882 = vld [vmem:[%s5840 + $0xa4] sm:$0xf]
  %v5883 = vld [vmem:[%s5840 + $0xa8] sm:$0xf]
  %v5884 = vld [vmem:[%s5840 + $0xac] sm:$0xf]
  %v5885 = vld [vmem:[%s5840 + $0xb0] sm:$0xf]
  %v5886 = vld [vmem:[%s5840 + $0xb4] sm:$0xf]
  %v5887 = vld [vmem:[%s5840 + $0xb8] sm:$0xf]
  %v5888 = vld [vmem:[%s5840 + $0xbc] sm:$0xf]
  %v5889 = vld [vmem:[%s5840 + $0xc0] sm:$0xf]
  %v5890 = vld [vmem:[%s5840 + $0xc4] sm:$0xf]
  %v5891 = vld [vmem:[%s5840 + $0xc8] sm:$0xf]
  %v5892 = vld [vmem:[%s5840 + $0xcc] sm:$0xf]
  %v5893 = vld [vmem:[%s5840 + $0xd0] sm:$0xf]
  %v5894 = vld [vmem:[%s5840 + $0xd4] sm:$0xf]
  %v5895 = vld [vmem:[%s5840 + $0xd8] sm:$0xf]
  %v5896 = vld [vmem:[%s5840 + $0xdc] sm:$0xf]
  %v5901 = vrot.slane %v4268, 4
  %v5902 = vrot.slane %v4269, 4
  %v5903 = vrot.slane %v4270, 4
  %v5904 = vrot.slane %v4271, 4
  %v5964 = vunpack.c.l.b16 %v5841
  %v5965 = vunpack.c.l.b16 %v5842
  %v5966 = vunpack.c.l.b16 %v5843
  %v5967 = vunpack.c.l.b16 %v5844
  %v5968 = vunpack.c.l.b16 %v5845
  %v5969 = vunpack.c.l.b16 %v5846
  %v5970 = vunpack.c.l.b16 %v5847
  %v5971 = vunpack.c.l.b16 %v5848
  %v5972 = vunpack.c.l.b16 %v5849
  %v5973 = vunpack.c.l.b16 %v5850
  %v5974 = vunpack.c.l.b16 %v5851
  %v5975 = vunpack.c.l.b16 %v5852
  %v5976 = vunpack.c.l.b16 %v5853
  %v5977 = vunpack.c.l.b16 %v5854
  %v5978 = vunpack.c.l.b16 %v5855
  %v5979 = vunpack.c.l.b16 %v5856
  %v5980 = vunpack.c.l.b16 %v5857
  %v5981 = vunpack.c.l.b16 %v5858
  %v5982 = vunpack.c.l.b16 %v5859
  %v5983 = vunpack.c.l.b16 %v5860
  %v5984 = vunpack.c.l.b16 %v5861
  %v5985 = vunpack.c.l.b16 %v5862
  %v5986 = vunpack.c.l.b16 %v5863
  %v5987 = vunpack.c.l.b16 %v5864
  %v5988 = vunpack.c.l.b16 %v5865
  %v5989 = vunpack.c.l.b16 %v5866
  %v5990 = vunpack.c.l.b16 %v5867
  %v5991 = vunpack.c.l.b16 %v5868
  %v5992 = vunpack.c.l.b16 %v5869
  %v5993 = vunpack.c.l.b16 %v5870
  %v5994 = vunpack.c.l.b16 %v5871
  %v5995 = vunpack.c.l.b16 %v5872
  %v5996 = vunpack.c.l.b16 %v5873
  %v5997 = vunpack.c.l.b16 %v5874
  %v5998 = vunpack.c.l.b16 %v5875
  %v5999 = vunpack.c.l.b16 %v5876
  %v6000 = vunpack.c.l.b16 %v5877
  %v6001 = vunpack.c.l.b16 %v5878
  %v6002 = vunpack.c.l.b16 %v5879
  %v6003 = vunpack.c.l.b16 %v5880
  %v6004 = vunpack.c.l.b16 %v5881
  %v6005 = vunpack.c.l.b16 %v5882
  %v6006 = vunpack.c.l.b16 %v5883
  %v6007 = vunpack.c.l.b16 %v5884
  %v6008 = vunpack.c.l.b16 %v5885
  %v6009 = vunpack.c.l.b16 %v5886
  %v6010 = vunpack.c.l.b16 %v5887
  %v6011 = vunpack.c.l.b16 %v5888
  %v6012 = vunpack.c.l.b16 %v5889
  %v6013 = vunpack.c.l.b16 %v5890
  %v6014 = vunpack.c.l.b16 %v5891
  %v6015 = vunpack.c.l.b16 %v5892
  %v6016 = vunpack.c.l.b16 %v5893
  %v6017 = vunpack.c.l.b16 %v5894
  %v6018 = vunpack.c.l.b16 %v5895
  %v6019 = vunpack.c.l.b16 %v5896
  %v6020 = vpack.c.b16 %v5965, %v5964
  %v6021 = vpack.c.b16 %v5967, %v5966
  %v6022 = vpack.c.b16 %v5969, %v5968
  %v6023 = vpack.c.b16 %v5971, %v5970
  %v6024 = vpack.c.b16 %v5973, %v5972
  %v6025 = vpack.c.b16 %v5975, %v5974
  %v6026 = vpack.c.b16 %v5977, %v5976
  %v6027 = vpack.c.b16 %v5979, %v5978
  %v6028 = vpack.c.b16 %v5981, %v5980
  %v6029 = vpack.c.b16 %v5983, %v5982
  %v6030 = vpack.c.b16 %v5985, %v5984
  %v6031 = vpack.c.b16 %v5987, %v5986
  %v6032 = vpack.c.b16 %v5989, %v5988
  %v6033 = vpack.c.b16 %v5991, %v5990
  %v6034 = vpack.c.b16 %v5993, %v5992
  %v6035 = vpack.c.b16 %v5995, %v5994
  %v6036 = vpack.c.b16 %v5997, %v5996
  %v6037 = vpack.c.b16 %v5999, %v5998
  %v6038 = vpack.c.b16 %v6001, %v6000
  %v6039 = vpack.c.b16 %v6003, %v6002
  %v6040 = vpack.c.b16 %v6005, %v6004
  %v6041 = vpack.c.b16 %v6007, %v6006
  %v6042 = vpack.c.b16 %v6009, %v6008
  %v6043 = vpack.c.b16 %v6011, %v6010
  %v6044 = vpack.c.b16 %v6013, %v6012
  %v6045 = vpack.c.b16 %v6015, %v6014
  %v6046 = vpack.c.b16 %v6017, %v6016
  %v6047 = vpack.c.b16 %v6019, %v6018
  %v6077 = vsel %vm2381, %v5904, 0
  %6079 = vmatprep.subr.bf16.mxu0 0
  %6080 = vmatpush1.bf16.msra.mxu0 %v6027
  %6081 = vmatprep.subr.bf16.mxu0 0
  %6082 = vmatpush1.bf16.msra.mxu0 %v6026
  %6083 = vmatprep.subr.bf16.mxu0 0
  %6084 = vmatpush1.bf16.msra.mxu0 %v6025
  %6085 = vmatprep.subr.bf16.mxu0 0
  %6086 = vmatpush1.bf16.msra.mxu0 %v6024
  %6087 = vmatprep.subr.bf16.mxu0 0
  %6088 = vmatpush1.bf16.msra.mxu0 %v6023
  %6089 = vmatprep.subr.bf16.mxu0 0
  %6090 = vmatpush1.bf16.msra.mxu0 %v6022
  %6091 = vmatprep.subr.bf16.mxu0 0
  %6092 = vmatpush1.bf16.msra.mxu0 %v6021
  %6093 = vmatprep.subr.bf16.mxu0 0
  %6094 = vmatpush1.bf16.msra.mxu0 %v6020
  %6095 = vmatprep.subr.bf16.mxu0 0
  %6096 = vmatpush2.bf16.msra.mxu0 %v6035
  %6097 = vmatprep.subr.bf16.mxu0 0
  %6098 = vmatpush2.bf16.msra.mxu0 %v6034
  %6099 = vmatprep.subr.bf16.mxu0 0
  %6100 = vmatpush2.bf16.msra.mxu0 %v6033
  %6101 = vmatprep.subr.bf16.mxu0 0
  %6102 = vmatpush2.bf16.msra.mxu0 %v6032
  %6103 = vmatprep.subr.bf16.mxu0 0
  %6104 = vmatpush2.bf16.msra.mxu0 %v6031
  %6105 = vmatprep.subr.bf16.mxu0 0
  %6106 = vmatpush2.bf16.msra.mxu0 %v6030
  %6107 = vmatprep.subr.bf16.mxu0 0
  %6108 = vmatpush2.bf16.msra.mxu0 %v6029
  %6109 = vmatprep.subr.bf16.mxu0 0
  %6110 = vmatpush2.bf16.msra.mxu0 %v6028
  %6111 = vmatprep.mubr.bf16.mxu0 %v5902
  %6112 = vmatmul.mubr.bf16.gmra.mxu0 %v5901
  %v6113 = vpop.f32.mrf.mxu0
  %v6114 = vadd.f32 0.0, %v6113
  %v6115 = vpop.f32.mrf.mxu0
  %v6116 = vpop.f32.mrf.mxu0
  %v6117 = vpop.f32.mrf.mxu0
  %6118 = vdwg.mxu0
  %6119 = vmatprep.subr.bf16.mxu0 0
  %6120 = vmatpush1.bf16.msra.mxu0 %v6043
  %6121 = vmatprep.subr.bf16.mxu0 0
  %6122 = vmatpush1.bf16.msra.mxu0 %v6042
  %6123 = vmatprep.subr.bf16.mxu0 0
  %6124 = vmatpush1.bf16.msra.mxu0 %v6041
  %6125 = vmatprep.subr.bf16.mxu0 0
  %6126 = vmatpush1.bf16.msra.mxu0 %v6040
  %6127 = vmatprep.subr.bf16.mxu0 0
  %6128 = vmatpush1.bf16.msra.mxu0 %v6039
  %6129 = vmatprep.subr.bf16.mxu0 0
  %6130 = vmatpush1.bf16.msra.mxu0 %v6038
  %6131 = vmatprep.subr.bf16.mxu0 0
  %6132 = vmatpush1.bf16.msra.mxu0 %v6037
  %6133 = vmatprep.subr.bf16.mxu0 0
  %6134 = vmatpush1.bf16.msra.mxu0 %v6036
  %6135 = vmatprep.subr.bf16.mxu0 0
  %6136 = vmatpush2.bf16.msra.mxu0 0
  %6137 = vmatprep.subr.bf16.mxu0 0
  %6138 = vmatpush2.bf16.msra.mxu0 0
  %6139 = vmatprep.subr.bf16.mxu0 0
  %6140 = vmatpush2.bf16.msra.mxu0 0
  %6141 = vmatprep.subr.bf16.mxu0 0
  %6142 = vmatpush2.bf16.msra.mxu0 0
  %6143 = vmatprep.subr.bf16.mxu0 0
  %6144 = vmatpush2.bf16.msra.mxu0 %v6047
  %6145 = vmatprep.subr.bf16.mxu0 0
  %6146 = vmatpush2.bf16.msra.mxu0 %v6046
  %6147 = vmatprep.subr.bf16.mxu0 0
  %6148 = vmatpush2.bf16.msra.mxu0 %v6045
  %6149 = vmatprep.subr.bf16.mxu0 0
  %6150 = vmatpush2.bf16.msra.mxu0 %v6044
  %6151 = vmatprep.mubr.bf16.mxu0 %v6077
  %6152 = vmatmul.mubr.bf16.gmra.mxu0 %v5903
  %v6153 = vpop.f32.mrf.mxu0
  %v6154 = vadd.f32 %v6114, %v6153
  %v6155 = vpop.f32.mrf.mxu0
  %v6156 = vpop.f32.mrf.mxu0
  %v6157 = vpop.f32.mrf.mxu0
  %6158 = vdwg.mxu0
  %v6159 = vadd.f32 %v5839, %v6154
  %s6160 = scalar_lea.vmem %s5, 1344
  %v6161 = vld [vmem:[%s6160] sm:$0xf]
  %v6162 = vld [vmem:[%s6160 + $0x4] sm:$0xf]
  %v6163 = vld [vmem:[%s6160 + $0x8] sm:$0xf]
  %v6164 = vld [vmem:[%s6160 + $0xc] sm:$0xf]
  %v6165 = vld [vmem:[%s6160 + $0x10] sm:$0xf]
  %v6166 = vld [vmem:[%s6160 + $0x14] sm:$0xf]
  %v6167 = vld [vmem:[%s6160 + $0x18] sm:$0xf]
  %v6168 = vld [vmem:[%s6160 + $0x1c] sm:$0xf]
  %v6169 = vld [vmem:[%s6160 + $0x20] sm:$0xf]
  %v6170 = vld [vmem:[%s6160 + $0x24] sm:$0xf]
  %v6171 = vld [vmem:[%s6160 + $0x28] sm:$0xf]
  %v6172 = vld [vmem:[%s6160 + $0x2c] sm:$0xf]
  %v6173 = vld [vmem:[%s6160 + $0x30] sm:$0xf]
  %v6174 = vld [vmem:[%s6160 + $0x34] sm:$0xf]
  %v6175 = vld [vmem:[%s6160 + $0x38] sm:$0xf]
  %v6176 = vld [vmem:[%s6160 + $0x3c] sm:$0xf]
  %v6177 = vld [vmem:[%s6160 + $0x40] sm:$0xf]
  %v6178 = vld [vmem:[%s6160 + $0x44] sm:$0xf]
  %v6179 = vld [vmem:[%s6160 + $0x48] sm:$0xf]
  %v6180 = vld [vmem:[%s6160 + $0x4c] sm:$0xf]
  %v6181 = vld [vmem:[%s6160 + $0x50] sm:$0xf]
  %v6182 = vld [vmem:[%s6160 + $0x54] sm:$0xf]
  %v6183 = vld [vmem:[%s6160 + $0x58] sm:$0xf]
  %v6184 = vld [vmem:[%s6160 + $0x5c] sm:$0xf]
  %v6185 = vld [vmem:[%s6160 + $0x60] sm:$0xf]
  %v6186 = vld [vmem:[%s6160 + $0x64] sm:$0xf]
  %v6187 = vld [vmem:[%s6160 + $0x68] sm:$0xf]
  %v6188 = vld [vmem:[%s6160 + $0x6c] sm:$0xf]
  %v6189 = vld [vmem:[%s6160 + $0x70] sm:$0xf]
  %v6190 = vld [vmem:[%s6160 + $0x74] sm:$0xf]
  %v6191 = vld [vmem:[%s6160 + $0x78] sm:$0xf]
  %v6192 = vld [vmem:[%s6160 + $0x7c] sm:$0xf]
  %v6193 = vld [vmem:[%s6160 + $0x80] sm:$0xf]
  %v6194 = vld [vmem:[%s6160 + $0x84] sm:$0xf]
  %v6195 = vld [vmem:[%s6160 + $0x88] sm:$0xf]
  %v6196 = vld [vmem:[%s6160 + $0x8c] sm:$0xf]
  %v6197 = vld [vmem:[%s6160 + $0x90] sm:$0xf]
  %v6198 = vld [vmem:[%s6160 + $0x94] sm:$0xf]
  %v6199 = vld [vmem:[%s6160 + $0x98] sm:$0xf]
  %v6200 = vld [vmem:[%s6160 + $0x9c] sm:$0xf]
  %v6201 = vld [vmem:[%s6160 + $0xa0] sm:$0xf]
  %v6202 = vld [vmem:[%s6160 + $0xa4] sm:$0xf]
  %v6203 = vld [vmem:[%s6160 + $0xa8] sm:$0xf]
  %v6204 = vld [vmem:[%s6160 + $0xac] sm:$0xf]
  %v6205 = vld [vmem:[%s6160 + $0xb0] sm:$0xf]
  %v6206 = vld [vmem:[%s6160 + $0xb4] sm:$0xf]
  %v6207 = vld [vmem:[%s6160 + $0xb8] sm:$0xf]
  %v6208 = vld [vmem:[%s6160 + $0xbc] sm:$0xf]
  %v6209 = vld [vmem:[%s6160 + $0xc0] sm:$0xf]
  %v6210 = vld [vmem:[%s6160 + $0xc4] sm:$0xf]
  %v6211 = vld [vmem:[%s6160 + $0xc8] sm:$0xf]
  %v6212 = vld [vmem:[%s6160 + $0xcc] sm:$0xf]
  %v6213 = vld [vmem:[%s6160 + $0xd0] sm:$0xf]
  %v6214 = vld [vmem:[%s6160 + $0xd4] sm:$0xf]
  %v6215 = vld [vmem:[%s6160 + $0xd8] sm:$0xf]
  %v6216 = vld [vmem:[%s6160 + $0xdc] sm:$0xf]
  %v6273 = vunpack.c.l.b16 %v6161
  %v6274 = vunpack.c.l.b16 %v6162
  %v6275 = vunpack.c.l.b16 %v6163
  %v6276 = vunpack.c.l.b16 %v6164
  %v6277 = vunpack.c.l.b16 %v6165
  %v6278 = vunpack.c.l.b16 %v6166
  %v6279 = vunpack.c.l.b16 %v6167
  %v6280 = vunpack.c.l.b16 %v6168
  %v6281 = vunpack.c.l.b16 %v6169
  %v6282 = vunpack.c.l.b16 %v6170
  %v6283 = vunpack.c.l.b16 %v6171
  %v6284 = vunpack.c.l.b16 %v6172
  %v6285 = vunpack.c.l.b16 %v6173
  %v6286 = vunpack.c.l.b16 %v6174
  %v6287 = vunpack.c.l.b16 %v6175
  %v6288 = vunpack.c.l.b16 %v6176
  %v6289 = vunpack.c.l.b16 %v6177
  %v6290 = vunpack.c.l.b16 %v6178
  %v6291 = vunpack.c.l.b16 %v6179
  %v6292 = vunpack.c.l.b16 %v6180
  %v6293 = vunpack.c.l.b16 %v6181
  %v6294 = vunpack.c.l.b16 %v6182
  %v6295 = vunpack.c.l.b16 %v6183
  %v6296 = vunpack.c.l.b16 %v6184
  %v6297 = vunpack.c.l.b16 %v6185
  %v6298 = vunpack.c.l.b16 %v6186
  %v6299 = vunpack.c.l.b16 %v6187
  %v6300 = vunpack.c.l.b16 %v6188
  %v6301 = vunpack.c.l.b16 %v6189
  %v6302 = vunpack.c.l.b16 %v6190
  %v6303 = vunpack.c.l.b16 %v6191
  %v6304 = vunpack.c.l.b16 %v6192
  %v6305 = vunpack.c.l.b16 %v6193
  %v6306 = vunpack.c.l.b16 %v6194
  %v6307 = vunpack.c.l.b16 %v6195
  %v6308 = vunpack.c.l.b16 %v6196
  %v6309 = vunpack.c.l.b16 %v6197
  %v6310 = vunpack.c.l.b16 %v6198
  %v6311 = vunpack.c.l.b16 %v6199
  %v6312 = vunpack.c.l.b16 %v6200
  %v6313 = vunpack.c.l.b16 %v6201
  %v6314 = vunpack.c.l.b16 %v6202
  %v6315 = vunpack.c.l.b16 %v6203
  %v6316 = vunpack.c.l.b16 %v6204
  %v6317 = vunpack.c.l.b16 %v6205
  %v6318 = vunpack.c.l.b16 %v6206
  %v6319 = vunpack.c.l.b16 %v6207
  %v6320 = vunpack.c.l.b16 %v6208
  %v6321 = vunpack.c.l.b16 %v6209
  %v6322 = vunpack.c.l.b16 %v6210
  %v6323 = vunpack.c.l.b16 %v6211
  %v6324 = vunpack.c.l.b16 %v6212
  %v6325 = vunpack.c.l.b16 %v6213
  %v6326 = vunpack.c.l.b16 %v6214
  %v6327 = vunpack.c.l.b16 %v6215
  %v6328 = vunpack.c.l.b16 %v6216
  %v6329 = vpack.c.b16 %v6274, %v6273
  %v6330 = vpack.c.b16 %v6276, %v6275
  %v6331 = vpack.c.b16 %v6278, %v6277
  %v6332 = vpack.c.b16 %v6280, %v6279
  %v6333 = vpack.c.b16 %v6282, %v6281
  %v6334 = vpack.c.b16 %v6284, %v6283
  %v6335 = vpack.c.b16 %v6286, %v6285
  %v6336 = vpack.c.b16 %v6288, %v6287
  %v6337 = vpack.c.b16 %v6290, %v6289
  %v6338 = vpack.c.b16 %v6292, %v6291
  %v6339 = vpack.c.b16 %v6294, %v6293
  %v6340 = vpack.c.b16 %v6296, %v6295
  %v6341 = vpack.c.b16 %v6298, %v6297
  %v6342 = vpack.c.b16 %v6300, %v6299
  %v6343 = vpack.c.b16 %v6302, %v6301
  %v6344 = vpack.c.b16 %v6304, %v6303
  %v6345 = vpack.c.b16 %v6306, %v6305
  %v6346 = vpack.c.b16 %v6308, %v6307
  %v6347 = vpack.c.b16 %v6310, %v6309
  %v6348 = vpack.c.b16 %v6312, %v6311
  %v6349 = vpack.c.b16 %v6314, %v6313
  %v6350 = vpack.c.b16 %v6316, %v6315
  %v6351 = vpack.c.b16 %v6318, %v6317
  %v6352 = vpack.c.b16 %v6320, %v6319
  %v6353 = vpack.c.b16 %v6322, %v6321
  %v6354 = vpack.c.b16 %v6324, %v6323
  %v6355 = vpack.c.b16 %v6326, %v6325
  %v6356 = vpack.c.b16 %v6328, %v6327
  %v6386 = vsel %vm2381, %v4275, 0
  %6388 = vmatprep.subr.bf16.mxu0 0
  %6389 = vmatpush1.bf16.msra.mxu0 %v6336
  %6390 = vmatprep.subr.bf16.mxu0 0
  %6391 = vmatpush1.bf16.msra.mxu0 %v6335
  %6392 = vmatprep.subr.bf16.mxu0 0
  %6393 = vmatpush1.bf16.msra.mxu0 %v6334
  %6394 = vmatprep.subr.bf16.mxu0 0
  %6395 = vmatpush1.bf16.msra.mxu0 %v6333
  %6396 = vmatprep.subr.bf16.mxu0 0
  %6397 = vmatpush1.bf16.msra.mxu0 %v6332
  %6398 = vmatprep.subr.bf16.mxu0 0
  %6399 = vmatpush1.bf16.msra.mxu0 %v6331
  %6400 = vmatprep.subr.bf16.mxu0 0
  %6401 = vmatpush1.bf16.msra.mxu0 %v6330
  %6402 = vmatprep.subr.bf16.mxu0 0
  %6403 = vmatpush1.bf16.msra.mxu0 %v6329
  %6404 = vmatprep.subr.bf16.mxu0 0
  %6405 = vmatpush2.bf16.msra.mxu0 %v6344
  %6406 = vmatprep.subr.bf16.mxu0 0
  %6407 = vmatpush2.bf16.msra.mxu0 %v6343
  %6408 = vmatprep.subr.bf16.mxu0 0
  %6409 = vmatpush2.bf16.msra.mxu0 %v6342
  %6410 = vmatprep.subr.bf16.mxu0 0
  %6411 = vmatpush2.bf16.msra.mxu0 %v6341
  %6412 = vmatprep.subr.bf16.mxu0 0
  %6413 = vmatpush2.bf16.msra.mxu0 %v6340
  %6414 = vmatprep.subr.bf16.mxu0 0
  %6415 = vmatpush2.bf16.msra.mxu0 %v6339
  %6416 = vmatprep.subr.bf16.mxu0 0
  %6417 = vmatpush2.bf16.msra.mxu0 %v6338
  %6418 = vmatprep.subr.bf16.mxu0 0
  %6419 = vmatpush2.bf16.msra.mxu0 %v6337
  %6420 = vmatprep.mubr.bf16.mxu0 %v4273
  %6421 = vmatmul.mubr.bf16.gmra.mxu0 %v4272
  %v6422 = vpop.f32.mrf.mxu0
  %v6423 = vadd.f32 0.0, %v6422
  %v6424 = vpop.f32.mrf.mxu0
  %v6425 = vpop.f32.mrf.mxu0
  %v6426 = vpop.f32.mrf.mxu0
  %6427 = vdwg.mxu0
  %6428 = vmatprep.subr.bf16.mxu0 0
  %6429 = vmatpush1.bf16.msra.mxu0 %v6352
  %6430 = vmatprep.subr.bf16.mxu0 0
  %6431 = vmatpush1.bf16.msra.mxu0 %v6351
  %6432 = vmatprep.subr.bf16.mxu0 0
  %6433 = vmatpush1.bf16.msra.mxu0 %v6350
  %6434 = vmatprep.subr.bf16.mxu0 0
  %6435 = vmatpush1.bf16.msra.mxu0 %v6349
  %6436 = vmatprep.subr.bf16.mxu0 0
  %6437 = vmatpush1.bf16.msra.mxu0 %v6348
  %6438 = vmatprep.subr.bf16.mxu0 0
  %6439 = vmatpush1.bf16.msra.mxu0 %v6347
  %6440 = vmatprep.subr.bf16.mxu0 0
  %6441 = vmatpush1.bf16.msra.mxu0 %v6346
  %6442 = vmatprep.subr.bf16.mxu0 0
  %6443 = vmatpush1.bf16.msra.mxu0 %v6345
  %6444 = vmatprep.subr.bf16.mxu0 0
  %6445 = vmatpush2.bf16.msra.mxu0 0
  %6446 = vmatprep.subr.bf16.mxu0 0
  %6447 = vmatpush2.bf16.msra.mxu0 0
  %6448 = vmatprep.subr.bf16.mxu0 0
  %6449 = vmatpush2.bf16.msra.mxu0 0
  %6450 = vmatprep.subr.bf16.mxu0 0
  %6451 = vmatpush2.bf16.msra.mxu0 0
  %6452 = vmatprep.subr.bf16.mxu0 0
  %6453 = vmatpush2.bf16.msra.mxu0 %v6356
  %6454 = vmatprep.subr.bf16.mxu0 0
  %6455 = vmatpush2.bf16.msra.mxu0 %v6355
  %6456 = vmatprep.subr.bf16.mxu0 0
  %6457 = vmatpush2.bf16.msra.mxu0 %v6354
  %6458 = vmatprep.subr.bf16.mxu0 0
  %6459 = vmatpush2.bf16.msra.mxu0 %v6353
  %6460 = vmatprep.mubr.bf16.mxu0 %v6386
  %6461 = vmatmul.mubr.bf16.gmra.mxu0 %v4274
  %v6462 = vpop.f32.mrf.mxu0
  %v6463 = vadd.f32 %v6423, %v6462
  %v6464 = vpop.f32.mrf.mxu0
  %v6465 = vpop.f32.mrf.mxu0
  %v6466 = vpop.f32.mrf.mxu0
  %6467 = vdwg.mxu0
  %v6468 = vadd.f32 %v6159, %v6463
  %v6469 = vld [vmem:[%s6] sm:$0x1]
  %v6471 = vlaneseq
  %v6472 = vshrl.u32 %v6471, 7
  %v6473 = vsub.s32 0, %v6472
  %v6474 = vrot.slane %v6469, %v6473
  %v6476 = vadd.f32 %v6468, %v6474
  %6477 = vst [vmem:[%s7] sm:$0xff] %v6476
  // Predicated region
  $region30: #{conv3_forward.1} parent=0 // pred_check
    _
  $region31: #{conv3_forward.1} parent=0 // pred_check_branch
    %6479 = sbr.rel (0) target = $region33
  $region32: #{conv3_forward.1} parent=0 // pred_region
    _
  $region33: #{conv3_forward.1} parent=0 // pred_fallthru
    _
  // Predicated region
  $region34: #{conv3_forward.1} parent=0 // pred_check
    _
  $region35: #{conv3_forward.1} parent=0 // pred_check_branch
    %6481 = sbr.rel (0) target = $region37
  $region36: #{conv3_forward.1} parent=0 // pred_region
    _
  $region37: #{conv3_forward.1} parent=0 // pred_fallthru
    _

</llo_original>
